<compile_context>
chip_gen: v6e
topology: v6e:2x2x1
jax: 0.10.0
libtpu: 0.0.40
codegen_flags: <defaults>
</compile_context>

<pallas_src>
import functools
import math

import jax
import jax.numpy as jnp
from jax.experimental import pallas as pl
from jax.experimental.pallas import tpu as pltpu

_LN_EPS = 1e-12


# --------------------------------------------------------------------------- #
# Generation-aware VMEM limit & tile defaults
# --------------------------------------------------------------------------- #
def _tpu_generation_config():
    """v5e/v6e (128 MiB VMEM): big tiles, 96 MiB limit. v7x (64 MiB/TC) or unknown: conservative."""
    cap = None
    try:
        info = pltpu.get_tpu_info()
        for name in ("vmem_capacity_bytes", "vmem_bytes", "vmem_size_bytes"):
            v = getattr(info, name, None)
            if v:
                cap = int(v)
                break
    except Exception:
        cap = None
    try:
        kind = jax.devices()[0].device_kind.lower()
    except Exception:
        kind = ""
    big_vmem = (cap is not None) and (cap >= 100 * 1024 * 1024) and ("v7" not in kind)
    if big_vmem:
        # v5e / v6e: grow memory-bound tiles toward the HBM roofline.
        return 96 * 1024 * 1024, 512, 1024, 256
    # v7x (64 MiB per TC) or undetectable generation: stay conservative.
    return 38 * 1024 * 1024, 256, 512, 128


_VMEM_LIMIT, _LIN_BM, _LIN_BN, _FUSED_BM = _tpu_generation_config()


def _pick_tile(dim, preferred, align=8):
    """Largest tile <= preferred that divides dim, preferring multiples of `align`.

    Never silently degenerates to a huge untiled block unless no aligned divisor exists.
    """
    preferred = min(preferred, dim)
    if dim % preferred == 0:
        return preferred
    for t in range(preferred, align - 1, -1):
        if dim % t == 0 and t % align == 0:
            return t
    return dim


# --------------------------------------------------------------------------- #
# Linear  (N outer / M inner grid: weight tiles stream from HBM exactly once)
# --------------------------------------------------------------------------- #
def _linear_kernel(x_ref, w_ref, b_ref, o_ref):
    x = x_ref[...].astype(jnp.bfloat16)
    o_ref[...] = (
        jnp.dot(x, w_ref[...], preferred_element_type=jnp.float32) + b_ref[...]
    ).astype(o_ref.dtype)


def linear(x, w, b, *, bm=None, bn=None, out_dtype=jnp.float32):
    M, K = x.shape
    N = w.shape[1]
    bm = _pick_tile(M, bm or _LIN_BM, align=8)
    bn = _pick_tile(N, bn or _LIN_BN, align=128)
    # N is the OUTER grid axis, M the inner (fastest) one: the weight block index is
    # constant along the inner axis, so each (K, bn) weight tile is DMA'd once while only
    # the small (bm, K) activation row tiles repeat.
    return pl.pallas_call(
        _linear_kernel,
        out_shape=jax.ShapeDtypeStruct((M, N), out_dtype),
        grid=(N // bn, M // bm),
        in_specs=[
            pl.BlockSpec((bm, K), lambda n, m: (m, 0)),
            pl.BlockSpec((K, bn), lambda n, m: (0, n)),
            pl.BlockSpec((1, bn), lambda n, m: (0, n)),
        ],
        out_specs=pl.BlockSpec((bm, bn), lambda n, m: (m, n)),
        compiler_params=pltpu.CompilerParams(
            dimension_semantics=("parallel", "parallel"),
            vmem_limit_bytes=_VMEM_LIMIT,
        ),
    )(x, w, b)


# --------------------------------------------------------------------------- #
# Matmul + residual-add + LayerNorm fused epilogue (used for Wo projection)
# --------------------------------------------------------------------------- #
def _matmul_add_ln_kernel(x_ref, w_ref, b_ref, r_ref, g_ref, beta_ref, o_ref):
    x = x_ref[...].astype(jnp.bfloat16)
    y = jnp.dot(x, w_ref[...], preferred_element_type=jnp.float32) + b_ref[...]
    z = y + r_ref[...]
    mean = jnp.mean(z, axis=-1, keepdims=True)
    var = jnp.mean((z - mean) ** 2, axis=-1, keepdims=True)
    zn = (z - mean) * jax.lax.rsqrt(var + _LN_EPS)
    o_ref[...] = zn * g_ref[...] + beta_ref[...]


def matmul_add_ln(x, w, b, resid, gamma, beta, *, bm=None):
    M, K = x.shape
    N = w.shape[1]
    bm = _pick_tile(M, bm or _FUSED_BM, align=8)
    # NOTE: constant-index weight blocks are revisited (not re-fetched); on v7x they
    # could additionally use pipeline_mode=pl.Buffered(1) to halve resident VMEM.
    return pl.pallas_call(
        _matmul_add_ln_kernel,
        out_shape=jax.ShapeDtypeStruct((M, N), jnp.float32),
        grid=(M // bm,),
        in_specs=[
            pl.BlockSpec((bm, K), lambda i: (i, 0)),
            pl.BlockSpec((K, N), lambda i: (0, 0)),
            pl.BlockSpec((1, N), lambda i: (0, 0)),
            pl.BlockSpec((bm, N), lambda i: (i, 0)),
            pl.BlockSpec((1, N), lambda i: (0, 0)),
            pl.BlockSpec((1, N), lambda i: (0, 0)),
        ],
        out_specs=pl.BlockSpec((bm, N), lambda i: (i, 0)),
        compiler_params=pltpu.CompilerParams(
            dimension_semantics=("parallel",),
            vmem_limit_bytes=_VMEM_LIMIT,
        ),
    )(x, w, b, resid, gamma, beta)


# --------------------------------------------------------------------------- #
# FFN (Linear -> ReLU -> Linear) + residual-add + LayerNorm, fully fused
# --------------------------------------------------------------------------- #
def _ffn_add_ln_kernel(x_ref, w1_ref, b1_ref, w2_ref, b2_ref, r_ref, g_ref,
                       beta_ref, o_ref):
    x = x_ref[...].astype(jnp.bfloat16)
    h = jnp.dot(x, w1_ref[...], preferred_element_type=jnp.float32) + b1_ref[...]
    h = jnp.maximum(h, 0.0).astype(jnp.bfloat16)          # ReLU, back to bf16 for MXU
    y = jnp.dot(h, w2_ref[...], preferred_element_type=jnp.float32) + b2_ref[...]
    z = y + r_ref[...]
    mean = jnp.mean(z, axis=-1, keepdims=True)
    var = jnp.mean((z - mean) ** 2, axis=-1, keepdims=True)
    zn = (z - mean) * jax.lax.rsqrt(var + _LN_EPS)
    o_ref[...] = zn * g_ref[...] + beta_ref[...]


def ffn_add_ln(x, w1, b1, w2, b2, resid, gamma, beta, *, bm=None):
    M, K = x.shape
    Hd = w1.shape[1]
    N = w2.shape[1]
    bm = _pick_tile(M, bm or _FUSED_BM, align=8)
    return pl.pallas_call(
        _ffn_add_ln_kernel,
        out_shape=jax.ShapeDtypeStruct((M, N), jnp.float32),
        grid=(M // bm,),
        in_specs=[
            pl.BlockSpec((bm, K), lambda i: (i, 0)),
            pl.BlockSpec((K, Hd), lambda i: (0, 0)),
            pl.BlockSpec((1, Hd), lambda i: (0, 0)),
            pl.BlockSpec((Hd, N), lambda i: (0, 0)),
            pl.BlockSpec((1, N), lambda i: (0, 0)),
            pl.BlockSpec((bm, N), lambda i: (i, 0)),
            pl.BlockSpec((1, N), lambda i: (0, 0)),
            pl.BlockSpec((1, N), lambda i: (0, 0)),
        ],
        out_specs=pl.BlockSpec((bm, N), lambda i: (i, 0)),
        compiler_params=pltpu.CompilerParams(
            dimension_semantics=("parallel",),
            vmem_limit_bytes=_VMEM_LIMIT,
        ),
    )(x, w1, b1, w2, b2, resid, gamma, beta)


# --------------------------------------------------------------------------- #
# Attention kernels: one grid step per batch element, QKV projection fused in,
# per-head Q/K/V sliced from VMEM scratch refs, ONE lane-dense (T, D) output store.
# --------------------------------------------------------------------------- #
def _self_attn_kernel(x_ref, wqkv_ref, bqkv_ref, mask_ref, o_ref,
                      qkv_sc, acc_sc, *, n_head):
    D = o_ref.shape[-1]
    dh = D // n_head
    scale = 1.0 / math.sqrt(dh)

    # Fused QKV projection: x (T, D) @ wqkv (D, 3D), weights resident in VMEM.
    x = x_ref[0].astype(jnp.bfloat16)
    qkv = jnp.dot(x, wqkv_ref[...], preferred_element_type=jnp.float32) + bqkv_ref[...]
    qkv_sc[...] = qkv.astype(jnp.bfloat16)        # stash -> per-head slices are ref-side

    mask = mask_ref[0, 0]                          # (T, T) 0/1

    # TODO(synk): for long sequences tile this flash-style over (T_q, T_k) with online
    # softmax instead of materializing full (T, T) scores per head; with dh < 128 the
    # MXU is under-utilized (pad head_dim / head-major layout for production shapes).
    for h in range(n_head):
        q = qkv_sc[:, h * dh:(h + 1) * dh]
        k = qkv_sc[:, D + h * dh:D + (h + 1) * dh]
        v = qkv_sc[:, 2 * D + h * dh:2 * D + (h + 1) * dh]
        s = jax.lax.dot_general(
            q, k, (((1,), (1,)), ((), ())), preferred_element_type=jnp.float32
        ) * scale
        s = jnp.where(mask == 0, -10000.0, s)      # masked_fill(mask==0, -1e4)
        s = s - jnp.max(s, axis=-1, keepdims=True)
        p = jnp.exp(s)
        p = p * pl.reciprocal(jnp.sum(p, axis=-1, keepdims=True), approx=True)
        acc_sc[:, h * dh:(h + 1) * dh] = jnp.dot(
            p.astype(jnp.bfloat16), v, preferred_element_type=jnp.float32
        )
    # Single lane-dense store of the whole (T, D) block (no per-head masked HBM stores).
    o_ref[0] = acc_sc[...].astype(o_ref.dtype)


def self_attention(x, wqkv, bqkv, mask, n_head):
    B, T, D = x.shape
    D3 = wqkv.shape[1]
    mT, mS = mask.shape[2], mask.shape[3]
    kernel = functools.partial(_self_attn_kernel, n_head=n_head)
    return pl.pallas_call(
        kernel,
        out_shape=jax.ShapeDtypeStruct((B, T, D), jnp.bfloat16),
        grid=(B,),
        in_specs=[
            pl.BlockSpec((1, T, D), lambda b: (b, 0, 0)),
            pl.BlockSpec((D, D3), lambda b: (0, 0)),
            pl.BlockSpec((1, D3), lambda b: (0, 0)),
            pl.BlockSpec((1, 1, mT, mS), lambda b: (b, 0, 0, 0)),
        ],
        out_specs=pl.BlockSpec((1, T, D), lambda b: (b, 0, 0)),
        scratch_shapes=[
            pltpu.VMEM((T, D3), jnp.bfloat16),     # fused QKV activations
            pltpu.VMEM((T, D), jnp.float32),       # per-head output accumulator
        ],
        compiler_params=pltpu.CompilerParams(
            dimension_semantics=("parallel",),
            vmem_limit_bytes=_VMEM_LIMIT,
        ),
    )(x, wqkv, bqkv, mask)


def _cross_attn_kernel(x_ref, enc_ref, wq_ref, bq_ref, wkv_ref, bkv_ref, mask_ref,
                       o_ref, q_sc, kv_sc, acc_sc, *, n_head):
    D = o_ref.shape[-1]
    dh = D // n_head
    scale = 1.0 / math.sqrt(dh)

    # Fused Q projection (decoder side) and fused KV projection (encoder side).
    xb = x_ref[0].astype(jnp.bfloat16)             # (T, D)
    eb = enc_ref[0].astype(jnp.bfloat16)           # (S, D)
    q_sc[...] = (jnp.dot(xb, wq_ref[...], preferred_element_type=jnp.float32)
                 + bq_ref[...]).astype(jnp.bfloat16)
    kv_sc[...] = (jnp.dot(eb, wkv_ref[...], preferred_element_type=jnp.float32)
                  + bkv_ref[...]).astype(jnp.bfloat16)

    mask = mask_ref[0, 0]                          # (1, S) 0/1, broadcasts over T rows

    for h in range(n_head):
        q = q_sc[:, h * dh:(h + 1) * dh]
        k = kv_sc[:, h * dh:(h + 1) * dh]
        v = kv_sc[:, D + h * dh:D + (h + 1) * dh]
        s = jax.lax.dot_general(
            q, k, (((1,), (1,)), ((), ())), preferred_element_type=jnp.float32
        ) * scale
        s = jnp.where(mask == 0, -10000.0, s)
        s = s - jnp.max(s, axis=-1, keepdims=True)
        p = jnp.exp(s)
        p = p * pl.reciprocal(jnp.sum(p, axis=-1, keepdims=True), approx=True)
        acc_sc[:, h * dh:(h + 1) * dh] = jnp.dot(
            p.astype(jnp.bfloat16), v, preferred_element_type=jnp.float32
        )
    o_ref[0] = acc_sc[...].astype(o_ref.dtype)


def cross_attention(x, enc, wq, bq, wkv, bkv, mask, n_head):
    B, T, D = x.shape
    S = enc.shape[1]
    D2 = wkv.shape[1]
    mT, mS = mask.shape[2], mask.shape[3]
    kernel = functools.partial(_cross_attn_kernel, n_head=n_head)
    return pl.pallas_call(
        kernel,
        out_shape=jax.ShapeDtypeStruct((B, T, D), jnp.bfloat16),
        grid=(B,),
        in_specs=[
            pl.BlockSpec((1, T, D), lambda b: (b, 0, 0)),
            pl.BlockSpec((1, S, D), lambda b: (b, 0, 0)),
            pl.BlockSpec((D, D), lambda b: (0, 0)),
            pl.BlockSpec((1, D), lambda b: (0, 0)),
            pl.BlockSpec((D, D2), lambda b: (0, 0)),
            pl.BlockSpec((1, D2), lambda b: (0, 0)),
            pl.BlockSpec((1, 1, mT, mS), lambda b: (b, 0, 0, 0)),
        ],
        out_specs=pl.BlockSpec((1, T, D), lambda b: (b, 0, 0)),
        scratch_shapes=[
            pltpu.VMEM((T, D), jnp.bfloat16),      # Q activations
            pltpu.VMEM((S, D2), jnp.bfloat16),     # fused KV activations
            pltpu.VMEM((T, D), jnp.float32),       # per-head output accumulator
        ],
        compiler_params=pltpu.CompilerParams(
            dimension_semantics=("parallel",),
            vmem_limit_bytes=_VMEM_LIMIT,
        ),
    )(x, enc, wq, bq, wkv, bkv, mask)


# --------------------------------------------------------------------------- #
# Glue (plain JAX): parameter init, embedding lookup
# --------------------------------------------------------------------------- #
def sinusoidal_pe(max_len, d_model):
    pos = jnp.arange(max_len, dtype=jnp.float32)[:, None]
    two_i = jnp.arange(0, d_model, 2, dtype=jnp.float32)
    angle = pos / jnp.power(10000.0, two_i / d_model)
    pe = jnp.zeros((max_len, d_model), jnp.float32)
    pe = pe.at[:, 0::2].set(jnp.sin(angle))
    pe = pe.at[:, 1::2].set(jnp.cos(angle))
    return pe


def _init_linear(key, din, dout, scale=0.02):
    k1, k2 = jax.random.split(key)
    w = jax.random.normal(k1, (din, dout), jnp.float32) * scale
    b = jax.random.normal(k2, (1, dout), jnp.float32) * scale
    return w, b


def _init_mha_self(key, d_model):
    ks = jax.random.split(key, 4)
    wq, bq = _init_linear(ks[0], d_model, d_model)
    wk, bk = _init_linear(ks[1], d_model, d_model)
    wv, bv = _init_linear(ks[2], d_model, d_model)
    wo, bo = _init_linear(ks[3], d_model, d_model)
    return {
        "wqkv": jnp.concatenate([wq, wk, wv], axis=1).astype(jnp.bfloat16),
        "bqkv": jnp.concatenate([bq, bk, bv], axis=1),
        "wo": wo.astype(jnp.bfloat16),
        "bo": bo,
    }


def _init_mha_cross(key, d_model):
    ks = jax.random.split(key, 4)
    wq, bq = _init_linear(ks[0], d_model, d_model)
    wk, bk = _init_linear(ks[1], d_model, d_model)
    wv, bv = _init_linear(ks[2], d_model, d_model)
    wo, bo = _init_linear(ks[3], d_model, d_model)
    return {
        "wq": wq.astype(jnp.bfloat16),
        "bq": bq,
        "wkv": jnp.concatenate([wk, wv], axis=1).astype(jnp.bfloat16),
        "bkv": jnp.concatenate([bk, bv], axis=1),
        "wo": wo.astype(jnp.bfloat16),
        "bo": bo,
    }


def init_decoder_params(key, dec_voc_size, max_len, d_model, ffn_hidden, n_layers):
    keys = jax.random.split(key, n_layers + 2)
    emb = jax.random.normal(keys[0], (dec_voc_size, d_model), jnp.float32) * 0.02
    emb = emb.at[1].set(0.0)  # padding_idx=1 row is zero at init
    params = {"emb": emb, "pe": sinusoidal_pe(max_len, d_model), "layers": []}
    for li in range(n_layers):
        lk = jax.random.split(keys[1 + li], 4)
        fk = jax.random.split(lk[2], 2)
        w1, b1 = _init_linear(fk[0], d_model, ffn_hidden)
        w2, b2 = _init_linear(fk[1], ffn_hidden, d_model)
        lp = {
            "self_attn": _init_mha_self(lk[0], d_model),
            "cross_attn": _init_mha_cross(lk[1], d_model),
            "ffn_w1": w1.astype(jnp.bfloat16), "ffn_b1": b1,
            "ffn_w2": w2.astype(jnp.bfloat16), "ffn_b2": b2,
            "ln1_g": jnp.ones((1, d_model), jnp.float32),
            "ln1_b": jnp.zeros((1, d_model), jnp.float32),
            "ln2_g": jnp.ones((1, d_model), jnp.float32),
            "ln2_b": jnp.zeros((1, d_model), jnp.float32),
            "ln3_g": jnp.ones((1, d_model), jnp.float32),
            "ln3_b": jnp.zeros((1, d_model), jnp.float32),
        }
        params["layers"].append(lp)
    ow, ob = _init_linear(keys[-1], d_model, dec_voc_size)
    params["out_w"] = ow.astype(jnp.bfloat16)
    params["out_b"] = ob
    return params


# --------------------------------------------------------------------------- #
# Decoder forward
# --------------------------------------------------------------------------- #
def decoder_forward(params, trg, enc_src, trg_mask, src_mask, n_head):
    B, T = trg.shape
    D = params["emb"].shape[1]
    # TransformerEmbedding: token lookup + positional encoding (dropout = identity in eval)
    # TODO(synk): embedding gather stays in plain JAX (data-dependent row gather).
    x = params["emb"][trg] + params["pe"][:T][None, :, :]
    x2 = x.reshape(B * T, D).astype(jnp.float32)       # residual/LN path stays fp32
    enc = enc_src.astype(jnp.float32)

    for lp in params["layers"]:
        # -- self-attention block: x = LN(x + Wo(attn(QKV(x)))) ---------------
        sa = lp["self_attn"]
        attn = self_attention(x2.reshape(B, T, D), sa["wqkv"], sa["bqkv"],
                              trg_mask, n_head)                       # bf16 (B,T,D)
        x2 = matmul_add_ln(attn.reshape(B * T, D), sa["wo"], sa["bo"],
                           x2, lp["ln1_g"], lp["ln1_b"])

        # -- cross-attention block: x = LN(x + Wo(attn(Q(x), KV(enc)))) -------
        ca = lp["cross_attn"]
        attn = cross_attention(x2.reshape(B, T, D), enc, ca["wq"], ca["bq"],
                               ca["wkv"], ca["bkv"], src_mask, n_head)  # bf16 (B,T,D)
        x2 = matmul_add_ln(attn.reshape(B * T, D), ca["wo"], ca["bo"],
                           x2, lp["ln2_g"], lp["ln2_b"])

        # -- FFN block: x = LN(x + W2(relu(W1 x))) -----------------------------
        x2 = ffn_add_ln(x2, lp["ffn_w1"], lp["ffn_b1"], lp["ffn_w2"], lp["ffn_b2"],
                        x2, lp["ln3_g"], lp["ln3_b"])

    # Final vocab projection; fp32 logits for parity with the reference
    # (pass out_dtype=jnp.bfloat16 to halve the largest HBM store if acceptable).
    out = linear(x2, params["out_w"], params["out_b"], out_dtype=jnp.float32)
    V = params["out_w"].shape[1]
    return out.reshape(B, T, V)


# --------------------------------------------------------------------------- #
# Example run
# --------------------------------------------------------------------------- #
if __name__ == "__main__":
    B, T, S = 2, 8, 8
    D_MODEL, N_HEAD, FFN_HIDDEN, N_LAYERS = 32, 4, 64, 2
    DEC_VOC_SIZE, MAX_LEN = 50, 16

    key = jax.random.PRNGKey(0)
    kp, kt, ke = jax.random.split(key, 3)

    params = init_decoder_params(kp, DEC_VOC_SIZE, MAX_LEN, D_MODEL, FFN_HIDDEN, N_LAYERS)

    trg = jax.random.randint(kt, (B, T), 0, DEC_VOC_SIZE, dtype=jnp.int32)
    enc_src = jax.random.normal(ke, (B, S, D_MODEL), jnp.float32)
    # causal target mask (B, 1, T, T) and all-ones source mask (B, 1, 1, S), 0/1 float
    trg_mask = jnp.broadcast_to(
        jnp.tril(jnp.ones((T, T), jnp.float32))[None, None], (B, 1, T, T)
    )
    src_mask = jnp.ones((B, 1, 1, S), jnp.float32)

    fwd = jax.jit(functools.partial(decoder_forward, n_head=N_HEAD))
    out = fwd(params, trg, enc_src, trg_mask, src_mask)
    out = jax.block_until_ready(out)
    assert out.shape == (B, T, DEC_VOC_SIZE)
    assert jnp.all(jnp.isfinite(out))
    print("KERNEL_OK")
</pallas_src>

<mosaic_0001>
module attributes {stable_mosaic.version = 11 : i64} {
  func.func @_matmul_add_ln_kernel(%arg0: i32, %arg1: memref<16x32xbf16, #tpu.memory_space<vmem>>, %arg2: memref<32x32xbf16, #tpu.memory_space<vmem>>, %arg3: memref<1x32xf32, #tpu.memory_space<vmem>>, %arg4: memref<16x32xf32, #tpu.memory_space<vmem>>, %arg5: memref<1x32xf32, #tpu.memory_space<vmem>>, %arg6: memref<1x32xf32, #tpu.memory_space<vmem>>, %arg7: memref<16x32xf32, #tpu.memory_space<vmem>>) attributes {dimension_semantics = [#tpu.dimension_semantics<parallel>], iteration_bounds = array<i64: 1>, scalar_prefetch = 0 : i64, scratch_operands = 0 : i64, tpu.core_type = #tpu.core_type<tc>, window_params = [{transform_indices = @transform_0, window_bounds = array<i64: 16, 32>}, {pipeline_mode = #tpu.pipeline_mode<synchronous>, transform_indices = @transform_1, window_bounds = array<i64: 32, 32>}, {pipeline_mode = #tpu.pipeline_mode<synchronous>, transform_indices = @transform_2, window_bounds = array<i64: 1, 32>}, {transform_indices = @transform_3, window_bounds = array<i64: 16, 32>}, {pipeline_mode = #tpu.pipeline_mode<synchronous>, transform_indices = @transform_4, window_bounds = array<i64: 1, 32>}, {pipeline_mode = #tpu.pipeline_mode<synchronous>, transform_indices = @transform_5, window_bounds = array<i64: 1, 32>}, {transform_indices = @transform_6, window_bounds = array<i64: 16, 32>}]} {
    %c0 = arith.constant 0 : index
    %c0_0 = arith.constant 0 : index
    %0 = vector.load %arg1[%c0, %c0_0] : memref<16x32xbf16, #tpu.memory_space<vmem>>, vector<16x32xbf16>
    %c0_1 = arith.constant 0 : index
    %c0_2 = arith.constant 0 : index
    %1 = vector.load %arg2[%c0_1, %c0_2] : memref<32x32xbf16, #tpu.memory_space<vmem>>, vector<32x32xbf16>
    %cst = arith.constant dense<0.000000e+00> : vector<16x32xf32>
    %2 = tpu.matmul %0, %1, %cst {dimension_numbers = #tpu.dot_dimension_numbers<[1], [0], [0], [1], [0, 0, 1, 1], [], []>} : vector<16x32xbf16>, vector<32x32xbf16>, vector<16x32xf32> -> vector<16x32xf32>
    %c0_3 = arith.constant 0 : index
    %c0_4 = arith.constant 0 : index
    %3 = vector.load %arg3[%c0_3, %c0_4] : memref<1x32xf32, #tpu.memory_space<vmem>>, vector<1x32xf32>
    %4 = vector.broadcast %3 : vector<1x32xf32> to vector<16x32xf32>
    %5 = arith.addf %2, %4 : vector<16x32xf32>
    %c0_5 = arith.constant 0 : index
    %c0_6 = arith.constant 0 : index
    %6 = vector.load %arg4[%c0_5, %c0_6] : memref<16x32xf32, #tpu.memory_space<vmem>>, vector<16x32xf32>
    %7 = arith.addf %5, %6 : vector<16x32xf32>
    %cst_7 = arith.constant dense<0.000000e+00> : vector<16xf32>
    %8 = vector.multi_reduction <add>, %7, %cst_7 [1] : vector<16x32xf32> to vector<16xf32>
    %9 = vector.shape_cast %8 : vector<16xf32> to vector<16x1xf32>
    %cst_8 = arith.constant 3.200000e+01 : f32
    %10 = vector.broadcast %cst_8 : f32 to vector<16x1xf32>
    %11 = arith.divf %9, %10 : vector<16x1xf32>
    %12 = vector.broadcast %11 : vector<16x1xf32> to vector<16x32xf32>
    %13 = arith.subf %7, %12 : vector<16x32xf32>
    %14 = arith.mulf %13, %13 : vector<16x32xf32>
    %cst_9 = arith.constant dense<0.000000e+00> : vector<16xf32>
    %15 = vector.multi_reduction <add>, %14, %cst_9 [1] : vector<16x32xf32> to vector<16xf32>
    %16 = vector.shape_cast %15 : vector<16xf32> to vector<16x1xf32>
    %cst_10 = arith.constant 3.200000e+01 : f32
    %17 = vector.broadcast %cst_10 : f32 to vector<16x1xf32>
    %18 = arith.divf %16, %17 : vector<16x1xf32>
    %19 = vector.broadcast %11 : vector<16x1xf32> to vector<16x32xf32>
    %20 = arith.subf %7, %19 : vector<16x32xf32>
    %cst_11 = arith.constant 9.99999996E-13 : f32
    %21 = vector.broadcast %cst_11 : f32 to vector<16x1xf32>
    %22 = arith.addf %18, %21 : vector<16x1xf32>
    %23 = math.rsqrt %22 : vector<16x1xf32>
    %24 = vector.broadcast %23 : vector<16x1xf32> to vector<16x32xf32>
    %25 = arith.mulf %20, %24 : vector<16x32xf32>
    %c0_12 = arith.constant 0 : index
    %c0_13 = arith.constant 0 : index
    %26 = vector.load %arg5[%c0_12, %c0_13] : memref<1x32xf32, #tpu.memory_space<vmem>>, vector<1x32xf32>
    %27 = vector.broadcast %26 : vector<1x32xf32> to vector<16x32xf32>
    %28 = arith.mulf %25, %27 : vector<16x32xf32>
    %c0_14 = arith.constant 0 : index
    %c0_15 = arith.constant 0 : index
    %29 = vector.load %arg6[%c0_14, %c0_15] : memref<1x32xf32, #tpu.memory_space<vmem>>, vector<1x32xf32>
    %30 = vector.broadcast %29 : vector<1x32xf32> to vector<16x32xf32>
    %31 = arith.addf %28, %30 : vector<16x32xf32>
    %c0_16 = arith.constant 0 : index
    %c0_17 = arith.constant 0 : index
    %32 = vector.load %arg7[%c0_16, %c0_17] : memref<16x32xf32, #tpu.memory_space<vmem>>, vector<16x32xf32>
    tpu.vector_store %arg7[%c0_16, %c0_17], %31 {strides = array<i32>} : memref<16x32xf32, #tpu.memory_space<vmem>>, vector<16x32xf32>,
    return
  }
  func.func @transform_0(%arg0: i32) -> (i32, i32) {
    %c0_i32 = arith.constant 0 : i32
    %c0_i32_0 = arith.constant 0 : i32
    return %arg0, %c0_i32 : i32, i32
  }
  func.func @transform_1(%arg0: i32) -> (i32, i32) {
    %c0_i32 = arith.constant 0 : i32
    %c0_i32_0 = arith.constant 0 : i32
    %c0_i32_1 = arith.constant 0 : i32
    return %c0_i32, %c0_i32_0 : i32, i32
  }
  func.func @transform_2(%arg0: i32) -> (i32, i32) {
    %c0_i32 = arith.constant 0 : i32
    %c0_i32_0 = arith.constant 0 : i32
    %c0_i32_1 = arith.constant 0 : i32
    return %c0_i32, %c0_i32_0 : i32, i32
  }
  func.func @transform_3(%arg0: i32) -> (i32, i32) {
    %c0_i32 = arith.constant 0 : i32
    %c0_i32_0 = arith.constant 0 : i32
    return %arg0, %c0_i32 : i32, i32
  }
  func.func @transform_4(%arg0: i32) -> (i32, i32) {
    %c0_i32 = arith.constant 0 : i32
    %c0_i32_0 = arith.constant 0 : i32
    %c0_i32_1 = arith.constant 0 : i32
    return %c0_i32, %c0_i32_0 : i32, i32
  }
  func.func @transform_5(%arg0: i32) -> (i32, i32) {
    %c0_i32 = arith.constant 0 : i32
    %c0_i32_0 = arith.constant 0 : i32
    %c0_i32_1 = arith.constant 0 : i32
    return %c0_i32, %c0_i32_0 : i32, i32
  }
  func.func @transform_6(%arg0: i32) -> (i32, i32) {
    %c0_i32 = arith.constant 0 : i32
    %c0_i32_0 = arith.constant 0 : i32
    return %arg0, %c0_i32 : i32, i32
  }
}

module attributes {stable_mosaic.version = 11 : i64} {
  func.func @_self_attn_kernel(%arg0: i32, %arg1: memref<1x8x32xf32, #tpu.memory_space<vmem>>, %arg2: memref<32x96xbf16, #tpu.memory_space<vmem>>, %arg3: memref<1x96xf32, #tpu.memory_space<vmem>>, %arg4: memref<1x1x8x8xf32, #tpu.memory_space<vmem>>, %arg5: memref<1x8x32xbf16, #tpu.memory_space<vmem>>, %arg6: memref<8x96xbf16, #tpu.memory_space<vmem>>, %arg7: memref<8x32xf32, #tpu.memory_space<vmem>>) attributes {dimension_semantics = [#tpu.dimension_semantics<parallel>], iteration_bounds = array<i64: 2>, scalar_prefetch = 0 : i64, scratch_operands = 2 : i64, tpu.core_type = #tpu.core_type<tc>, window_params = [{transform_indices = @transform_0, window_bounds = array<i64: 1, 8, 32>}, {pipeline_mode = #tpu.pipeline_mode<synchronous>, transform_indices = @transform_1, window_bounds = array<i64: 32, 96>}, {pipeline_mode = #tpu.pipeline_mode<synchronous>, transform_indices = @transform_2, window_bounds = array<i64: 1, 96>}, {transform_indices = @transform_3, window_bounds = array<i64: 1, 1, 8, 8>}, {transform_indices = @transform_4, window_bounds = array<i64: 1, 8, 32>}]} {
    %c0 = arith.constant 0 : index
    %c0_0 = arith.constant 0 : index
    %c0_1 = arith.constant 0 : index
    %0 = vector.load %arg1[%c0, %c0_0, %c0_1] : memref<1x8x32xf32, #tpu.memory_space<vmem>>, vector<1x8x32xf32>
    %1 = vector.shape_cast %0 : vector<1x8x32xf32> to vector<8x32xf32>
    %2 = arith.truncf %1 : vector<8x32xf32> to vector<8x32xbf16>
    %c0_2 = arith.constant 0 : index
    %c0_3 = arith.constant 0 : index
    %3 = vector.load %arg2[%c0_2, %c0_3] : memref<32x96xbf16, #tpu.memory_space<vmem>>, vector<32x96xbf16>
    %cst = arith.constant dense<0.000000e+00> : vector<8x96xf32>
    %4 = tpu.matmul %2, %3, %cst {dimension_numbers = #tpu.dot_dimension_numbers<[1], [0], [0], [1], [0, 0, 1, 1], [], []>} : vector<8x32xbf16>, vector<32x96xbf16>, vector<8x96xf32> -> vector<8x96xf32>
    %c0_4 = arith.constant 0 : index
    %c0_5 = arith.constant 0 : index
    %5 = vector.load %arg3[%c0_4, %c0_5] : memref<1x96xf32, #tpu.memory_space<vmem>>, vector<1x96xf32>
    %6 = vector.broadcast %5 : vector<1x96xf32> to vector<8x96xf32>
    %7 = arith.addf %4, %6 : vector<8x96xf32>
    %8 = arith.truncf %7 : vector<8x96xf32> to vector<8x96xbf16>
    %c0_6 = arith.constant 0 : index
    %c0_7 = arith.constant 0 : index
    %9 = vector.load %arg6[%c0_6, %c0_7] : memref<8x96xbf16, #tpu.memory_space<vmem>>, vector<8x96xbf16>
    tpu.vector_store %arg6[%c0_6, %c0_7], %8 {strides = array<i32>} : memref<8x96xbf16, #tpu.memory_space<vmem>>, vector<8x96xbf16>,
    %c0_8 = arith.constant 0 : index
    %c0_9 = arith.constant 0 : index
    %c0_10 = arith.constant 0 : index
    %c0_11 = arith.constant 0 : index
    %10 = vector.load %arg4[%c0_8, %c0_9, %c0_10, %c0_11] : memref<1x1x8x8xf32, #tpu.memory_space<vmem>>, vector<1x1x8x8xf32>
    %11 = vector.shape_cast %10 : vector<1x1x8x8xf32> to vector<8x8xf32>
    %c0_12 = arith.constant 0 : index
    %c0_13 = arith.constant 0 : index
    %12 = vector.load %arg6[%c0_12, %c0_13] : memref<8x96xbf16, #tpu.memory_space<vmem>>, vector<8x8xbf16>
    %c0_14 = arith.constant 0 : index
    %c32 = arith.constant 32 : index
    %13 = vector.load %arg6[%c0_14, %c32] : memref<8x96xbf16, #tpu.memory_space<vmem>>, vector<8x8xbf16>
    %c0_15 = arith.constant 0 : index
    %c64 = arith.constant 64 : index
    %14 = vector.load %arg6[%c0_15, %c64] : memref<8x96xbf16, #tpu.memory_space<vmem>>, vector<8x8xbf16>
    %cst_16 = arith.constant dense<0.000000e+00> : vector<8x8xf32>
    %15 = tpu.matmul %12, %13, %cst_16 {dimension_numbers = #tpu.dot_dimension_numbers<[1], [1], [0], [0], [0, 0, 1, 0], [], []>} : vector<8x8xbf16>, vector<8x8xbf16>, vector<8x8xf32> -> vector<8x8xf32>
    %cst_17 = arith.constant 0.353553385 : f32
    %16 = vector.broadcast %cst_17 : f32 to vector<8x8xf32>
    %17 = arith.mulf %15, %16 : vector<8x8xf32>
    %cst_18 = arith.constant 0.000000e+00 : f32
    %18 = vector.broadcast %cst_18 : f32 to vector<8x8xf32>
    %19 = arith.cmpf oeq, %11, %18 : vector<8x8xf32>
    %cst_19 = arith.constant -1.000000e+04 : f32
    %20 = vector.broadcast %cst_19 : f32 to vector<8x8xf32>
    %21 = arith.select %19, %20, %17 : vector<8x8xi1>, vector<8x8xf32>
    %cst_20 = arith.constant dense<0xFF800000> : vector<8xf32>
    %22 = vector.multi_reduction <maximumf>, %21, %cst_20 [1] : vector<8x8xf32> to vector<8xf32>
    %23 = vector.shape_cast %22 : vector<8xf32> to vector<8x1xf32>
    %24 = vector.broadcast %23 : vector<8x1xf32> to vector<8x8xf32>
    %25 = arith.subf %21, %24 : vector<8x8xf32>
    %26 = math.exp %25 : vector<8x8xf32>
    %cst_21 = arith.constant dense<0.000000e+00> : vector<8xf32>
    %27 = vector.multi_reduction <add>, %26, %cst_21 [1] : vector<8x8xf32> to vector<8xf32>
    %28 = vector.shape_cast %27 : vector<8xf32> to vector<8x1xf32>
    %29 = tpu.reciprocal %28 {approx = true} : vector<8x1xf32> -> vector<8x1xf32>
    %30 = vector.broadcast %29 : vector<8x1xf32> to vector<8x8xf32>
    %31 = arith.mulf %26, %30 : vector<8x8xf32>
    %32 = arith.truncf %31 : vector<8x8xf32> to vector<8x8xbf16>
    %cst_22 = arith.constant dense<0.000000e+00> : vector<8x8xf32>
    %33 = tpu.matmul %32, %14, %cst_22 {dimension_numbers = #tpu.dot_dimension_numbers<[1], [0], [0], [1], [0, 0, 1, 1], [], []>} : vector<8x8xbf16>, vector<8x8xbf16>, vector<8x8xf32> -> vector<8x8xf32>
    %c0_23 = arith.constant 0 : index
    %c0_24 = arith.constant 0 : index
    %34 = vector.load %arg7[%c0_23, %c0_24] : memref<8x32xf32, #tpu.memory_space<vmem>>, vector<8x8xf32>
    tpu.vector_store %arg7[%c0_23, %c0_24], %33 {strides = array<i32>} : memref<8x32xf32, #tpu.memory_space<vmem>>, vector<8x8xf32>,
    %c0_25 = arith.constant 0 : index
    %c8 = arith.constant 8 : index
    %35 = vector.load %arg6[%c0_25, %c8] : memref<8x96xbf16, #tpu.memory_space<vmem>>, vector<8x8xbf16>
    %c0_26 = arith.constant 0 : index
    %c40 = arith.constant 40 : index
    %36 = vector.load %arg6[%c0_26, %c40] : memref<8x96xbf16, #tpu.memory_space<vmem>>, vector<8x8xbf16>
    %c0_27 = arith.constant 0 : index
    %c72 = arith.constant 72 : index
    %37 = vector.load %arg6[%c0_27, %c72] : memref<8x96xbf16, #tpu.memory_space<vmem>>, vector<8x8xbf16>
    %cst_28 = arith.constant dense<0.000000e+00> : vector<8x8xf32>
    %38 = tpu.matmul %35, %36, %cst_28 {dimension_numbers = #tpu.dot_dimension_numbers<[1], [1], [0], [0], [0, 0, 1, 0], [], []>} : vector<8x8xbf16>, vector<8x8xbf16>, vector<8x8xf32> -> vector<8x8xf32>
    %cst_29 = arith.constant 0.353553385 : f32
    %39 = vector.broadcast %cst_29 : f32 to vector<8x8xf32>
    %40 = arith.mulf %38, %39 : vector<8x8xf32>
    %cst_30 = arith.constant 0.000000e+00 : f32
    %41 = vector.broadcast %cst_30 : f32 to vector<8x8xf32>
    %42 = arith.cmpf oeq, %11, %41 : vector<8x8xf32>
    %cst_31 = arith.constant -1.000000e+04 : f32
    %43 = vector.broadcast %cst_31 : f32 to vector<8x8xf32>
    %44 = arith.select %42, %43, %40 : vector<8x8xi1>, vector<8x8xf32>
    %cst_32 = arith.constant dense<0xFF800000> : vector<8xf32>
    %45 = vector.multi_reduction <maximumf>, %44, %cst_32 [1] : vector<8x8xf32> to vector<8xf32>
    %46 = vector.shape_cast %45 : vector<8xf32> to vector<8x1xf32>
    %47 = vector.broadcast %46 : vector<8x1xf32> to vector<8x8xf32>
    %48 = arith.subf %44, %47 : vector<8x8xf32>
    %49 = math.exp %48 : vector<8x8xf32>
    %cst_33 = arith.constant dense<0.000000e+00> : vector<8xf32>
    %50 = vector.multi_reduction <add>, %49, %cst_33 [1] : vector<8x8xf32> to vector<8xf32>
    %51 = vector.shape_cast %50 : vector<8xf32> to vector<8x1xf32>
    %52 = tpu.reciprocal %51 {approx = true} : vector<8x1xf32> -> vector<8x1xf32>
    %53 = vector.broadcast %52 : vector<8x1xf32> to vector<8x8xf32>
    %54 = arith.mulf %49, %53 : vector<8x8xf32>
    %55 = arith.truncf %54 : vector<8x8xf32> to vector<8x8xbf16>
    %cst_34 = arith.constant dense<0.000000e+00> : vector<8x8xf32>
    %56 = tpu.matmul %55, %37, %cst_34 {dimension_numbers = #tpu.dot_dimension_numbers<[1], [0], [0], [1], [0, 0, 1, 1], [], []>} : vector<8x8xbf16>, vector<8x8xbf16>, vector<8x8xf32> -> vector<8x8xf32>
    %c0_35 = arith.constant 0 : index
    %c8_36 = arith.constant 8 : index
    %57 = vector.load %arg7[%c0_35, %c8_36] : memref<8x32xf32, #tpu.memory_space<vmem>>, vector<8x8xf32>
    tpu.vector_store %arg7[%c0_35, %c8_36], %56 {strides = array<i32>} : memref<8x32xf32, #tpu.memory_space<vmem>>, vector<8x8xf32>,
    %c0_37 = arith.constant 0 : index
    %c16 = arith.constant 16 : index
    %58 = vector.load %arg6[%c0_37, %c16] : memref<8x96xbf16, #tpu.memory_space<vmem>>, vector<8x8xbf16>
    %c0_38 = arith.constant 0 : index
    %c48 = arith.constant 48 : index
    %59 = vector.load %arg6[%c0_38, %c48] : memref<8x96xbf16, #tpu.memory_space<vmem>>, vector<8x8xbf16>
    %c0_39 = arith.constant 0 : index
    %c80 = arith.constant 80 : index
    %60 = vector.load %arg6[%c0_39, %c80] : memref<8x96xbf16, #tpu.memory_space<vmem>>, vector<8x8xbf16>
    %cst_40 = arith.constant dense<0.000000e+00> : vector<8x8xf32>
    %61 = tpu.matmul %58, %59, %cst_40 {dimension_numbers = #tpu.dot_dimension_numbers<[1], [1], [0], [0], [0, 0, 1, 0], [], []>} : vector<8x8xbf16>, vector<8x8xbf16>, vector<8x8xf32> -> vector<8x8xf32>
    %cst_41 = arith.constant 0.353553385 : f32
    %62 = vector.broadcast %cst_41 : f32 to vector<8x8xf32>
    %63 = arith.mulf %61, %62 : vector<8x8xf32>
    %cst_42 = arith.constant 0.000000e+00 : f32
    %64 = vector.broadcast %cst_42 : f32 to vector<8x8xf32>
    %65 = arith.cmpf oeq, %11, %64 : vector<8x8xf32>
    %cst_43 = arith.constant -1.000000e+04 : f32
    %66 = vector.broadcast %cst_43 : f32 to vector<8x8xf32>
    %67 = arith.select %65, %66, %63 : vector<8x8xi1>, vector<8x8xf32>
    %cst_44 = arith.constant dense<0xFF800000> : vector<8xf32>
    %68 = vector.multi_reduction <maximumf>, %67, %cst_44 [1] : vector<8x8xf32> to vector<8xf32>
    %69 = vector.shape_cast %68 : vector<8xf32> to vector<8x1xf32>
    %70 = vector.broadcast %69 : vector<8x1xf32> to vector<8x8xf32>
    %71 = arith.subf %67, %70 : vector<8x8xf32>
    %72 = math.exp %71 : vector<8x8xf32>
    %cst_45 = arith.constant dense<0.000000e+00> : vector<8xf32>
    %73 = vector.multi_reduction <add>, %72, %cst_45 [1] : vector<8x8xf32> to vector<8xf32>
    %74 = vector.shape_cast %73 : vector<8xf32> to vector<8x1xf32>
    %75 = tpu.reciprocal %74 {approx = true} : vector<8x1xf32> -> vector<8x1xf32>
    %76 = vector.broadcast %75 : vector<8x1xf32> to vector<8x8xf32>
    %77 = arith.mulf %72, %76 : vector<8x8xf32>
    %78 = arith.truncf %77 : vector<8x8xf32> to vector<8x8xbf16>
    %cst_46 = arith.constant dense<0.000000e+00> : vector<8x8xf32>
    %79 = tpu.matmul %78, %60, %cst_46 {dimension_numbers = #tpu.dot_dimension_numbers<[1], [0], [0], [1], [0, 0, 1, 1], [], []>} : vector<8x8xbf16>, vector<8x8xbf16>, vector<8x8xf32> -> vector<8x8xf32>
    %c0_47 = arith.constant 0 : index
    %c16_48 = arith.constant 16 : index
    %80 = vector.load %arg7[%c0_47, %c16_48] : memref<8x32xf32, #tpu.memory_space<vmem>>, vector<8x8xf32>
    tpu.vector_store %arg7[%c0_47, %c16_48], %79 {strides = array<i32>} : memref<8x32xf32, #tpu.memory_space<vmem>>, vector<8x8xf32>,
    %c0_49 = arith.constant 0 : index
    %c24 = arith.constant 24 : index
    %81 = vector.load %arg6[%c0_49, %c24] : memref<8x96xbf16, #tpu.memory_space<vmem>>, vector<8x8xbf16>
    %c0_50 = arith.constant 0 : index
    %c56 = arith.constant 56 : index
    %82 = vector.load %arg6[%c0_50, %c56] : memref<8x96xbf16, #tpu.memory_space<vmem>>, vector<8x8xbf16>
    %c0_51 = arith.constant 0 : index
    %c88 = arith.constant 88 : index
    %83 = vector.load %arg6[%c0_51, %c88] : memref<8x96xbf16, #tpu.memory_space<vmem>>, vector<8x8xbf16>
    %cst_52 = arith.constant dense<0.000000e+00> : vector<8x8xf32>
    %84 = tpu.matmul %81, %82, %cst_52 {dimension_numbers = #tpu.dot_dimension_numbers<[1], [1], [0], [0], [0, 0, 1, 0], [], []>} : vector<8x8xbf16>, vector<8x8xbf16>, vector<8x8xf32> -> vector<8x8xf32>
    %cst_53 = arith.constant 0.353553385 : f32
    %85 = vector.broadcast %cst_53 : f32 to vector<8x8xf32>
    %86 = arith.mulf %84, %85 : vector<8x8xf32>
    %cst_54 = arith.constant 0.000000e+00 : f32
    %87 = vector.broadcast %cst_54 : f32 to vector<8x8xf32>
    %88 = arith.cmpf oeq, %11, %87 : vector<8x8xf32>
    %cst_55 = arith.constant -1.000000e+04 : f32
    %89 = vector.broadcast %cst_55 : f32 to vector<8x8xf32>
    %90 = arith.select %88, %89, %86 : vector<8x8xi1>, vector<8x8xf32>
    %cst_56 = arith.constant dense<0xFF800000> : vector<8xf32>
    %91 = vector.multi_reduction <maximumf>, %90, %cst_56 [1] : vector<8x8xf32> to vector<8xf32>
    %92 = vector.shape_cast %91 : vector<8xf32> to vector<8x1xf32>
    %93 = vector.broadcast %92 : vector<8x1xf32> to vector<8x8xf32>
    %94 = arith.subf %90, %93 : vector<8x8xf32>
    %95 = math.exp %94 : vector<8x8xf32>
    %cst_57 = arith.constant dense<0.000000e+00> : vector<8xf32>
    %96 = vector.multi_reduction <add>, %95, %cst_57 [1] : vector<8x8xf32> to vector<8xf32>
    %97 = vector.shape_cast %96 : vector<8xf32> to vector<8x1xf32>
    %98 = tpu.reciprocal %97 {approx = true} : vector<8x1xf32> -> vector<8x1xf32>
    %99 = vector.broadcast %98 : vector<8x1xf32> to vector<8x8xf32>
    %100 = arith.mulf %95, %99 : vector<8x8xf32>
    %101 = arith.truncf %100 : vector<8x8xf32> to vector<8x8xbf16>
    %cst_58 = arith.constant dense<0.000000e+00> : vector<8x8xf32>
    %102 = tpu.matmul %101, %83, %cst_58 {dimension_numbers = #tpu.dot_dimension_numbers<[1], [0], [0], [1], [0, 0, 1, 1], [], []>} : vector<8x8xbf16>, vector<8x8xbf16>, vector<8x8xf32> -> vector<8x8xf32>
    %c0_59 = arith.constant 0 : index
    %c24_60 = arith.constant 24 : index
    %103 = vector.load %arg7[%c0_59, %c24_60] : memref<8x32xf32, #tpu.memory_space<vmem>>, vector<8x8xf32>
    tpu.vector_store %arg7[%c0_59, %c24_60], %102 {strides = array<i32>} : memref<8x32xf32, #tpu.memory_space<vmem>>, vector<8x8xf32>,
    %c0_61 = arith.constant 0 : index
    %c0_62 = arith.constant 0 : index
    %104 = vector.load %arg7[%c0_61, %c0_62] : memref<8x32xf32, #tpu.memory_space<vmem>>, vector<8x32xf32>
    %105 = arith.truncf %104 : vector<8x32xf32> to vector<8x32xbf16>
    %c0_63 = arith.constant 0 : index
    %c0_64 = arith.constant 0 : index
    %c0_65 = arith.constant 0 : index
    %106 = vector.load %arg5[%c0_63, %c0_64, %c0_65] : memref<1x8x32xbf16, #tpu.memory_space<vmem>>, vector<1x8x32xbf16>
    %107 = vector.shape_cast %106 : vector<1x8x32xbf16> to vector<8x32xbf16>
    %108 = vector.shape_cast %105 : vector<8x32xbf16> to vector<1x8x32xbf16>
    tpu.vector_store %arg5[%c0_63, %c0_64, %c0_65], %108 {strides = array<i32>} : memref<1x8x32xbf16, #tpu.memory_space<vmem>>, vector<1x8x32xbf16>,
    return
  }
  func.func @transform_0(%arg0: i32) -> (i32, i32, i32) {
    %c0_i32 = arith.constant 0 : i32
    %c0_i32_0 = arith.constant 0 : i32
    %c0_i32_1 = arith.constant 0 : i32
    return %arg0, %c0_i32, %c0_i32_0 : i32, i32, i32
  }
  func.func @transform_1(%arg0: i32) -> (i32, i32) {
    %c0_i32 = arith.constant 0 : i32
    %c0_i32_0 = arith.constant 0 : i32
    %c0_i32_1 = arith.constant 0 : i32
    return %c0_i32, %c0_i32_0 : i32, i32
  }
  func.func @transform_2(%arg0: i32) -> (i32, i32) {
    %c0_i32 = arith.constant 0 : i32
    %c0_i32_0 = arith.constant 0 : i32
    %c0_i32_1 = arith.constant 0 : i32
    return %c0_i32, %c0_i32_0 : i32, i32
  }
  func.func @transform_3(%arg0: i32) -> (i32, i32, i32, i32) {
    %c0_i32 = arith.constant 0 : i32
    %c0_i32_0 = arith.constant 0 : i32
    %c0_i32_1 = arith.constant 0 : i32
    %c0_i32_2 = arith.constant 0 : i32
    return %arg0, %c0_i32, %c0_i32_0, %c0_i32_1 : i32, i32, i32, i32
  }
  func.func @transform_4(%arg0: i32) -> (i32, i32, i32) {
    %c0_i32 = arith.constant 0 : i32
    %c0_i32_0 = arith.constant 0 : i32
    %c0_i32_1 = arith.constant 0 : i32
    return %arg0, %c0_i32, %c0_i32_0 : i32, i32, i32
  }
}

module attributes {stable_mosaic.version = 11 : i64} {
  func.func @_cross_attn_kernel(%arg0: i32, %arg1: memref<1x8x32xf32, #tpu.memory_space<vmem>>, %arg2: memref<1x8x32xf32, #tpu.memory_space<vmem>>, %arg3: memref<32x32xbf16, #tpu.memory_space<vmem>>, %arg4: memref<1x32xf32, #tpu.memory_space<vmem>>, %arg5: memref<32x64xbf16, #tpu.memory_space<vmem>>, %arg6: memref<1x64xf32, #tpu.memory_space<vmem>>, %arg7: memref<1x1x1x8xf32, #tpu.memory_space<vmem>>, %arg8: memref<1x8x32xbf16, #tpu.memory_space<vmem>>, %arg9: memref<8x32xbf16, #tpu.memory_space<vmem>>, %arg10: memref<8x64xbf16, #tpu.memory_space<vmem>>, %arg11: memref<8x32xf32, #tpu.memory_space<vmem>>) attributes {dimension_semantics = [#tpu.dimension_semantics<parallel>], iteration_bounds = array<i64: 2>, scalar_prefetch = 0 : i64, scratch_operands = 3 : i64, tpu.core_type = #tpu.core_type<tc>, window_params = [{transform_indices = @transform_0, window_bounds = array<i64: 1, 8, 32>}, {transform_indices = @transform_1, window_bounds = array<i64: 1, 8, 32>}, {pipeline_mode = #tpu.pipeline_mode<synchronous>, transform_indices = @transform_2, window_bounds = array<i64: 32, 32>}, {pipeline_mode = #tpu.pipeline_mode<synchronous>, transform_indices = @transform_3, window_bounds = array<i64: 1, 32>}, {pipeline_mode = #tpu.pipeline_mode<synchronous>, transform_indices = @transform_4, window_bounds = array<i64: 32, 64>}, {pipeline_mode = #tpu.pipeline_mode<synchronous>, transform_indices = @transform_5, window_bounds = array<i64: 1, 64>}, {transform_indices = @transform_6, window_bounds = array<i64: 1, 1, 1, 8>}, {transform_indices = @transform_7, window_bounds = array<i64: 1, 8, 32>}]} {
    %c0 = arith.constant 0 : index
    %c0_0 = arith.constant 0 : index
    %c0_1 = arith.constant 0 : index
    %0 = vector.load %arg1[%c0, %c0_0, %c0_1] : memref<1x8x32xf32, #tpu.memory_space<vmem>>, vector<1x8x32xf32>
    %1 = vector.shape_cast %0 : vector<1x8x32xf32> to vector<8x32xf32>
    %2 = arith.truncf %1 : vector<8x32xf32> to vector<8x32xbf16>
    %c0_2 = arith.constant 0 : index
    %c0_3 = arith.constant 0 : index
    %c0_4 = arith.constant 0 : index
    %3 = vector.load %arg2[%c0_2, %c0_3, %c0_4] : memref<1x8x32xf32, #tpu.memory_space<vmem>>, vector<1x8x32xf32>
    %4 = vector.shape_cast %3 : vector<1x8x32xf32> to vector<8x32xf32>
    %5 = arith.truncf %4 : vector<8x32xf32> to vector<8x32xbf16>
    %c0_5 = arith.constant 0 : index
    %c0_6 = arith.constant 0 : index
    %6 = vector.load %arg3[%c0_5, %c0_6] : memref<32x32xbf16, #tpu.memory_space<vmem>>, vector<32x32xbf16>
    %cst = arith.constant dense<0.000000e+00> : vector<8x32xf32>
    %7 = tpu.matmul %2, %6, %cst {dimension_numbers = #tpu.dot_dimension_numbers<[1], [0], [0], [1], [0, 0, 1, 1], [], []>} : vector<8x32xbf16>, vector<32x32xbf16>, vector<8x32xf32> -> vector<8x32xf32>
    %c0_7 = arith.constant 0 : index
    %c0_8 = arith.constant 0 : index
    %8 = vector.load %arg4[%c0_7, %c0_8] : memref<1x32xf32, #tpu.memory_space<vmem>>, vector<1x32xf32>
    %9 = vector.broadcast %8 : vector<1x32xf32> to vector<8x32xf32>
    %10 = arith.addf %7, %9 : vector<8x32xf32>
    %11 = arith.truncf %10 : vector<8x32xf32> to vector<8x32xbf16>
    %c0_9 = arith.constant 0 : index
    %c0_10 = arith.constant 0 : index
    %12 = vector.load %arg9[%c0_9, %c0_10] : memref<8x32xbf16, #tpu.memory_space<vmem>>, vector<8x32xbf16>
    tpu.vector_store %arg9[%c0_9, %c0_10], %11 {strides = array<i32>} : memref<8x32xbf16, #tpu.memory_space<vmem>>, vector<8x32xbf16>,
    %c0_11 = arith.constant 0 : index
    %c0_12 = arith.constant 0 : index
    %13 = vector.load %arg5[%c0_11, %c0_12] : memref<32x64xbf16, #tpu.memory_space<vmem>>, vector<32x64xbf16>
    %cst_13 = arith.constant dense<0.000000e+00> : vector<8x64xf32>
    %14 = tpu.matmul %5, %13, %cst_13 {dimension_numbers = #tpu.dot_dimension_numbers<[1], [0], [0], [1], [0, 0, 1, 1], [], []>} : vector<8x32xbf16>, vector<32x64xbf16>, vector<8x64xf32> -> vector<8x64xf32>
    %c0_14 = arith.constant 0 : index
    %c0_15 = arith.constant 0 : index
    %15 = vector.load %arg6[%c0_14, %c0_15] : memref<1x64xf32, #tpu.memory_space<vmem>>, vector<1x64xf32>
    %16 = vector.broadcast %15 : vector<1x64xf32> to vector<8x64xf32>
    %17 = arith.addf %14, %16 : vector<8x64xf32>
    %18 = arith.truncf %17 : vector<8x64xf32> to vector<8x64xbf16>
    %c0_16 = arith.constant 0 : index
    %c0_17 = arith.constant 0 : index
    %19 = vector.load %arg10[%c0_16, %c0_17] : memref<8x64xbf16, #tpu.memory_space<vmem>>, vector<8x64xbf16>
    tpu.vector_store %arg10[%c0_16, %c0_17], %18 {strides = array<i32>} : memref<8x64xbf16, #tpu.memory_space<vmem>>, vector<8x64xbf16>,
    %c0_18 = arith.constant 0 : index
    %c0_19 = arith.constant 0 : index
    %c0_20 = arith.constant 0 : index
    %c0_21 = arith.constant 0 : index
    %20 = vector.load %arg7[%c0_18, %c0_19, %c0_20, %c0_21] : memref<1x1x1x8xf32, #tpu.memory_space<vmem>>, vector<1x1x1x8xf32>
    %21 = vector.shape_cast %20 : vector<1x1x1x8xf32> to vector<1x8xf32>
    %c0_22 = arith.constant 0 : index
    %c0_23 = arith.constant 0 : index
    %22 = vector.load %arg9[%c0_22, %c0_23] : memref<8x32xbf16, #tpu.memory_space<vmem>>, vector<8x8xbf16>
    %c0_24 = arith.constant 0 : index
    %c0_25 = arith.constant 0 : index
    %23 = vector.load %arg10[%c0_24, %c0_25] : memref<8x64xbf16, #tpu.memory_space<vmem>>, vector<8x8xbf16>
    %c0_26 = arith.constant 0 : index
    %c32 = arith.constant 32 : index
    %24 = vector.load %arg10[%c0_26, %c32] : memref<8x64xbf16, #tpu.memory_space<vmem>>, vector<8x8xbf16>
    %cst_27 = arith.constant dense<0.000000e+00> : vector<8x8xf32>
    %25 = tpu.matmul %22, %23, %cst_27 {dimension_numbers = #tpu.dot_dimension_numbers<[1], [1], [0], [0], [0, 0, 1, 0], [], []>} : vector<8x8xbf16>, vector<8x8xbf16>, vector<8x8xf32> -> vector<8x8xf32>
    %cst_28 = arith.constant 0.353553385 : f32
    %26 = vector.broadcast %cst_28 : f32 to vector<8x8xf32>
    %27 = arith.mulf %25, %26 : vector<8x8xf32>
    %cst_29 = arith.constant 0.000000e+00 : f32
    %28 = vector.broadcast %cst_29 : f32 to vector<1x8xf32>
    %29 = arith.cmpf oeq, %21, %28 : vector<1x8xf32>
    %cst_30 = arith.constant -1.000000e+04 : f32
    %30 = vector.shape_cast %29 : vector<1x8xi1> to vector<1x8xi1>
    %31 = vector.broadcast %30 : vector<1x8xi1> to vector<8x8xi1>
    %32 = vector.broadcast %cst_30 : f32 to vector<8x8xf32>
    %33 = arith.select %31, %32, %27 : vector<8x8xi1>, vector<8x8xf32>
    %cst_31 = arith.constant dense<0xFF800000> : vector<8xf32>
    %34 = vector.multi_reduction <maximumf>, %33, %cst_31 [1] : vector<8x8xf32> to vector<8xf32>
    %35 = vector.shape_cast %34 : vector<8xf32> to vector<8x1xf32>
    %36 = vector.broadcast %35 : vector<8x1xf32> to vector<8x8xf32>
    %37 = arith.subf %33, %36 : vector<8x8xf32>
    %38 = math.exp %37 : vector<8x8xf32>
    %cst_32 = arith.constant dense<0.000000e+00> : vector<8xf32>
    %39 = vector.multi_reduction <add>, %38, %cst_32 [1] : vector<8x8xf32> to vector<8xf32>
    %40 = vector.shape_cast %39 : vector<8xf32> to vector<8x1xf32>
    %41 = tpu.reciprocal %40 {approx = true} : vector<8x1xf32> -> vector<8x1xf32>
    %42 = vector.broadcast %41 : vector<8x1xf32> to vector<8x8xf32>
    %43 = arith.mulf %38, %42 : vector<8x8xf32>
    %44 = arith.truncf %43 : vector<8x8xf32> to vector<8x8xbf16>
    %cst_33 = arith.constant dense<0.000000e+00> : vector<8x8xf32>
    %45 = tpu.matmul %44, %24, %cst_33 {dimension_numbers = #tpu.dot_dimension_numbers<[1], [0], [0], [1], [0, 0, 1, 1], [], []>} : vector<8x8xbf16>, vector<8x8xbf16>, vector<8x8xf32> -> vector<8x8xf32>
    %c0_34 = arith.constant 0 : index
    %c0_35 = arith.constant 0 : index
    %46 = vector.load %arg11[%c0_34, %c0_35] : memref<8x32xf32, #tpu.memory_space<vmem>>, vector<8x8xf32>
    tpu.vector_store %arg11[%c0_34, %c0_35], %45 {strides = array<i32>} : memref<8x32xf32, #tpu.memory_space<vmem>>, vector<8x8xf32>,
    %c0_36 = arith.constant 0 : index
    %c8 = arith.constant 8 : index
    %47 = vector.load %arg9[%c0_36, %c8] : memref<8x32xbf16, #tpu.memory_space<vmem>>, vector<8x8xbf16>
    %c0_37 = arith.constant 0 : index
    %c8_38 = arith.constant 8 : index
    %48 = vector.load %arg10[%c0_37, %c8_38] : memref<8x64xbf16, #tpu.memory_space<vmem>>, vector<8x8xbf16>
    %c0_39 = arith.constant 0 : index
    %c40 = arith.constant 40 : index
    %49 = vector.load %arg10[%c0_39, %c40] : memref<8x64xbf16, #tpu.memory_space<vmem>>, vector<8x8xbf16>
    %cst_40 = arith.constant dense<0.000000e+00> : vector<8x8xf32>
    %50 = tpu.matmul %47, %48, %cst_40 {dimension_numbers = #tpu.dot_dimension_numbers<[1], [1], [0], [0], [0, 0, 1, 0], [], []>} : vector<8x8xbf16>, vector<8x8xbf16>, vector<8x8xf32> -> vector<8x8xf32>
    %cst_41 = arith.constant 0.353553385 : f32
    %51 = vector.broadcast %cst_41 : f32 to vector<8x8xf32>
    %52 = arith.mulf %50, %51 : vector<8x8xf32>
    %cst_42 = arith.constant 0.000000e+00 : f32
    %53 = vector.broadcast %cst_42 : f32 to vector<1x8xf32>
    %54 = arith.cmpf oeq, %21, %53 : vector<1x8xf32>
    %cst_43 = arith.constant -1.000000e+04 : f32
    %55 = vector.shape_cast %54 : vector<1x8xi1> to vector<1x8xi1>
    %56 = vector.broadcast %55 : vector<1x8xi1> to vector<8x8xi1>
    %57 = vector.broadcast %cst_43 : f32 to vector<8x8xf32>
    %58 = arith.select %56, %57, %52 : vector<8x8xi1>, vector<8x8xf32>
    %cst_44 = arith.constant dense<0xFF800000> : vector<8xf32>
    %59 = vector.multi_reduction <maximumf>, %58, %cst_44 [1] : vector<8x8xf32> to vector<8xf32>
    %60 = vector.shape_cast %59 : vector<8xf32> to vector<8x1xf32>
    %61 = vector.broadcast %60 : vector<8x1xf32> to vector<8x8xf32>
    %62 = arith.subf %58, %61 : vector<8x8xf32>
    %63 = math.exp %62 : vector<8x8xf32>
    %cst_45 = arith.constant dense<0.000000e+00> : vector<8xf32>
    %64 = vector.multi_reduction <add>, %63, %cst_45 [1] : vector<8x8xf32> to vector<8xf32>
    %65 = vector.shape_cast %64 : vector<8xf32> to vector<8x1xf32>
    %66 = tpu.reciprocal %65 {approx = true} : vector<8x1xf32> -> vector<8x1xf32>
    %67 = vector.broadcast %66 : vector<8x1xf32> to vector<8x8xf32>
    %68 = arith.mulf %63, %67 : vector<8x8xf32>
    %69 = arith.truncf %68 : vector<8x8xf32> to vector<8x8xbf16>
    %cst_46 = arith.constant dense<0.000000e+00> : vector<8x8xf32>
    %70 = tpu.matmul %69, %49, %cst_46 {dimension_numbers = #tpu.dot_dimension_numbers<[1], [0], [0], [1], [0, 0, 1, 1], [], []>} : vector<8x8xbf16>, vector<8x8xbf16>, vector<8x8xf32> -> vector<8x8xf32>
    %c0_47 = arith.constant 0 : index
    %c8_48 = arith.constant 8 : index
    %71 = vector.load %arg11[%c0_47, %c8_48] : memref<8x32xf32, #tpu.memory_space<vmem>>, vector<8x8xf32>
    tpu.vector_store %arg11[%c0_47, %c8_48], %70 {strides = array<i32>} : memref<8x32xf32, #tpu.memory_space<vmem>>, vector<8x8xf32>,
    %c0_49 = arith.constant 0 : index
    %c16 = arith.constant 16 : index
    %72 = vector.load %arg9[%c0_49, %c16] : memref<8x32xbf16, #tpu.memory_space<vmem>>, vector<8x8xbf16>
    %c0_50 = arith.constant 0 : index
    %c16_51 = arith.constant 16 : index
    %73 = vector.load %arg10[%c0_50, %c16_51] : memref<8x64xbf16, #tpu.memory_space<vmem>>, vector<8x8xbf16>
    %c0_52 = arith.constant 0 : index
    %c48 = arith.constant 48 : index
    %74 = vector.load %arg10[%c0_52, %c48] : memref<8x64xbf16, #tpu.memory_space<vmem>>, vector<8x8xbf16>
    %cst_53 = arith.constant dense<0.000000e+00> : vector<8x8xf32>
    %75 = tpu.matmul %72, %73, %cst_53 {dimension_numbers = #tpu.dot_dimension_numbers<[1], [1], [0], [0], [0, 0, 1, 0], [], []>} : vector<8x8xbf16>, vector<8x8xbf16>, vector<8x8xf32> -> vector<8x8xf32>
    %cst_54 = arith.constant 0.353553385 : f32
    %76 = vector.broadcast %cst_54 : f32 to vector<8x8xf32>
    %77 = arith.mulf %75, %76 : vector<8x8xf32>
    %cst_55 = arith.constant 0.000000e+00 : f32
    %78 = vector.broadcast %cst_55 : f32 to vector<1x8xf32>
    %79 = arith.cmpf oeq, %21, %78 : vector<1x8xf32>
    %cst_56 = arith.constant -1.000000e+04 : f32
    %80 = vector.shape_cast %79 : vector<1x8xi1> to vector<1x8xi1>
    %81 = vector.broadcast %80 : vector<1x8xi1> to vector<8x8xi1>
    %82 = vector.broadcast %cst_56 : f32 to vector<8x8xf32>
    %83 = arith.select %81, %82, %77 : vector<8x8xi1>, vector<8x8xf32>
    %cst_57 = arith.constant dense<0xFF800000> : vector<8xf32>
    %84 = vector.multi_reduction <maximumf>, %83, %cst_57 [1] : vector<8x8xf32> to vector<8xf32>
    %85 = vector.shape_cast %84 : vector<8xf32> to vector<8x1xf32>
    %86 = vector.broadcast %85 : vector<8x1xf32> to vector<8x8xf32>
    %87 = arith.subf %83, %86 : vector<8x8xf32>
    %88 = math.exp %87 : vector<8x8xf32>
    %cst_58 = arith.constant dense<0.000000e+00> : vector<8xf32>
    %89 = vector.multi_reduction <add>, %88, %cst_58 [1] : vector<8x8xf32> to vector<8xf32>
    %90 = vector.shape_cast %89 : vector<8xf32> to vector<8x1xf32>
    %91 = tpu.reciprocal %90 {approx = true} : vector<8x1xf32> -> vector<8x1xf32>
    %92 = vector.broadcast %91 : vector<8x1xf32> to vector<8x8xf32>
    %93 = arith.mulf %88, %92 : vector<8x8xf32>
    %94 = arith.truncf %93 : vector<8x8xf32> to vector<8x8xbf16>
    %cst_59 = arith.constant dense<0.000000e+00> : vector<8x8xf32>
    %95 = tpu.matmul %94, %74, %cst_59 {dimension_numbers = #tpu.dot_dimension_numbers<[1], [0], [0], [1], [0, 0, 1, 1], [], []>} : vector<8x8xbf16>, vector<8x8xbf16>, vector<8x8xf32> -> vector<8x8xf32>
    %c0_60 = arith.constant 0 : index
    %c16_61 = arith.constant 16 : index
    %96 = vector.load %arg11[%c0_60, %c16_61] : memref<8x32xf32, #tpu.memory_space<vmem>>, vector<8x8xf32>
    tpu.vector_store %arg11[%c0_60, %c16_61], %95 {strides = array<i32>} : memref<8x32xf32, #tpu.memory_space<vmem>>, vector<8x8xf32>,
    %c0_62 = arith.constant 0 : index
    %c24 = arith.constant 24 : index
    %97 = vector.load %arg9[%c0_62, %c24] : memref<8x32xbf16, #tpu.memory_space<vmem>>, vector<8x8xbf16>
    %c0_63 = arith.constant 0 : index
    %c24_64 = arith.constant 24 : index
    %98 = vector.load %arg10[%c0_63, %c24_64] : memref<8x64xbf16, #tpu.memory_space<vmem>>, vector<8x8xbf16>
    %c0_65 = arith.constant 0 : index
    %c56 = arith.constant 56 : index
    %99 = vector.load %arg10[%c0_65, %c56] : memref<8x64xbf16, #tpu.memory_space<vmem>>, vector<8x8xbf16>
    %cst_66 = arith.constant dense<0.000000e+00> : vector<8x8xf32>
    %100 = tpu.matmul %97, %98, %cst_66 {dimension_numbers = #tpu.dot_dimension_numbers<[1], [1], [0], [0], [0, 0, 1, 0], [], []>} : vector<8x8xbf16>, vector<8x8xbf16>, vector<8x8xf32> -> vector<8x8xf32>
    %cst_67 = arith.constant 0.353553385 : f32
    %101 = vector.broadcast %cst_67 : f32 to vector<8x8xf32>
    %102 = arith.mulf %100, %101 : vector<8x8xf32>
    %cst_68 = arith.constant 0.000000e+00 : f32
    %103 = vector.broadcast %cst_68 : f32 to vector<1x8xf32>
    %104 = arith.cmpf oeq, %21, %103 : vector<1x8xf32>
    %cst_69 = arith.constant -1.000000e+04 : f32
    %105 = vector.shape_cast %104 : vector<1x8xi1> to vector<1x8xi1>
    %106 = vector.broadcast %105 : vector<1x8xi1> to vector<8x8xi1>
    %107 = vector.broadcast %cst_69 : f32 to vector<8x8xf32>
    %108 = arith.select %106, %107, %102 : vector<8x8xi1>, vector<8x8xf32>
    %cst_70 = arith.constant dense<0xFF800000> : vector<8xf32>
    %109 = vector.multi_reduction <maximumf>, %108, %cst_70 [1] : vector<8x8xf32> to vector<8xf32>
    %110 = vector.shape_cast %109 : vector<8xf32> to vector<8x1xf32>
    %111 = vector.broadcast %110 : vector<8x1xf32> to vector<8x8xf32>
    %112 = arith.subf %108, %111 : vector<8x8xf32>
    %113 = math.exp %112 : vector<8x8xf32>
    %cst_71 = arith.constant dense<0.000000e+00> : vector<8xf32>
    %114 = vector.multi_reduction <add>, %113, %cst_71 [1] : vector<8x8xf32> to vector<8xf32>
    %115 = vector.shape_cast %114 : vector<8xf32> to vector<8x1xf32>
    %116 = tpu.reciprocal %115 {approx = true} : vector<8x1xf32> -> vector<8x1xf32>
    %117 = vector.broadcast %116 : vector<8x1xf32> to vector<8x8xf32>
    %118 = arith.mulf %113, %117 : vector<8x8xf32>
    %119 = arith.truncf %118 : vector<8x8xf32> to vector<8x8xbf16>
    %cst_72 = arith.constant dense<0.000000e+00> : vector<8x8xf32>
    %120 = tpu.matmul %119, %99, %cst_72 {dimension_numbers = #tpu.dot_dimension_numbers<[1], [0], [0], [1], [0, 0, 1, 1], [], []>} : vector<8x8xbf16>, vector<8x8xbf16>, vector<8x8xf32> -> vector<8x8xf32>
    %c0_73 = arith.constant 0 : index
    %c24_74 = arith.constant 24 : index
    %121 = vector.load %arg11[%c0_73, %c24_74] : memref<8x32xf32, #tpu.memory_space<vmem>>, vector<8x8xf32>
    tpu.vector_store %arg11[%c0_73, %c24_74], %120 {strides = array<i32>} : memref<8x32xf32, #tpu.memory_space<vmem>>, vector<8x8xf32>,
    %c0_75 = arith.constant 0 : index
    %c0_76 = arith.constant 0 : index
    %122 = vector.load %arg11[%c0_75, %c0_76] : memref<8x32xf32, #tpu.memory_space<vmem>>, vector<8x32xf32>
    %123 = arith.truncf %122 : vector<8x32xf32> to vector<8x32xbf16>
    %c0_77 = arith.constant 0 : index
    %c0_78 = arith.constant 0 : index
    %c0_79 = arith.constant 0 : index
    %124 = vector.load %arg8[%c0_77, %c0_78, %c0_79] : memref<1x8x32xbf16, #tpu.memory_space<vmem>>, vector<1x8x32xbf16>
    %125 = vector.shape_cast %124 : vector<1x8x32xbf16> to vector<8x32xbf16>
    %126 = vector.shape_cast %123 : vector<8x32xbf16> to vector<1x8x32xbf16>
    tpu.vector_store %arg8[%c0_77, %c0_78, %c0_79], %126 {strides = array<i32>} : memref<1x8x32xbf16, #tpu.memory_space<vmem>>, vector<1x8x32xbf16>,
    return
  }
  func.func @transform_0(%arg0: i32) -> (i32, i32, i32) {
    %c0_i32 = arith.constant 0 : i32
    %c0_i32_0 = arith.constant 0 : i32
    %c0_i32_1 = arith.constant 0 : i32
    return %arg0, %c0_i32, %c0_i32_0 : i32, i32, i32
  }
  func.func @transform_1(%arg0: i32) -> (i32, i32, i32) {
    %c0_i32 = arith.constant 0 : i32
    %c0_i32_0 = arith.constant 0 : i32
    %c0_i32_1 = arith.constant 0 : i32
    return %arg0, %c0_i32, %c0_i32_0 : i32, i32, i32
  }
  func.func @transform_2(%arg0: i32) -> (i32, i32) {
    %c0_i32 = arith.constant 0 : i32
    %c0_i32_0 = arith.constant 0 : i32
    %c0_i32_1 = arith.constant 0 : i32
    return %c0_i32, %c0_i32_0 : i32, i32
  }
  func.func @transform_3(%arg0: i32) -> (i32, i32) {
    %c0_i32 = arith.constant 0 : i32
    %c0_i32_0 = arith.constant 0 : i32
    %c0_i32_1 = arith.constant 0 : i32
    return %c0_i32, %c0_i32_0 : i32, i32
  }
  func.func @transform_4(%arg0: i32) -> (i32, i32) {
    %c0_i32 = arith.constant 0 : i32
    %c0_i32_0 = arith.constant 0 : i32
    %c0_i32_1 = arith.constant 0 : i32
    return %c0_i32, %c0_i32_0 : i32, i32
  }
  func.func @transform_5(%arg0: i32) -> (i32, i32) {
    %c0_i32 = arith.constant 0 : i32
    %c0_i32_0 = arith.constant 0 : i32
    %c0_i32_1 = arith.constant 0 : i32
    return %c0_i32, %c0_i32_0 : i32, i32
  }
  func.func @transform_6(%arg0: i32) -> (i32, i32, i32, i32) {
    %c0_i32 = arith.constant 0 : i32
    %c0_i32_0 = arith.constant 0 : i32
    %c0_i32_1 = arith.constant 0 : i32
    %c0_i32_2 = arith.constant 0 : i32
    return %arg0, %c0_i32, %c0_i32_0, %c0_i32_1 : i32, i32, i32, i32
  }
  func.func @transform_7(%arg0: i32) -> (i32, i32, i32) {
    %c0_i32 = arith.constant 0 : i32
    %c0_i32_0 = arith.constant 0 : i32
    %c0_i32_1 = arith.constant 0 : i32
    return %arg0, %c0_i32, %c0_i32_0 : i32, i32, i32
  }
}

module attributes {stable_mosaic.version = 11 : i64} {
  func.func @_ffn_add_ln_kernel(%arg0: i32, %arg1: memref<16x32xf32, #tpu.memory_space<vmem>>, %arg2: memref<32x64xbf16, #tpu.memory_space<vmem>>, %arg3: memref<1x64xf32, #tpu.memory_space<vmem>>, %arg4: memref<64x32xbf16, #tpu.memory_space<vmem>>, %arg5: memref<1x32xf32, #tpu.memory_space<vmem>>, %arg6: memref<16x32xf32, #tpu.memory_space<vmem>>, %arg7: memref<1x32xf32, #tpu.memory_space<vmem>>, %arg8: memref<1x32xf32, #tpu.memory_space<vmem>>, %arg9: memref<16x32xf32, #tpu.memory_space<vmem>>) attributes {dimension_semantics = [#tpu.dimension_semantics<parallel>], iteration_bounds = array<i64: 1>, scalar_prefetch = 0 : i64, scratch_operands = 0 : i64, tpu.core_type = #tpu.core_type<tc>, window_params = [{transform_indices = @transform_0, window_bounds = array<i64: 16, 32>}, {pipeline_mode = #tpu.pipeline_mode<synchronous>, transform_indices = @transform_1, window_bounds = array<i64: 32, 64>}, {pipeline_mode = #tpu.pipeline_mode<synchronous>, transform_indices = @transform_2, window_bounds = array<i64: 1, 64>}, {pipeline_mode = #tpu.pipeline_mode<synchronous>, transform_indices = @transform_3, window_bounds = array<i64: 64, 32>}, {pipeline_mode = #tpu.pipeline_mode<synchronous>, transform_indices = @transform_4, window_bounds = array<i64: 1, 32>}, {transform_indices = @transform_5, window_bounds = array<i64: 16, 32>}, {pipeline_mode = #tpu.pipeline_mode<synchronous>, transform_indices = @transform_6, window_bounds = array<i64: 1, 32>}, {pipeline_mode = #tpu.pipeline_mode<synchronous>, transform_indices = @transform_7, window_bounds = array<i64: 1, 32>}, {transform_indices = @transform_8, window_bounds = array<i64: 16, 32>}]} {
    %c0 = arith.constant 0 : index
    %c0_0 = arith.constant 0 : index
    %0 = vector.load %arg1[%c0, %c0_0] : memref<16x32xf32, #tpu.memory_space<vmem>>, vector<16x32xf32>
    %1 = arith.truncf %0 : vector<16x32xf32> to vector<16x32xbf16>
    %c0_1 = arith.constant 0 : index
    %c0_2 = arith.constant 0 : index
    %2 = vector.load %arg2[%c0_1, %c0_2] : memref<32x64xbf16, #tpu.memory_space<vmem>>, vector<32x64xbf16>
    %cst = arith.constant dense<0.000000e+00> : vector<16x64xf32>
    %3 = tpu.matmul %1, %2, %cst {dimension_numbers = #tpu.dot_dimension_numbers<[1], [0], [0], [1], [0, 0, 1, 1], [], []>} : vector<16x32xbf16>, vector<32x64xbf16>, vector<16x64xf32> -> vector<16x64xf32>
    %c0_3 = arith.constant 0 : index
    %c0_4 = arith.constant 0 : index
    %4 = vector.load %arg3[%c0_3, %c0_4] : memref<1x64xf32, #tpu.memory_space<vmem>>, vector<1x64xf32>
    %5 = vector.broadcast %4 : vector<1x64xf32> to vector<16x64xf32>
    %6 = arith.addf %3, %5 : vector<16x64xf32>
    %cst_5 = arith.constant 0.000000e+00 : f32
    %7 = vector.broadcast %cst_5 : f32 to vector<16x64xf32>
    %8 = arith.maximumf %6, %7 : vector<16x64xf32>
    %9 = arith.truncf %8 : vector<16x64xf32> to vector<16x64xbf16>
    %c0_6 = arith.constant 0 : index
    %c0_7 = arith.constant 0 : index
    %10 = vector.load %arg4[%c0_6, %c0_7] : memref<64x32xbf16, #tpu.memory_space<vmem>>, vector<64x32xbf16>
    %cst_8 = arith.constant dense<0.000000e+00> : vector<16x32xf32>
    %11 = tpu.matmul %9, %10, %cst_8 {dimension_numbers = #tpu.dot_dimension_numbers<[1], [0], [0], [1], [0, 0, 1, 1], [], []>} : vector<16x64xbf16>, vector<64x32xbf16>, vector<16x32xf32> -> vector<16x32xf32>
    %c0_9 = arith.constant 0 : index
    %c0_10 = arith.constant 0 : index
    %12 = vector.load %arg5[%c0_9, %c0_10] : memref<1x32xf32, #tpu.memory_space<vmem>>, vector<1x32xf32>
    %13 = vector.broadcast %12 : vector<1x32xf32> to vector<16x32xf32>
    %14 = arith.addf %11, %13 : vector<16x32xf32>
    %c0_11 = arith.constant 0 : index
    %c0_12 = arith.constant 0 : index
    %15 = vector.load %arg6[%c0_11, %c0_12] : memref<16x32xf32, #tpu.memory_space<vmem>>, vector<16x32xf32>
    %16 = arith.addf %14, %15 : vector<16x32xf32>
    %cst_13 = arith.constant dense<0.000000e+00> : vector<16xf32>
    %17 = vector.multi_reduction <add>, %16, %cst_13 [1] : vector<16x32xf32> to vector<16xf32>
    %18 = vector.shape_cast %17 : vector<16xf32> to vector<16x1xf32>
    %cst_14 = arith.constant 3.200000e+01 : f32
    %19 = vector.broadcast %cst_14 : f32 to vector<16x1xf32>
    %20 = arith.divf %18, %19 : vector<16x1xf32>
    %21 = vector.broadcast %20 : vector<16x1xf32> to vector<16x32xf32>
    %22 = arith.subf %16, %21 : vector<16x32xf32>
    %23 = arith.mulf %22, %22 : vector<16x32xf32>
    %cst_15 = arith.constant dense<0.000000e+00> : vector<16xf32>
    %24 = vector.multi_reduction <add>, %23, %cst_15 [1] : vector<16x32xf32> to vector<16xf32>
    %25 = vector.shape_cast %24 : vector<16xf32> to vector<16x1xf32>
    %cst_16 = arith.constant 3.200000e+01 : f32
    %26 = vector.broadcast %cst_16 : f32 to vector<16x1xf32>
    %27 = arith.divf %25, %26 : vector<16x1xf32>
    %28 = vector.broadcast %20 : vector<16x1xf32> to vector<16x32xf32>
    %29 = arith.subf %16, %28 : vector<16x32xf32>
    %cst_17 = arith.constant 9.99999996E-13 : f32
    %30 = vector.broadcast %cst_17 : f32 to vector<16x1xf32>
    %31 = arith.addf %27, %30 : vector<16x1xf32>
    %32 = math.rsqrt %31 : vector<16x1xf32>
    %33 = vector.broadcast %32 : vector<16x1xf32> to vector<16x32xf32>
    %34 = arith.mulf %29, %33 : vector<16x32xf32>
    %c0_18 = arith.constant 0 : index
    %c0_19 = arith.constant 0 : index
    %35 = vector.load %arg7[%c0_18, %c0_19] : memref<1x32xf32, #tpu.memory_space<vmem>>, vector<1x32xf32>
    %36 = vector.broadcast %35 : vector<1x32xf32> to vector<16x32xf32>
    %37 = arith.mulf %34, %36 : vector<16x32xf32>
    %c0_20 = arith.constant 0 : index
    %c0_21 = arith.constant 0 : index
    %38 = vector.load %arg8[%c0_20, %c0_21] : memref<1x32xf32, #tpu.memory_space<vmem>>, vector<1x32xf32>
    %39 = vector.broadcast %38 : vector<1x32xf32> to vector<16x32xf32>
    %40 = arith.addf %37, %39 : vector<16x32xf32>
    %c0_22 = arith.constant 0 : index
    %c0_23 = arith.constant 0 : index
    %41 = vector.load %arg9[%c0_22, %c0_23] : memref<16x32xf32, #tpu.memory_space<vmem>>, vector<16x32xf32>
    tpu.vector_store %arg9[%c0_22, %c0_23], %40 {strides = array<i32>} : memref<16x32xf32, #tpu.memory_space<vmem>>, vector<16x32xf32>,
    return
  }
  func.func @transform_0(%arg0: i32) -> (i32, i32) {
    %c0_i32 = arith.constant 0 : i32
    %c0_i32_0 = arith.constant 0 : i32
    return %arg0, %c0_i32 : i32, i32
  }
  func.func @transform_1(%arg0: i32) -> (i32, i32) {
    %c0_i32 = arith.constant 0 : i32
    %c0_i32_0 = arith.constant 0 : i32
    %c0_i32_1 = arith.constant 0 : i32
    return %c0_i32, %c0_i32_0 : i32, i32
  }
  func.func @transform_2(%arg0: i32) -> (i32, i32) {
    %c0_i32 = arith.constant 0 : i32
    %c0_i32_0 = arith.constant 0 : i32
    %c0_i32_1 = arith.constant 0 : i32
    return %c0_i32, %c0_i32_0 : i32, i32
  }
  func.func @transform_3(%arg0: i32) -> (i32, i32) {
    %c0_i32 = arith.constant 0 : i32
    %c0_i32_0 = arith.constant 0 : i32
    %c0_i32_1 = arith.constant 0 : i32
    return %c0_i32, %c0_i32_0 : i32, i32
  }
  func.func @transform_4(%arg0: i32) -> (i32, i32) {
    %c0_i32 = arith.constant 0 : i32
    %c0_i32_0 = arith.constant 0 : i32
    %c0_i32_1 = arith.constant 0 : i32
    return %c0_i32, %c0_i32_0 : i32, i32
  }
  func.func @transform_5(%arg0: i32) -> (i32, i32) {
    %c0_i32 = arith.constant 0 : i32
    %c0_i32_0 = arith.constant 0 : i32
    return %arg0, %c0_i32 : i32, i32
  }
  func.func @transform_6(%arg0: i32) -> (i32, i32) {
    %c0_i32 = arith.constant 0 : i32
    %c0_i32_0 = arith.constant 0 : i32
    %c0_i32_1 = arith.constant 0 : i32
    return %c0_i32, %c0_i32_0 : i32, i32
  }
  func.func @transform_7(%arg0: i32) -> (i32, i32) {
    %c0_i32 = arith.constant 0 : i32
    %c0_i32_0 = arith.constant 0 : i32
    %c0_i32_1 = arith.constant 0 : i32
    return %c0_i32, %c0_i32_0 : i32, i32
  }
  func.func @transform_8(%arg0: i32) -> (i32, i32) {
    %c0_i32 = arith.constant 0 : i32
    %c0_i32_0 = arith.constant 0 : i32
    return %arg0, %c0_i32 : i32, i32
  }
}

module attributes {stable_mosaic.version = 11 : i64} {
  func.func @_linear_kernel(%arg0: i32, %arg1: i32, %arg2: memref<16x32xf32, #tpu.memory_space<vmem>>, %arg3: memref<32x50xbf16, #tpu.memory_space<vmem>>, %arg4: memref<1x50xf32, #tpu.memory_space<vmem>>, %arg5: memref<16x50xf32, #tpu.memory_space<vmem>>) attributes {dimension_semantics = [#tpu.dimension_semantics<parallel>, #tpu.dimension_semantics<parallel>], iteration_bounds = array<i64: 1, 1>, scalar_prefetch = 0 : i64, scratch_operands = 0 : i64, tpu.core_type = #tpu.core_type<tc>, window_params = [{transform_indices = @transform_0, window_bounds = array<i64: 16, 32>}, {transform_indices = @transform_1, window_bounds = array<i64: 32, 50>}, {transform_indices = @transform_2, window_bounds = array<i64: 1, 50>}, {transform_indices = @transform_3, window_bounds = array<i64: 16, 50>}]} {
    %c0 = arith.constant 0 : index
    %c0_0 = arith.constant 0 : index
    %0 = vector.load %arg2[%c0, %c0_0] : memref<16x32xf32, #tpu.memory_space<vmem>>, vector<16x32xf32>
    %1 = arith.truncf %0 : vector<16x32xf32> to vector<16x32xbf16>
    %c0_1 = arith.constant 0 : index
    %c0_2 = arith.constant 0 : index
    %2 = vector.load %arg3[%c0_1, %c0_2] : memref<32x50xbf16, #tpu.memory_space<vmem>>, vector<32x50xbf16>
    %cst = arith.constant dense<0.000000e+00> : vector<16x50xf32>
    %3 = tpu.matmul %1, %2, %cst {dimension_numbers = #tpu.dot_dimension_numbers<[1], [0], [0], [1], [0, 0, 1, 1], [], []>} : vector<16x32xbf16>, vector<32x50xbf16>, vector<16x50xf32> -> vector<16x50xf32>
    %c0_3 = arith.constant 0 : index
    %c0_4 = arith.constant 0 : index
    %4 = vector.load %arg4[%c0_3, %c0_4] : memref<1x50xf32, #tpu.memory_space<vmem>>, vector<1x50xf32>
    %5 = vector.broadcast %4 : vector<1x50xf32> to vector<16x50xf32>
    %6 = arith.addf %3, %5 : vector<16x50xf32>
    %c0_5 = arith.constant 0 : index
    %c0_6 = arith.constant 0 : index
    %7 = vector.load %arg5[%c0_5, %c0_6] : memref<16x50xf32, #tpu.memory_space<vmem>>, vector<16x50xf32>
    tpu.vector_store %arg5[%c0_5, %c0_6], %6 {strides = array<i32>} : memref<16x50xf32, #tpu.memory_space<vmem>>, vector<16x50xf32>,
    return
  }
  func.func @transform_0(%arg0: i32, %arg1: i32) -> (i32, i32) {
    %c0_i32 = arith.constant 0 : i32
    %c0_i32_0 = arith.constant 0 : i32
    return %arg1, %c0_i32 : i32, i32
  }
  func.func @transform_1(%arg0: i32, %arg1: i32) -> (i32, i32) {
    %c0_i32 = arith.constant 0 : i32
    %c0_i32_0 = arith.constant 0 : i32
    return %c0_i32, %arg0 : i32, i32
  }
  func.func @transform_2(%arg0: i32, %arg1: i32) -> (i32, i32) {
    %c0_i32 = arith.constant 0 : i32
    %c0_i32_0 = arith.constant 0 : i32
    return %c0_i32, %arg0 : i32, i32
  }
  func.func @transform_3(%arg0: i32, %arg1: i32) -> (i32, i32) {
    %c0_i32 = arith.constant 0 : i32
    return %arg1, %arg0 : i32, i32
  }
}

</mosaic_0001>

<llo_original>
// kernel: decoder_forward.15
$region0: #{decoder_forward.15}
  #allocation0 [shape = 'u32[]', space=smem, size = 0x4, offset = 0x4, fixed_abs, tag = 'smem constant byte address 0x4 - core index']
  #allocation1 [shape = 'u32[144,128]{1,0:T(1,128)}', space=vmem, size = 0x12000, scoped, tag = 'internal scratch']
  %s0 = inlined_call_operand.vmem [shape: f32[16,32], index: 0, kind: input, shape index: {}, may-alias: {0,5}]
  %s1 = inlined_call_operand.vmem [shape: bf16[32,64], index: 1, kind: input, shape index: {}]
  %s2 = inlined_call_operand.vmem [shape: f32[1,64], index: 2, kind: input, shape index: {}]
  %s3 = inlined_call_operand.vmem [shape: bf16[64,32], index: 3, kind: input, shape index: {}]
  %s4 = inlined_call_operand.vmem [shape: f32[1,32], index: 4, kind: input, shape index: {}]
  %s5 = inlined_call_operand.vmem [shape: f32[16,32], index: 5, kind: input, shape index: {}, may-alias: {0,5}]
  %s6 = inlined_call_operand.vmem [shape: f32[1,32], index: 6, kind: input, shape index: {}]
  %s7 = inlined_call_operand.vmem [shape: f32[1,32], index: 7, kind: input, shape index: {}]
  %s8 = inlined_call_operand.vmem [shape: f32[16,32], index: 8, kind: output, shape index: {}]
  %s9 = sld [smem:[#allocation0]]
  $region42: #{decoder_forward.15} parent=0
    _
  %s11 = ssub.s32 1, %s9
  %s12 = scalar_select 0, %s11, %s9
  // Predicated region
  $region2: #{decoder_forward.15} parent=0 // pred_check
    _
  $region3: #{decoder_forward.15} parent=0 // pred_check_branch
    %14 = sbr.rel (0) target = $region5
  $region4: #{decoder_forward.15} parent=0 // pred_region
    _
  $region5: #{decoder_forward.15} parent=0 // pred_fallthru
    _
  // Predicated region
  $region6: #{decoder_forward.15} parent=0 // pred_check
    _
  $region7: #{decoder_forward.15} parent=0 // pred_check_branch
    %16 = sbr.rel (0) target = $region9
  $region8: #{decoder_forward.15} parent=0 // pred_region
    _
  $region9: #{decoder_forward.15} parent=0 // pred_fallthru
    _
  // Predicated region
  $region10: #{decoder_forward.15} parent=0 // pred_check
    _
  $region11: #{decoder_forward.15} parent=0 // pred_check_branch
    %18 = sbr.rel (0) target = $region13
  $region12: #{decoder_forward.15} parent=0 // pred_region
    _
  $region13: #{decoder_forward.15} parent=0 // pred_fallthru
    _
  // Predicated region
  $region14: #{decoder_forward.15} parent=0 // pred_check
    _
  $region15: #{decoder_forward.15} parent=0 // pred_check_branch
    %20 = sbr.rel (0) target = $region17
  $region16: #{decoder_forward.15} parent=0 // pred_region
    _
  $region17: #{decoder_forward.15} parent=0 // pred_fallthru
    _
  // Predicated region
  $region18: #{decoder_forward.15} parent=0 // pred_check
    _
  $region19: #{decoder_forward.15} parent=0 // pred_check_branch
    %22 = sbr.rel (0) target = $region21
  $region20: #{decoder_forward.15} parent=0 // pred_region
    _
  $region21: #{decoder_forward.15} parent=0 // pred_fallthru
    _
  // Predicated region
  $region22: #{decoder_forward.15} parent=0 // pred_check
    _
  $region23: #{decoder_forward.15} parent=0 // pred_check_branch
    %24 = sbr.rel (0) target = $region25
  $region24: #{decoder_forward.15} parent=0 // pred_region
    _
  $region25: #{decoder_forward.15} parent=0 // pred_fallthru
    _
  // Predicated region
  $region26: #{decoder_forward.15} parent=0 // pred_check
    _
  $region27: #{decoder_forward.15} parent=0 // pred_check_branch
    %26 = sbr.rel (0) target = $region29
  $region28: #{decoder_forward.15} parent=0 // pred_region
    _
  $region29: #{decoder_forward.15} parent=0 // pred_fallthru
    _
  // Predicated region
  $region30: #{decoder_forward.15} parent=0 // pred_check
    _
  $region31: #{decoder_forward.15} parent=0 // pred_check_branch
    %28 = sbr.rel (0) target = $region33
  $region32: #{decoder_forward.15} parent=0 // pred_region
    _
  $region33: #{decoder_forward.15} parent=0 // pred_fallthru
    _
  %v30 = vld [vmem:[%s0] sm:$0xff]
  %v31 = vld [vmem:[%s0 + $0x8] sm:$0xff]
  %v32 = vpack.c.bf16 %v31, %v30
  %v33 = vld [vmem:[%s1] sm:$0xf]
  %v34 = vld [vmem:[%s1 + $0x4] sm:$0xf]
  %v35 = vld [vmem:[%s1 + $0x8] sm:$0xf]
  %v36 = vld [vmem:[%s1 + $0xc] sm:$0xf]
  %v37 = vld [vmem:[%s2] sm:$0x1]
  %v39 = vlaneseq
  %v40 = vshrl.u32 %v39, 7
  %v41 = vsub.s32 0, %v40
  %v42 = vrot.slane %v37, %v41
  %v48 = vunpack.c.l.b16 %v33
  %v49 = vunpack.c.l.b16 %v34
  %v50 = vunpack.c.l.b16 %v35
  %v51 = vunpack.c.l.b16 %v36
  %v52 = vpack.c.b16 %v49, %v48
  %v53 = vpack.c.b16 %v51, %v50
  %vm56 = vcmask 261120
  %v58 = vsel %vm56, %v32, 0
  %60 = vmatprep.subr.bf16.mxu0 0
  %61 = vmatpush1.bf16.msra.mxu0 0
  %62 = vmatprep.subr.bf16.mxu0 0
  %63 = vmatpush1.bf16.msra.mxu0 0
  %64 = vmatprep.subr.bf16.mxu0 0
  %65 = vmatpush1.bf16.msra.mxu0 0
  %66 = vmatprep.subr.bf16.mxu0 0
  %67 = vmatpush1.bf16.msra.mxu0 0
  %68 = vmatprep.subr.bf16.mxu0 0
  %69 = vmatpush1.bf16.msra.mxu0 0
  %70 = vmatprep.subr.bf16.mxu0 0
  %71 = vmatpush1.bf16.msra.mxu0 0
  %72 = vmatprep.subr.bf16.mxu0 0
  %73 = vmatpush1.bf16.msra.mxu0 %v53
  %74 = vmatprep.subr.bf16.mxu0 0
  %75 = vmatpush1.bf16.msra.mxu0 %v52
  %76 = vmatprep.subr.bf16.mxu0 0
  %77 = vmatpush2.bf16.msra.mxu0 0
  %78 = vmatprep.subr.bf16.mxu0 0
  %79 = vmatpush2.bf16.msra.mxu0 0
  %80 = vmatprep.subr.bf16.mxu0 0
  %81 = vmatpush2.bf16.msra.mxu0 0
  %82 = vmatprep.subr.bf16.mxu0 0
  %83 = vmatpush2.bf16.msra.mxu0 0
  %84 = vmatprep.subr.bf16.mxu0 0
  %85 = vmatpush2.bf16.msra.mxu0 0
  %86 = vmatprep.subr.bf16.mxu0 0
  %87 = vmatpush2.bf16.msra.mxu0 0
  %88 = vmatprep.subr.bf16.mxu0 0
  %89 = vmatpush2.bf16.msra.mxu0 0
  %90 = vmatprep.subr.bf16.mxu0 0
  %91 = vmatpush2.bf16.msra.mxu0 0
  %92 = vmatprep.mubr.bf16.mxu0 0
  %93 = vmatmul.mubr.bf16.gmra.mxu0 %v58
  %v94 = vpop.f32.mrf.mxu0
  %v95 = vadd.f32 %v42, %v94
  %v96 = vpop.f32.mrf.mxu0
  %v97 = vpop.f32.mrf.mxu0
  %v98 = vadd.f32 %v42, %v97
  %v99 = vpop.f32.mrf.mxu0
  %100 = vdwg.mxu0
  %v101 = vmax.f32 %v95, 0.0
  %v102 = vmax.f32 %v98, 0.0
  %v103 = vpack.c.bf16 %v102, %v101
  %v104 = vld [vmem:[%s3] sm:$0xf]
  %v105 = vld [vmem:[%s3 + $0x4] sm:$0xf]
  %v106 = vld [vmem:[%s3 + $0x8] sm:$0xf]
  %v107 = vld [vmem:[%s3 + $0xc] sm:$0xf]
  %v108 = vld [vmem:[%s3 + $0x10] sm:$0xf]
  %v109 = vld [vmem:[%s3 + $0x14] sm:$0xf]
  %v110 = vld [vmem:[%s3 + $0x18] sm:$0xf]
  %v111 = vld [vmem:[%s3 + $0x1c] sm:$0xf]
  %v112 = vld [vmem:[%s4] sm:$0x1]
  %v114 = vlaneseq
  %v115 = vshrl.u32 %v114, 7
  %v116 = vsub.s32 0, %v115
  %v117 = vrot.slane %v112, %v116
  %v127 = vunpack.c.l.b16 %v104
  %v128 = vunpack.c.l.b16 %v105
  %v129 = vunpack.c.l.b16 %v106
  %v130 = vunpack.c.l.b16 %v107
  %v131 = vunpack.c.l.b16 %v108
  %v132 = vunpack.c.l.b16 %v109
  %v133 = vunpack.c.l.b16 %v110
  %v134 = vunpack.c.l.b16 %v111
  %v135 = vpack.c.b16 %v128, %v127
  %v136 = vpack.c.b16 %v130, %v129
  %v137 = vpack.c.b16 %v132, %v131
  %v138 = vpack.c.b16 %v134, %v133
  %vm143 = vcmask 523264
  %v145 = vsel %vm143, %v103, 0
  %147 = vmatprep.subr.bf16.mxu0 0
  %148 = vmatpush1.bf16.msra.mxu0 0
  %149 = vmatprep.subr.bf16.mxu0 0
  %150 = vmatpush1.bf16.msra.mxu0 0
  %151 = vmatprep.subr.bf16.mxu0 0
  %152 = vmatpush1.bf16.msra.mxu0 0
  %153 = vmatprep.subr.bf16.mxu0 0
  %154 = vmatpush1.bf16.msra.mxu0 0
  %155 = vmatprep.subr.bf16.mxu0 0
  %156 = vmatpush1.bf16.msra.mxu0 %v138
  %157 = vmatprep.subr.bf16.mxu0 0
  %158 = vmatpush1.bf16.msra.mxu0 %v137
  %159 = vmatprep.subr.bf16.mxu0 0
  %160 = vmatpush1.bf16.msra.mxu0 %v136
  %161 = vmatprep.subr.bf16.mxu0 0
  %162 = vmatpush1.bf16.msra.mxu0 %v135
  %163 = vmatprep.subr.bf16.mxu0 0
  %164 = vmatpush2.bf16.msra.mxu0 0
  %165 = vmatprep.subr.bf16.mxu0 0
  %166 = vmatpush2.bf16.msra.mxu0 0
  %167 = vmatprep.subr.bf16.mxu0 0
  %168 = vmatpush2.bf16.msra.mxu0 0
  %169 = vmatprep.subr.bf16.mxu0 0
  %170 = vmatpush2.bf16.msra.mxu0 0
  %171 = vmatprep.subr.bf16.mxu0 0
  %172 = vmatpush2.bf16.msra.mxu0 0
  %173 = vmatprep.subr.bf16.mxu0 0
  %174 = vmatpush2.bf16.msra.mxu0 0
  %175 = vmatprep.subr.bf16.mxu0 0
  %176 = vmatpush2.bf16.msra.mxu0 0
  %177 = vmatprep.subr.bf16.mxu0 0
  %178 = vmatpush2.bf16.msra.mxu0 0
  %179 = vmatprep.mubr.bf16.mxu0 0
  %180 = vmatmul.mubr.bf16.gmra.mxu0 %v145
  %v181 = vpop.f32.mrf.mxu0
  %v182 = vadd.f32 %v117, %v181
  %v183 = vpop.f32.mrf.mxu0
  %v184 = vpop.f32.mrf.mxu0
  %v185 = vadd.f32 %v117, %v184
  %v186 = vpop.f32.mrf.mxu0
  %187 = vdwg.mxu0
  %v188 = vld [vmem:[%s5] sm:$0xff]
  %v189 = vld [vmem:[%s5 + $0x8] sm:$0xff]
  %v190 = vadd.f32 %v182, %v188
  %v191 = vadd.f32 %v185, %v189
  %v192 = vsel %vm56, %v190, 0.0
  %193 = vadd.xlane.f32.xlu0 %v192
  %v194 = vpop.xlane.xlu0 %193
  %v195 = vsel %vm56, %v191, 0.0
  %196 = vadd.xlane.f32.xlu0 %v195
  %v197 = vpop.xlane.xlu0 %196
  %v198 = vrcp.pop 32.0
  %v199 = vmul.f32 %v194, %v198
  %v200 = vmul.f32 %v197, %v198
  %v201 = vsub.f32 %v190, %v199
  %v202 = vsub.f32 %v191, %v200
  %v203 = vmul.f32 %v201, %v201
  %v204 = vmul.f32 %v202, %v202
  %v205 = vsel %vm56, %v203, 0.0
  %206 = vadd.xlane.f32.xlu0 %v205
  %v207 = vpop.xlane.xlu0 %206
  %v208 = vsel %vm56, %v204, 0.0
  %209 = vadd.xlane.f32.xlu0 %v208
  %v210 = vpop.xlane.xlu0 %209
  %v211 = vmul.f32 %v207, %v198
  %v212 = vmul.f32 %v210, %v198
  %v213 = vadd.f32 %v211, 1e-12
  %v214 = vadd.f32 %v212, 1e-12
  %v215 = vrsqrt.pop %v213
  %v216 = vrsqrt.pop %v214
  %v217 = vmul.f32 %v201, %v215
  %v218 = vmul.f32 %v202, %v216
  %v219 = vld [vmem:[%s6] sm:$0x1]
  %v221 = vlaneseq
  %v222 = vshrl.u32 %v221, 7
  %v223 = vsub.s32 0, %v222
  %v224 = vrot.slane %v219, %v223
  %v226 = vmul.f32 %v217, %v224
  %v227 = vmul.f32 %v218, %v224
  %v228 = vld [vmem:[%s7] sm:$0x1]
  %v230 = vlaneseq
  %v231 = vshrl.u32 %v230, 7
  %v232 = vsub.s32 0, %v231
  %v233 = vrot.slane %v228, %v232
  %v235 = vadd.f32 %v226, %v233
  %v236 = vadd.f32 %v227, %v233
  %237 = vst.msk [vmem:[%s8] sm:$0xff] %vm56, %v235
  %238 = vst.msk [vmem:[%s8 + $0x8] sm:$0xff] %vm56, %v236
  // Predicated region
  $region34: #{decoder_forward.15} parent=0 // pred_check
    _
  $region35: #{decoder_forward.15} parent=0 // pred_check_branch
    %240 = sbr.rel (0) target = $region37
  $region36: #{decoder_forward.15} parent=0 // pred_region
    _
  $region37: #{decoder_forward.15} parent=0 // pred_fallthru
    _
  // Predicated region
  $region38: #{decoder_forward.15} parent=0 // pred_check
    _
  $region39: #{decoder_forward.15} parent=0 // pred_check_branch
    %242 = sbr.rel (0) target = $region41
  $region40: #{decoder_forward.15} parent=0 // pred_region
    _
  $region41: #{decoder_forward.15} parent=0 // pred_fallthru
    _

// kernel: decoder_forward.12
$region0: #{decoder_forward.12}
  #allocation0 [shape = 'u32[]', space=smem, size = 0x4, offset = 0x4, fixed_abs, tag = 'smem constant byte address 0x4 - core index']
  #allocation1 [shape = 'u32[144,128]{1,0:T(1,128)}', space=vmem, size = 0x12000, scoped, tag = 'internal scratch']
  %s0 = inlined_call_operand.vmem [shape: bf16[16,32], index: 0, kind: input, shape index: {}]
  %s1 = inlined_call_operand.vmem [shape: bf16[32,32], index: 1, kind: input, shape index: {}]
  %s2 = inlined_call_operand.vmem [shape: f32[1,32], index: 2, kind: input, shape index: {}]
  %s3 = inlined_call_operand.vmem [shape: f32[16,32], index: 3, kind: input, shape index: {}]
  %s4 = inlined_call_operand.vmem [shape: f32[1,32], index: 4, kind: input, shape index: {}]
  %s5 = inlined_call_operand.vmem [shape: f32[1,32], index: 5, kind: input, shape index: {}]
  %s6 = inlined_call_operand.vmem [shape: f32[16,32], index: 6, kind: output, shape index: {}]
  %s7 = sld [smem:[#allocation0]]
  $region34: #{decoder_forward.12} parent=0
    _
  %s9 = ssub.s32 1, %s7
  %s10 = scalar_select 0, %s9, %s7
  // Predicated region
  $region2: #{decoder_forward.12} parent=0 // pred_check
    _
  $region3: #{decoder_forward.12} parent=0 // pred_check_branch
    %12 = sbr.rel (0) target = $region5
  $region4: #{decoder_forward.12} parent=0 // pred_region
    _
  $region5: #{decoder_forward.12} parent=0 // pred_fallthru
    _
  // Predicated region
  $region6: #{decoder_forward.12} parent=0 // pred_check
    _
  $region7: #{decoder_forward.12} parent=0 // pred_check_branch
    %14 = sbr.rel (0) target = $region9
  $region8: #{decoder_forward.12} parent=0 // pred_region
    _
  $region9: #{decoder_forward.12} parent=0 // pred_fallthru
    _
  // Predicated region
  $region10: #{decoder_forward.12} parent=0 // pred_check
    _
  $region11: #{decoder_forward.12} parent=0 // pred_check_branch
    %16 = sbr.rel (0) target = $region13
  $region12: #{decoder_forward.12} parent=0 // pred_region
    _
  $region13: #{decoder_forward.12} parent=0 // pred_fallthru
    _
  // Predicated region
  $region14: #{decoder_forward.12} parent=0 // pred_check
    _
  $region15: #{decoder_forward.12} parent=0 // pred_check_branch
    %18 = sbr.rel (0) target = $region17
  $region16: #{decoder_forward.12} parent=0 // pred_region
    _
  $region17: #{decoder_forward.12} parent=0 // pred_fallthru
    _
  // Predicated region
  $region18: #{decoder_forward.12} parent=0 // pred_check
    _
  $region19: #{decoder_forward.12} parent=0 // pred_check_branch
    %20 = sbr.rel (0) target = $region21
  $region20: #{decoder_forward.12} parent=0 // pred_region
    _
  $region21: #{decoder_forward.12} parent=0 // pred_fallthru
    _
  // Predicated region
  $region22: #{decoder_forward.12} parent=0 // pred_check
    _
  $region23: #{decoder_forward.12} parent=0 // pred_check_branch
    %22 = sbr.rel (0) target = $region25
  $region24: #{decoder_forward.12} parent=0 // pred_region
    _
  $region25: #{decoder_forward.12} parent=0 // pred_fallthru
    _
  %v24 = vld [vmem:[%s0] sm:$0xf]
  %v25 = vld [vmem:[%s0 + $0x4] sm:$0xf]
  %v26 = vld [vmem:[%s1] sm:$0xf]
  %v27 = vld [vmem:[%s1 + $0x4] sm:$0xf]
  %v28 = vld [vmem:[%s1 + $0x8] sm:$0xf]
  %v29 = vld [vmem:[%s1 + $0xc] sm:$0xf]
  %v30 = vld [vmem:[%s2] sm:$0x1]
  %v32 = vlaneseq
  %v33 = vshrl.u32 %v32, 7
  %v34 = vsub.s32 0, %v33
  %v35 = vrot.slane %v30, %v34
  %v39 = vunpack.c.l.b16 %v24
  %v40 = vunpack.c.l.b16 %v25
  %v41 = vpack.c.b16 %v40, %v39
  %v46 = vunpack.c.l.b16 %v26
  %v47 = vunpack.c.l.b16 %v27
  %v48 = vunpack.c.l.b16 %v28
  %v49 = vunpack.c.l.b16 %v29
  %v50 = vpack.c.b16 %v47, %v46
  %v51 = vpack.c.b16 %v49, %v48
  %vm54 = vcmask 261120
  %v56 = vsel %vm54, %v41, 0
  %58 = vmatprep.subr.bf16.mxu0 0
  %59 = vmatpush1.bf16.msra.mxu0 0
  %60 = vmatprep.subr.bf16.mxu0 0
  %61 = vmatpush1.bf16.msra.mxu0 0
  %62 = vmatprep.subr.bf16.mxu0 0
  %63 = vmatpush1.bf16.msra.mxu0 0
  %64 = vmatprep.subr.bf16.mxu0 0
  %65 = vmatpush1.bf16.msra.mxu0 0
  %66 = vmatprep.subr.bf16.mxu0 0
  %67 = vmatpush1.bf16.msra.mxu0 0
  %68 = vmatprep.subr.bf16.mxu0 0
  %69 = vmatpush1.bf16.msra.mxu0 0
  %70 = vmatprep.subr.bf16.mxu0 0
  %71 = vmatpush1.bf16.msra.mxu0 %v51
  %72 = vmatprep.subr.bf16.mxu0 0
  %73 = vmatpush1.bf16.msra.mxu0 %v50
  %74 = vmatprep.subr.bf16.mxu0 0
  %75 = vmatpush2.bf16.msra.mxu0 0
  %76 = vmatprep.subr.bf16.mxu0 0
  %77 = vmatpush2.bf16.msra.mxu0 0
  %78 = vmatprep.subr.bf16.mxu0 0
  %79 = vmatpush2.bf16.msra.mxu0 0
  %80 = vmatprep.subr.bf16.mxu0 0
  %81 = vmatpush2.bf16.msra.mxu0 0
  %82 = vmatprep.subr.bf16.mxu0 0
  %83 = vmatpush2.bf16.msra.mxu0 0
  %84 = vmatprep.subr.bf16.mxu0 0
  %85 = vmatpush2.bf16.msra.mxu0 0
  %86 = vmatprep.subr.bf16.mxu0 0
  %87 = vmatpush2.bf16.msra.mxu0 0
  %88 = vmatprep.subr.bf16.mxu0 0
  %89 = vmatpush2.bf16.msra.mxu0 0
  %90 = vmatprep.mubr.bf16.mxu0 0
  %91 = vmatmul.mubr.bf16.gmra.mxu0 %v56
  %v92 = vpop.f32.mrf.mxu0
  %v93 = vadd.f32 %v35, %v92
  %v94 = vpop.f32.mrf.mxu0
  %v95 = vpop.f32.mrf.mxu0
  %v96 = vadd.f32 %v35, %v95
  %v97 = vpop.f32.mrf.mxu0
  %98 = vdwg.mxu0
  %v99 = vld [vmem:[%s3] sm:$0xff]
  %v100 = vld [vmem:[%s3 + $0x8] sm:$0xff]
  %v101 = vadd.f32 %v93, %v99
  %v102 = vadd.f32 %v96, %v100
  %v103 = vsel %vm54, %v101, 0.0
  %104 = vadd.xlane.f32.xlu0 %v103
  %v105 = vpop.xlane.xlu0 %104
  %v106 = vsel %vm54, %v102, 0.0
  %107 = vadd.xlane.f32.xlu0 %v106
  %v108 = vpop.xlane.xlu0 %107
  %v109 = vrcp.pop 32.0
  %v110 = vmul.f32 %v105, %v109
  %v111 = vmul.f32 %v108, %v109
  %v112 = vsub.f32 %v101, %v110
  %v113 = vsub.f32 %v102, %v111
  %v114 = vmul.f32 %v112, %v112
  %v115 = vmul.f32 %v113, %v113
  %v116 = vsel %vm54, %v114, 0.0
  %117 = vadd.xlane.f32.xlu0 %v116
  %v118 = vpop.xlane.xlu0 %117
  %v119 = vsel %vm54, %v115, 0.0
  %120 = vadd.xlane.f32.xlu0 %v119
  %v121 = vpop.xlane.xlu0 %120
  %v122 = vmul.f32 %v118, %v109
  %v123 = vmul.f32 %v121, %v109
  %v124 = vadd.f32 %v122, 1e-12
  %v125 = vadd.f32 %v123, 1e-12
  %v126 = vrsqrt.pop %v124
  %v127 = vrsqrt.pop %v125
  %v128 = vmul.f32 %v112, %v126
  %v129 = vmul.f32 %v113, %v127
  %v130 = vld [vmem:[%s4] sm:$0x1]
  %v132 = vlaneseq
  %v133 = vshrl.u32 %v132, 7
  %v134 = vsub.s32 0, %v133
  %v135 = vrot.slane %v130, %v134
  %v137 = vmul.f32 %v128, %v135
  %v138 = vmul.f32 %v129, %v135
  %v139 = vld [vmem:[%s5] sm:$0x1]
  %v141 = vlaneseq
  %v142 = vshrl.u32 %v141, 7
  %v143 = vsub.s32 0, %v142
  %v144 = vrot.slane %v139, %v143
  %v146 = vadd.f32 %v137, %v144
  %v147 = vadd.f32 %v138, %v144
  %148 = vst.msk [vmem:[%s6] sm:$0xff] %vm54, %v146
  %149 = vst.msk [vmem:[%s6 + $0x8] sm:$0xff] %vm54, %v147
  // Predicated region
  $region26: #{decoder_forward.12} parent=0 // pred_check
    _
  $region27: #{decoder_forward.12} parent=0 // pred_check_branch
    %151 = sbr.rel (0) target = $region29
  $region28: #{decoder_forward.12} parent=0 // pred_region
    _
  $region29: #{decoder_forward.12} parent=0 // pred_fallthru
    _
  // Predicated region
  $region30: #{decoder_forward.12} parent=0 // pred_check
    _
  $region31: #{decoder_forward.12} parent=0 // pred_check_branch
    %153 = sbr.rel (0) target = $region33
  $region32: #{decoder_forward.12} parent=0 // pred_region
    _
  $region33: #{decoder_forward.12} parent=0 // pred_fallthru
    _

// kernel: decoder_forward.13
$region0: #{decoder_forward.13}
  #allocation0 [shape = 'u32[]', space=smem, size = 0x4, offset = 0x4, fixed_abs, tag = 'smem constant byte address 0x4 - core index']
  #allocation1 [shape = 'u32[144,128]{1,0:T(1,128)}', space=vmem, size = 0x12000, scoped, tag = 'internal scratch']
  #allocation2 [shape = 'bf16[8,32]{1,0:T(8,128)(2,1)}', space=vmem, size = 0x800, scoped, tag = 'scratch operand']
  #allocation3 [shape = 'bf16[8,64]{1,0:T(8,128)(2,1)}', space=vmem, size = 0x800, scoped, tag = 'scratch operand']
  #allocation4 [shape = 'f32[8,32]{1,0:T(8,128)}', space=vmem, size = 0x1000, scoped, tag = 'scratch operand']
  %s0 = inlined_call_operand.vmem [shape: f32[2,8,32], index: 0, kind: input, shape index: {}]
  %s1 = inlined_call_operand.vmem [shape: f32[2,8,32], index: 1, kind: input, shape index: {}]
  %s2 = inlined_call_operand.vmem [shape: bf16[32,32], index: 2, kind: input, shape index: {}]
  %s3 = inlined_call_operand.vmem [shape: f32[1,32], index: 3, kind: input, shape index: {}]
  %s4 = inlined_call_operand.vmem [shape: bf16[32,64], index: 4, kind: input, shape index: {}]
  %s5 = inlined_call_operand.vmem [shape: f32[1,64], index: 5, kind: input, shape index: {}]
  %s6 = inlined_call_operand.vmem [shape: f32[2,1,1,8], index: 6, kind: input, shape index: {}]
  %s7 = inlined_call_operand.vmem [shape: bf16[2,8,32], index: 7, kind: output, shape index: {}]
  %s8 = sld [smem:[#allocation0]]
  $region61: #{decoder_forward.13} parent=0
    _
  %s10 = ssub.s32 1, %s8
  %s11 = scalar_select 0, %s10, %s8
  loop: start=0, step=1, limit=4
  $region2: #{decoder_forward.13} parent=0 // loop_pre_header
    _
  $region3: #{decoder_forward.13} parent=0 // loop_header
    %s13 = sphi 0, %s17
    %p14 = scmp.ge.s32.totalorder %s13, 4
    %s23 = sphi 0, %s25
    %s26 = sphi 0, %s23
    %s27 = sphi 0, %s26
    %s43 = sphi 0, %s27
    %s49 = sphi 0, %s51
    %s52 = sphi 0, %s49
    %s53 = sphi 0, %s52
    %s69 = sphi 0, %s53
    %s73 = sphi 0, %s73
    %s75 = sphi 0, %s73
    %s76 = sphi 0, %s75
    %s90 = sphi 0, %s76
    %s94 = sphi 0, %s94
    %s96 = sphi 0, %s94
    %s97 = sphi 0, %s96
    %s111 = sphi 0, %s97
    %s115 = sphi 0, %s115
    %s117 = sphi 0, %s115
    %s118 = sphi 0, %s117
    %s132 = sphi 0, %s118
    %s136 = sphi 0, %s136
    %s138 = sphi 0, %s136
    %s139 = sphi 0, %s138
    %s153 = sphi 0, %s139
    %s159 = sphi 0, %s161
    %s162 = sphi 0, %s159
    %s163 = sphi 0, %s162
    %s179 = sphi 0, %s163
    %s185 = sphi 0, %s187
    %s188 = sphi 0, %s185
    %s189 = sphi 0, %s188
    %s205 = sphi 0, %s189
  $region4: #{decoder_forward.13} parent=0 // loop_header_branch
    %16 = sbr.rel (%p14) target = $region8
  $region5: #{decoder_forward.13} parent=0 // loop_body
    %s18 = ssub.s32 %s13, 1
    %s19 = ssub.s32 %s13, 2
    %s20 = sadd.s32 %s13, 1
    %s21 = ssub.s32 %s13, %s20
    %p22 = scmp.eq.s32.totalorder %s21, 0
    %s24 = sadd.s32 %s23, 1
    %s25 = scalar_select %p22, %s23, %s24
    %p28 = pneg %p22
    %p29 = scmp.eq.s32.totalorder %s13, 1
    %p30 = por %p28, %p29
    %p31 = scmp.ne.s32.totalorder %s23, %s26
    %p32 = scmp.eq.s32.totalorder %s13, 0
    %p33 = por %p31, %p32
    %p34 = scmp.ne.s32.totalorder %s23, %s26
    %p35 = scmp.eq.s32.totalorder %s18, 1
    %p36 = por %p34, %p35
    %p37 = scmp.ne.s32.totalorder %s26, %s27
    %p38 = scmp.eq.s32.totalorder %s18, 0
    %p39 = por %p37, %p38
    %p40 = scmp.ne.s32.totalorder %s26, %s27
    %p41 = scmp.eq.s32.totalorder %s19, 1
    %p42 = por %p40, %p41
    %p44 = scmp.ne.s32.totalorder %s27, %s43
    %p45 = scmp.eq.s32.totalorder %s19, 0
    %p46 = por %p44, %p45
    %s47 = ssub.s32 %s13, %s20
    %p48 = scmp.eq.s32.totalorder %s47, 0
    %s50 = sadd.s32 %s49, 1
    %s51 = scalar_select %p48, %s49, %s50
    %p54 = pneg %p48
    %p55 = scmp.eq.s32.totalorder %s13, 1
    %p56 = por %p54, %p55
    %p57 = scmp.ne.s32.totalorder %s49, %s52
    %p58 = scmp.eq.s32.totalorder %s13, 0
    %p59 = por %p57, %p58
    %p60 = scmp.ne.s32.totalorder %s49, %s52
    %p61 = scmp.eq.s32.totalorder %s18, 1
    %p62 = por %p60, %p61
    %p63 = scmp.ne.s32.totalorder %s52, %s53
    %p64 = scmp.eq.s32.totalorder %s18, 0
    %p65 = por %p63, %p64
    %p66 = scmp.ne.s32.totalorder %s52, %s53
    %p67 = scmp.eq.s32.totalorder %s19, 1
    %p68 = por %p66, %p67
    %p70 = scmp.ne.s32.totalorder %s53, %s69
    %p71 = scmp.eq.s32.totalorder %s19, 0
    %p72 = por %p70, %p71
    %s74 = sadd.s32 %s73, 1
    %p77 = scmp.eq.s32.totalorder %s13, 1
    %p78 = scmp.ne.s32.totalorder %s73, %s75
    %p79 = scmp.eq.s32.totalorder %s13, 0
    %p80 = por %p78, %p79
    %p81 = scmp.ne.s32.totalorder %s73, %s75
    %p82 = scmp.eq.s32.totalorder %s18, 1
    %p83 = por %p81, %p82
    %p84 = scmp.ne.s32.totalorder %s75, %s76
    %p85 = scmp.eq.s32.totalorder %s18, 0
    %p86 = por %p84, %p85
    %p87 = scmp.ne.s32.totalorder %s75, %s76
    %p88 = scmp.eq.s32.totalorder %s19, 1
    %p89 = por %p87, %p88
    %p91 = scmp.ne.s32.totalorder %s76, %s90
    %p92 = scmp.eq.s32.totalorder %s19, 0
    %p93 = por %p91, %p92
    %s95 = sadd.s32 %s94, 1
    %p98 = scmp.eq.s32.totalorder %s13, 1
    %p99 = scmp.ne.s32.totalorder %s94, %s96
    %p100 = scmp.eq.s32.totalorder %s13, 0
    %p101 = por %p99, %p100
    %p102 = scmp.ne.s32.totalorder %s94, %s96
    %p103 = scmp.eq.s32.totalorder %s18, 1
    %p104 = por %p102, %p103
    %p105 = scmp.ne.s32.totalorder %s96, %s97
    %p106 = scmp.eq.s32.totalorder %s18, 0
    %p107 = por %p105, %p106
    %p108 = scmp.ne.s32.totalorder %s96, %s97
    %p109 = scmp.eq.s32.totalorder %s19, 1
    %p110 = por %p108, %p109
    %p112 = scmp.ne.s32.totalorder %s97, %s111
    %p113 = scmp.eq.s32.totalorder %s19, 0
    %p114 = por %p112, %p113
    %s116 = sadd.s32 %s115, 1
    %p119 = scmp.eq.s32.totalorder %s13, 1
    %p120 = scmp.ne.s32.totalorder %s115, %s117
    %p121 = scmp.eq.s32.totalorder %s13, 0
    %p122 = por %p120, %p121
    %p123 = scmp.ne.s32.totalorder %s115, %s117
    %p124 = scmp.eq.s32.totalorder %s18, 1
    %p125 = por %p123, %p124
    %p126 = scmp.ne.s32.totalorder %s117, %s118
    %p127 = scmp.eq.s32.totalorder %s18, 0
    %p128 = por %p126, %p127
    %p129 = scmp.ne.s32.totalorder %s117, %s118
    %p130 = scmp.eq.s32.totalorder %s19, 1
    %p131 = por %p129, %p130
    %p133 = scmp.ne.s32.totalorder %s118, %s132
    %p134 = scmp.eq.s32.totalorder %s19, 0
    %p135 = por %p133, %p134
    %s137 = sadd.s32 %s136, 1
    %p140 = scmp.eq.s32.totalorder %s13, 1
    %p141 = scmp.ne.s32.totalorder %s136, %s138
    %p142 = scmp.eq.s32.totalorder %s13, 0
    %p143 = por %p141, %p142
    %p144 = scmp.ne.s32.totalorder %s136, %s138
    %p145 = scmp.eq.s32.totalorder %s18, 1
    %p146 = por %p144, %p145
    %p147 = scmp.ne.s32.totalorder %s138, %s139
    %p148 = scmp.eq.s32.totalorder %s18, 0
    %p149 = por %p147, %p148
    %p150 = scmp.ne.s32.totalorder %s138, %s139
    %p151 = scmp.eq.s32.totalorder %s19, 1
    %p152 = por %p150, %p151
    %p154 = scmp.ne.s32.totalorder %s139, %s153
    %p155 = scmp.eq.s32.totalorder %s19, 0
    %p156 = por %p154, %p155
    %s157 = ssub.s32 %s13, %s20
    %p158 = scmp.eq.s32.totalorder %s157, 0
    %s160 = sadd.s32 %s159, 1
    %s161 = scalar_select %p158, %s159, %s160
    %p164 = pneg %p158
    %p165 = scmp.eq.s32.totalorder %s13, 1
    %p166 = por %p164, %p165
    %p167 = scmp.ne.s32.totalorder %s159, %s162
    %p168 = scmp.eq.s32.totalorder %s13, 0
    %p169 = por %p167, %p168
    %p170 = scmp.ne.s32.totalorder %s159, %s162
    %p171 = scmp.eq.s32.totalorder %s18, 1
    %p172 = por %p170, %p171
    %p173 = scmp.ne.s32.totalorder %s162, %s163
    %p174 = scmp.eq.s32.totalorder %s18, 0
    %p175 = por %p173, %p174
    %p176 = scmp.ne.s32.totalorder %s162, %s163
    %p177 = scmp.eq.s32.totalorder %s19, 1
    %p178 = por %p176, %p177
    %p180 = scmp.ne.s32.totalorder %s163, %s179
    %p181 = scmp.eq.s32.totalorder %s19, 0
    %p182 = por %p180, %p181
    %s183 = ssub.s32 %s13, %s20
    %p184 = scmp.eq.s32.totalorder %s183, 0
    %s186 = sadd.s32 %s185, 1
    %s187 = scalar_select %p184, %s185, %s186
    %p190 = pneg %p184
    %p191 = scmp.eq.s32.totalorder %s13, 1
    %p192 = por %p190, %p191
    %p193 = scmp.ne.s32.totalorder %s185, %s188
    %p194 = scmp.eq.s32.totalorder %s13, 0
    %p195 = por %p193, %p194
    %p196 = scmp.ne.s32.totalorder %s185, %s188
    %p197 = scmp.eq.s32.totalorder %s18, 1
    %p198 = por %p196, %p197
    %p199 = scmp.ne.s32.totalorder %s188, %s189
    %p200 = scmp.eq.s32.totalorder %s18, 0
    %p201 = por %p199, %p200
    %p202 = scmp.ne.s32.totalorder %s188, %s189
    %p203 = scmp.eq.s32.totalorder %s19, 1
    %p204 = por %p202, %p203
    %p206 = scmp.ne.s32.totalorder %s189, %s205
    %p207 = scmp.eq.s32.totalorder %s19, 0
    %p208 = por %p206, %p207
    %p209 = scmp.le.s32.totalorder 1, %s13
    %p210 = scmp.lt.s32.totalorder %s13, 3
    %p211 = pnand %p209, %p210
    %p212 = pneg %p211
    // Predicated region
    $region9: #{decoder_forward.13} parent=5 // pred_check
      _
    $region10: #{decoder_forward.13} parent=5 // pred_check_branch
      %214 = sbr.rel (%p211) target = $region12
    $region11: #{decoder_forward.13} parent=5 // pred_region
      %s215 = ssub.s32 %s13, 1
      // Predicated region
      $region13: #{decoder_forward.13} parent=11 // pred_check
        %p216 = pneg %p86
      $region14: #{decoder_forward.13} parent=11 // pred_check_branch
        %218 = sbr.rel (%p216) target = $region16
      $region15: #{decoder_forward.13} parent=11 // pred_region
        _
      $region16: #{decoder_forward.13} parent=11 // pred_fallthru
        _
      // Predicated region
      $region17: #{decoder_forward.13} parent=11 // pred_check
        %p219 = pneg %p107
      $region18: #{decoder_forward.13} parent=11 // pred_check_branch
        %221 = sbr.rel (%p219) target = $region20
      $region19: #{decoder_forward.13} parent=11 // pred_region
        _
      $region20: #{decoder_forward.13} parent=11 // pred_fallthru
        _
      // Predicated region
      $region21: #{decoder_forward.13} parent=11 // pred_check
        %p222 = pneg %p128
      $region22: #{decoder_forward.13} parent=11 // pred_check_branch
        %224 = sbr.rel (%p222) target = $region24
      $region23: #{decoder_forward.13} parent=11 // pred_region
        _
      $region24: #{decoder_forward.13} parent=11 // pred_fallthru
        _
      // Predicated region
      $region25: #{decoder_forward.13} parent=11 // pred_check
        %p225 = pneg %p149
      $region26: #{decoder_forward.13} parent=11 // pred_check_branch
        %227 = sbr.rel (%p225) target = $region28
      $region27: #{decoder_forward.13} parent=11 // pred_region
        _
      $region28: #{decoder_forward.13} parent=11 // pred_fallthru
        _
    $region12: #{decoder_forward.13} parent=5 // pred_fallthru
      _
    %p228 = scmp.lt.s32.totalorder %s13, 2
    // Predicated region
    $region29: #{decoder_forward.13} parent=5 // pred_check
      %p229 = pneg %p228
    $region30: #{decoder_forward.13} parent=5 // pred_check_branch
      %231 = sbr.rel (%p229) target = $region32
    $region31: #{decoder_forward.13} parent=5 // pred_region
      // Predicated region
      $region33: #{decoder_forward.13} parent=31 // pred_check
        %p232 = pneg %p33
      $region34: #{decoder_forward.13} parent=31 // pred_check_branch
        %234 = sbr.rel (%p232) target = $region36
      $region35: #{decoder_forward.13} parent=31 // pred_region
        %p235 = scmp.lt.s32.totalorder %s13, 1
        %s236 = scalar_select %p235, %s13, 1
        %s237 = smul.addr %s236, 8
        %s238 = scalar_lea.vmem %s0, %s237
      $region36: #{decoder_forward.13} parent=31 // pred_fallthru
        _
      // Predicated region
      $region37: #{decoder_forward.13} parent=31 // pred_check
        %p239 = pneg %p59
      $region38: #{decoder_forward.13} parent=31 // pred_check_branch
        %241 = sbr.rel (%p239) target = $region40
      $region39: #{decoder_forward.13} parent=31 // pred_region
        %p242 = scmp.lt.s32.totalorder %s13, 1
        %s243 = scalar_select %p242, %s13, 1
        %s244 = smul.addr %s243, 8
        %s245 = scalar_lea.vmem %s1, %s244
      $region40: #{decoder_forward.13} parent=31 // pred_fallthru
        _
      // Predicated region
      $region41: #{decoder_forward.13} parent=31 // pred_check
        %p246 = pneg %p169
      $region42: #{decoder_forward.13} parent=31 // pred_check_branch
        %248 = sbr.rel (%p246) target = $region44
      $region43: #{decoder_forward.13} parent=31 // pred_region
        %p249 = scmp.lt.s32.totalorder %s13, 1
        %s250 = scalar_select %p249, %s13, 1
        %s251 = scalar_lea.vmem %s6, %s250
      $region44: #{decoder_forward.13} parent=31 // pred_fallthru
        _
    $region32: #{decoder_forward.13} parent=5 // pred_fallthru
      _
    %p252 = scmp.le.s32.totalorder 1, %s13
    %p253 = scmp.lt.s32.totalorder %s13, 3
    %p254 = pnand %p252, %p253
    %p255 = pneg %p254
    // Predicated region
    $region45: #{decoder_forward.13} parent=5 // pred_check
      _
    $region46: #{decoder_forward.13} parent=5 // pred_check_branch
      %257 = sbr.rel (%p254) target = $region48
    $region47: #{decoder_forward.13} parent=5 // pred_region
      %s258 = ssub.s32 %s13, 1
      %p259 = scmp.lt.s32.totalorder %s18, 1
      %s260 = scalar_select %p259, %s18, 1
      %s261 = smul.addr %s260, 8
      %s262 = scalar_lea.vmem %s0, %s261
      %p263 = pneg %p39
      %p264 = pneg %p36
      %p265 = scmp.lt.s32.totalorder %s18, 1
      %s266 = scalar_select %p265, %s18, 1
      %s267 = smul.addr %s266, 8
      %s268 = scalar_lea.vmem %s1, %s267
      %p269 = pneg %p65
      %p270 = pneg %p62
      %p271 = pneg %p86
      %p272 = pneg %p83
      %p273 = pneg %p107
      %p274 = pneg %p104
      %p275 = pneg %p128
      %p276 = pneg %p125
      %p277 = pneg %p149
      %p278 = pneg %p146
      %p279 = scmp.lt.s32.totalorder %s18, 1
      %s280 = scalar_select %p279, %s18, 1
      %s281 = scalar_lea.vmem %s6, %s280
      %p282 = pneg %p175
      %p283 = pneg %p172
      %p284 = pneg %p201
      %p285 = pneg %p198
      %p286 = scmp.lt.s32.totalorder %s18, 1
      %s287 = scalar_select %p286, %s18, 1
      %s288 = smul.addr %s287, 4
      %s289 = scalar_lea.vmem %s7, %s288
      %p290 = scmp.lt.s32.totalorder %s18, 1
      %s291 = scalar_select %p290, %s18, 1
      %s292 = smul.addr %s291, 8
      %s293 = scalar_lea.vmem %s0, %s292
      %p294 = scmp.lt.s32.totalorder %s18, 1
      %s295 = scalar_select %p294, %s18, 1
      %s296 = smul.addr %s295, 8
      %s297 = scalar_lea.vmem %s1, %s296
      %p298 = scmp.lt.s32.totalorder %s18, 1
      %s299 = scalar_select %p298, %s18, 1
      %s300 = scalar_lea.vmem %s6, %s299
      %p301 = scmp.lt.s32.totalorder %s18, 1
      %s302 = scalar_select %p301, %s18, 1
      %s303 = smul.addr %s302, 4
      %s304 = scalar_lea.vmem %s7, %s303
      %v306 = vld [vmem:[%s293] sm:$0xff]
      %v307 = vpack.c.bf16 %v306, %v306
      %v308 = vld [vmem:[%s297] sm:$0xff]
      %v309 = vpack.c.bf16 %v308, %v308
      %v310 = vld [vmem:[%s2] sm:$0xf]
      %v311 = vld [vmem:[%s2 + $0x4] sm:$0xf]
      %v312 = vld [vmem:[%s2 + $0x8] sm:$0xf]
      %v313 = vld [vmem:[%s2 + $0xc] sm:$0xf]
      %v314 = vld [vmem:[%s3] sm:$0x1]
      %v316 = vlaneseq
      %v317 = vshrl.u32 %v316, 7
      %v318 = vsub.s32 0, %v317
      %v319 = vrot.slane %v314, %v318
      %v325 = vunpack.c.l.b16 %v310
      %v326 = vunpack.c.l.b16 %v311
      %v327 = vunpack.c.l.b16 %v312
      %v328 = vunpack.c.l.b16 %v313
      %v329 = vpack.c.b16 %v326, %v325
      %v330 = vpack.c.b16 %v328, %v327
      %vm333 = vcmask 261120
      %v335 = vsel %vm333, %v307, 0
      %337 = vmatprep.subr.bf16.mxu0 0
      %338 = vmatpush1.bf16.msra.mxu0 0
      %339 = vmatprep.subr.bf16.mxu0 0
      %340 = vmatpush1.bf16.msra.mxu0 0
      %341 = vmatprep.subr.bf16.mxu0 0
      %342 = vmatpush1.bf16.msra.mxu0 0
      %343 = vmatprep.subr.bf16.mxu0 0
      %344 = vmatpush1.bf16.msra.mxu0 0
      %345 = vmatprep.subr.bf16.mxu0 0
      %346 = vmatpush1.bf16.msra.mxu0 0
      %347 = vmatprep.subr.bf16.mxu0 0
      %348 = vmatpush1.bf16.msra.mxu0 0
      %349 = vmatprep.subr.bf16.mxu0 0
      %350 = vmatpush1.bf16.msra.mxu0 %v330
      %351 = vmatprep.subr.bf16.mxu0 0
      %352 = vmatpush1.bf16.msra.mxu0 %v329
      %353 = vmatprep.subr.bf16.mxu0 0
      %354 = vmatpush2.bf16.msra.mxu0 0
      %355 = vmatprep.subr.bf16.mxu0 0
      %356 = vmatpush2.bf16.msra.mxu0 0
      %357 = vmatprep.subr.bf16.mxu0 0
      %358 = vmatpush2.bf16.msra.mxu0 0
      %359 = vmatprep.subr.bf16.mxu0 0
      %360 = vmatpush2.bf16.msra.mxu0 0
      %361 = vmatprep.subr.bf16.mxu0 0
      %362 = vmatpush2.bf16.msra.mxu0 0
      %363 = vmatprep.subr.bf16.mxu0 0
      %364 = vmatpush2.bf16.msra.mxu0 0
      %365 = vmatprep.subr.bf16.mxu0 0
      %366 = vmatpush2.bf16.msra.mxu0 0
      %367 = vmatprep.subr.bf16.mxu0 0
      %368 = vmatpush2.bf16.msra.mxu0 0
      %369 = vmatprep.mubr.bf16.mxu0 0
      %370 = vmatmul.mubr.bf16.gmra.mxu0 %v335
      %v371 = vpop.f32.mrf.mxu0
      %v372 = vadd.f32 %v319, %v371
      %v373 = vpop.f32.mrf.mxu0
      %v374 = vpop.f32.mrf.mxu0
      %v375 = vpop.f32.mrf.mxu0
      %376 = vdwg.mxu0
      %v377 = vpack.c.bf16 %v372, %v372
      %vm378 = vcmask 257024
      %379 = vst.msk [vmem:[#allocation2] sm:$0xf] %vm378, %v377
      %v380 = vld [vmem:[%s4] sm:$0xf]
      %v381 = vld [vmem:[%s4 + $0x4] sm:$0xf]
      %v382 = vld [vmem:[%s4 + $0x8] sm:$0xf]
      %v383 = vld [vmem:[%s4 + $0xc] sm:$0xf]
      %v384 = vld [vmem:[%s5] sm:$0x1]
      %v386 = vlaneseq
      %v387 = vshrl.u32 %v386, 7
      %v388 = vsub.s32 0, %v387
      %v389 = vrot.slane %v384, %v388
      %v395 = vunpack.c.l.b16 %v380
      %v396 = vunpack.c.l.b16 %v381
      %v397 = vunpack.c.l.b16 %v382
      %v398 = vunpack.c.l.b16 %v383
      %v399 = vpack.c.b16 %v396, %v395
      %v400 = vpack.c.b16 %v398, %v397
      %v404 = vsel %vm333, %v309, 0
      %406 = vmatprep.subr.bf16.mxu0 0
      %407 = vmatpush1.bf16.msra.mxu0 0
      %408 = vmatprep.subr.bf16.mxu0 0
      %409 = vmatpush1.bf16.msra.mxu0 0
      %410 = vmatprep.subr.bf16.mxu0 0
      %411 = vmatpush1.bf16.msra.mxu0 0
      %412 = vmatprep.subr.bf16.mxu0 0
      %413 = vmatpush1.bf16.msra.mxu0 0
      %414 = vmatprep.subr.bf16.mxu0 0
      %415 = vmatpush1.bf16.msra.mxu0 0
      %416 = vmatprep.subr.bf16.mxu0 0
      %417 = vmatpush1.bf16.msra.mxu0 0
      %418 = vmatprep.subr.bf16.mxu0 0
      %419 = vmatpush1.bf16.msra.mxu0 %v400
      %420 = vmatprep.subr.bf16.mxu0 0
      %421 = vmatpush1.bf16.msra.mxu0 %v399
      %422 = vmatprep.subr.bf16.mxu0 0
      %423 = vmatpush2.bf16.msra.mxu0 0
      %424 = vmatprep.subr.bf16.mxu0 0
      %425 = vmatpush2.bf16.msra.mxu0 0
      %426 = vmatprep.subr.bf16.mxu0 0
      %427 = vmatpush2.bf16.msra.mxu0 0
      %428 = vmatprep.subr.bf16.mxu0 0
      %429 = vmatpush2.bf16.msra.mxu0 0
      %430 = vmatprep.subr.bf16.mxu0 0
      %431 = vmatpush2.bf16.msra.mxu0 0
      %432 = vmatprep.subr.bf16.mxu0 0
      %433 = vmatpush2.bf16.msra.mxu0 0
      %434 = vmatprep.subr.bf16.mxu0 0
      %435 = vmatpush2.bf16.msra.mxu0 0
      %436 = vmatprep.subr.bf16.mxu0 0
      %437 = vmatpush2.bf16.msra.mxu0 0
      %438 = vmatprep.mubr.bf16.mxu0 0
      %439 = vmatmul.mubr.bf16.gmra.mxu0 %v404
      %v440 = vpop.f32.mrf.mxu0
      %v441 = vadd.f32 %v389, %v440
      %v442 = vpop.f32.mrf.mxu0
      %v443 = vpop.f32.mrf.mxu0
      %v444 = vpop.f32.mrf.mxu0
      %445 = vdwg.mxu0
      %v446 = vpack.c.bf16 %v441, %v441
      %vm447 = vcmask 519168
      %448 = vst.msk [vmem:[#allocation3] sm:$0xf] %vm447, %v446
      %v449 = vld [vmem:[%s300] sm:$0x1]
      %v450 = vld [vmem:[#allocation2] sm:$0xf]
      %v451 = vld [vmem:[#allocation3] sm:$0xf]
      %vm452 = vcmask 64512
      %v454 = vsel %vm452, %v450, 0
      %v457 = vsel %vm452, %v451, 0
      %459 = vmatprep.subr.bf16.mxu0 0
      %460 = vmatpush1.bf16.xpose.msra.mxu0 0
      %461 = vmatprep.subr.bf16.mxu0 0
      %462 = vmatpush1.bf16.xpose.msra.mxu0 0
      %463 = vmatprep.subr.bf16.mxu0 0
      %464 = vmatpush1.bf16.xpose.msra.mxu0 0
      %465 = vmatprep.subr.bf16.mxu0 0
      %466 = vmatpush1.bf16.xpose.msra.mxu0 0
      %467 = vmatprep.subr.bf16.mxu0 0
      %468 = vmatpush1.bf16.xpose.msra.mxu0 0
      %469 = vmatprep.subr.bf16.mxu0 0
      %470 = vmatpush1.bf16.xpose.msra.mxu0 0
      %471 = vmatprep.subr.bf16.mxu0 0
      %472 = vmatpush1.bf16.xpose.msra.mxu0 0
      %473 = vmatprep.subr.bf16.mxu0 0
      %474 = vmatpush1.bf16.xpose.msra.mxu0 %v457
      %475 = vmatprep.subr.bf16.mxu0 0
      %476 = vmatpush2.bf16.xpose.msra.mxu0 0
      %477 = vmatprep.subr.bf16.mxu0 0
      %478 = vmatpush2.bf16.xpose.msra.mxu0 0
      %479 = vmatprep.subr.bf16.mxu0 0
      %480 = vmatpush2.bf16.xpose.msra.mxu0 0
      %481 = vmatprep.subr.bf16.mxu0 0
      %482 = vmatpush2.bf16.xpose.msra.mxu0 0
      %483 = vmatprep.subr.bf16.mxu0 0
      %484 = vmatpush2.bf16.xpose.msra.mxu0 0
      %485 = vmatprep.subr.bf16.mxu0 0
      %486 = vmatpush2.bf16.xpose.msra.mxu0 0
      %487 = vmatprep.subr.bf16.mxu0 0
      %488 = vmatpush2.bf16.xpose.msra.mxu0 0
      %489 = vmatprep.subr.bf16.mxu0 0
      %490 = vmatpush2.bf16.xpose.msra.mxu0 0
      %491 = vmatprep.mubr.bf16.mxu0 0
      %492 = vmatmul.mubr.bf16.gmra.mxu0 %v454
      %v493 = vpop.f32.mrf.mxu0
      %v494 = vadd.f32 0.0, %v493
      %v495 = vpop.f32.mrf.mxu0
      %v496 = vpop.f32.mrf.mxu0
      %v497 = vpop.f32.mrf.mxu0
      %498 = vdwg.mxu0
      %v499 = vmul.f32 %v494, 0.35355338
      %vm500 = vcmp.eq.f32.partialorder %v449, 0.0
      %v501 = vsel %vm500, 1, 0
      %v502 = vlaneseq
      %v503 = vshrl.u32 %v502, 7
      %v504 = vsub.s32 0, %v503
      %v505 = vrot.slane %v501, %v504
      %vm506 = vcmp.eq.s32.totalorder %v505, 1
      %v507 = vsel %vm506, -10000.0, %v499
      %v508 = vsel %vm452, %v507, -inf
      %509 = vmax.xlane.f32.xlu0 %v508
      %v510 = vpop.xlane.xlu0 %509
      %v511 = vsub.f32 %v507, %v510
      %v512 = vmul.f32 %v511, 1.442695
      %v513 = vpow.pop %v512
      %v514 = vsel %vm452, %v513, 0.0
      %515 = vadd.xlane.f32.xlu0 %v514
      %v516 = vpop.xlane.xlu0 %515
      %v517 = vrcp.pop %v516
      %v518 = vmul.f32 %v513, %v517
      %v519 = vpack.c.bf16 %v518, %v518
      %v521 = vunpack.c.l.b16 %v451
      %v522 = vpack.c.b16 %v521, %v521
      %523 = vrot.lane.b32.xlu0 %v522, 96
      %v524 = vpop.permute.xlu0 %523
      %v526 = vsel %vm452, %v519, 0
      %vm528 = vcmask 1043456
      %v530 = vsel %vm528, %v524, 0
      %532 = vmatprep.subr.bf16.mxu0 0
      %533 = vmatpush1.bf16.msra.mxu0 0
      %534 = vmatprep.subr.bf16.mxu0 0
      %535 = vmatpush1.bf16.msra.mxu0 0
      %536 = vmatprep.subr.bf16.mxu0 0
      %537 = vmatpush1.bf16.msra.mxu0 0
      %538 = vmatprep.subr.bf16.mxu0 0
      %539 = vmatpush1.bf16.msra.mxu0 0
      %540 = vmatprep.subr.bf16.mxu0 0
      %541 = vmatpush1.bf16.msra.mxu0 0
      %542 = vmatprep.subr.bf16.mxu0 0
      %543 = vmatpush1.bf16.msra.mxu0 0
      %544 = vmatprep.subr.bf16.mxu0 0
      %545 = vmatpush1.bf16.msra.mxu0 0
      %546 = vmatprep.subr.bf16.mxu0 0
      %547 = vmatpush1.bf16.msra.mxu0 %v530
      %548 = vmatprep.subr.bf16.mxu0 0
      %549 = vmatpush2.bf16.msra.mxu0 0
      %550 = vmatprep.subr.bf16.mxu0 0
      %551 = vmatpush2.bf16.msra.mxu0 0
      %552 = vmatprep.subr.bf16.mxu0 0
      %553 = vmatpush2.bf16.msra.mxu0 0
      %554 = vmatprep.subr.bf16.mxu0 0
      %555 = vmatpush2.bf16.msra.mxu0 0
      %556 = vmatprep.subr.bf16.mxu0 0
      %557 = vmatpush2.bf16.msra.mxu0 0
      %558 = vmatprep.subr.bf16.mxu0 0
      %559 = vmatpush2.bf16.msra.mxu0 0
      %560 = vmatprep.subr.bf16.mxu0 0
      %561 = vmatpush2.bf16.msra.mxu0 0
      %562 = vmatprep.subr.bf16.mxu0 0
      %563 = vmatpush2.bf16.msra.mxu0 0
      %564 = vmatprep.mubr.bf16.mxu0 0
      %565 = vmatmul.mubr.bf16.gmra.mxu0 %v526
      %v566 = vpop.f32.mrf.mxu0
      %v567 = vadd.f32 0.0, %v566
      %v568 = vpop.f32.mrf.mxu0
      %v569 = vpop.f32.mrf.mxu0
      %v570 = vpop.f32.mrf.mxu0
      %571 = vdwg.mxu0
      %572 = vst.msk [vmem:[#allocation4] sm:$0xff] %vm452, %v567
      %v573 = vld [vmem:[#allocation2] sm:$0xf]
      %v574 = vld [vmem:[#allocation3] sm:$0xf]
      %v576 = vunpack.c.l.b16 %v573
      %v577 = vpack.c.b16 %v576, %v576
      %578 = vrot.lane.b32.xlu0 %v577, 120
      %v579 = vpop.permute.xlu0 %578
      %v581 = vunpack.c.l.b16 %v574
      %v582 = vpack.c.b16 %v581, %v581
      %583 = vrot.lane.b32.xlu0 %v582, 120
      %v584 = vpop.permute.xlu0 %583
      %v586 = vsel %vm452, %v579, 0
      %v589 = vsel %vm452, %v584, 0
      %591 = vmatprep.subr.bf16.mxu0 0
      %592 = vmatpush1.bf16.xpose.msra.mxu0 0
      %593 = vmatprep.subr.bf16.mxu0 0
      %594 = vmatpush1.bf16.xpose.msra.mxu0 0
      %595 = vmatprep.subr.bf16.mxu0 0
      %596 = vmatpush1.bf16.xpose.msra.mxu0 0
      %597 = vmatprep.subr.bf16.mxu0 0
      %598 = vmatpush1.bf16.xpose.msra.mxu0 0
      %599 = vmatprep.subr.bf16.mxu0 0
      %600 = vmatpush1.bf16.xpose.msra.mxu0 0
      %601 = vmatprep.subr.bf16.mxu0 0
      %602 = vmatpush1.bf16.xpose.msra.mxu0 0
      %603 = vmatprep.subr.bf16.mxu0 0
      %604 = vmatpush1.bf16.xpose.msra.mxu0 0
      %605 = vmatprep.subr.bf16.mxu0 0
      %606 = vmatpush1.bf16.xpose.msra.mxu0 %v589
      %607 = vmatprep.subr.bf16.mxu0 0
      %608 = vmatpush2.bf16.xpose.msra.mxu0 0
      %609 = vmatprep.subr.bf16.mxu0 0
      %610 = vmatpush2.bf16.xpose.msra.mxu0 0
      %611 = vmatprep.subr.bf16.mxu0 0
      %612 = vmatpush2.bf16.xpose.msra.mxu0 0
      %613 = vmatprep.subr.bf16.mxu0 0
      %614 = vmatpush2.bf16.xpose.msra.mxu0 0
      %615 = vmatprep.subr.bf16.mxu0 0
      %616 = vmatpush2.bf16.xpose.msra.mxu0 0
      %617 = vmatprep.subr.bf16.mxu0 0
      %618 = vmatpush2.bf16.xpose.msra.mxu0 0
      %619 = vmatprep.subr.bf16.mxu0 0
      %620 = vmatpush2.bf16.xpose.msra.mxu0 0
      %621 = vmatprep.subr.bf16.mxu0 0
      %622 = vmatpush2.bf16.xpose.msra.mxu0 0
      %623 = vmatprep.mubr.bf16.mxu0 0
      %624 = vmatmul.mubr.bf16.gmra.mxu0 %v586
      %v625 = vpop.f32.mrf.mxu0
      %v626 = vadd.f32 0.0, %v625
      %v627 = vpop.f32.mrf.mxu0
      %v628 = vpop.f32.mrf.mxu0
      %v629 = vpop.f32.mrf.mxu0
      %630 = vdwg.mxu0
      %v631 = vmul.f32 %v626, 0.35355338
      %v632 = vsel %vm506, -10000.0, %v631
      %v633 = vsel %vm452, %v632, -inf
      %634 = vmax.xlane.f32.xlu0 %v633
      %v635 = vpop.xlane.xlu0 %634
      %v636 = vsub.f32 %v632, %v635
      %v637 = vmul.f32 %v636, 1.442695
      %v638 = vpow.pop %v637
      %v639 = vsel %vm452, %v638, 0.0
      %640 = vadd.xlane.f32.xlu0 %v639
      %v641 = vpop.xlane.xlu0 %640
      %v642 = vrcp.pop %v641
      %v643 = vmul.f32 %v638, %v642
      %v644 = vpack.c.bf16 %v643, %v643
      %645 = vrot.lane.b32.xlu0 %v582, 88
      %v646 = vpop.permute.xlu0 %645
      %v648 = vsel %vm452, %v644, 0
      %v651 = vsel %vm528, %v646, 0
      %653 = vmatprep.subr.bf16.mxu0 0
      %654 = vmatpush1.bf16.msra.mxu0 0
      %655 = vmatprep.subr.bf16.mxu0 0
      %656 = vmatpush1.bf16.msra.mxu0 0
      %657 = vmatprep.subr.bf16.mxu0 0
      %658 = vmatpush1.bf16.msra.mxu0 0
      %659 = vmatprep.subr.bf16.mxu0 0
      %660 = vmatpush1.bf16.msra.mxu0 0
      %661 = vmatprep.subr.bf16.mxu0 0
      %662 = vmatpush1.bf16.msra.mxu0 0
      %663 = vmatprep.subr.bf16.mxu0 0
      %664 = vmatpush1.bf16.msra.mxu0 0
      %665 = vmatprep.subr.bf16.mxu0 0
      %666 = vmatpush1.bf16.msra.mxu0 0
      %667 = vmatprep.subr.bf16.mxu0 0
      %668 = vmatpush1.bf16.msra.mxu0 %v651
      %669 = vmatprep.subr.bf16.mxu0 0
      %670 = vmatpush2.bf16.msra.mxu0 0
      %671 = vmatprep.subr.bf16.mxu0 0
      %672 = vmatpush2.bf16.msra.mxu0 0
      %673 = vmatprep.subr.bf16.mxu0 0
      %674 = vmatpush2.bf16.msra.mxu0 0
      %675 = vmatprep.subr.bf16.mxu0 0
      %676 = vmatpush2.bf16.msra.mxu0 0
      %677 = vmatprep.subr.bf16.mxu0 0
      %678 = vmatpush2.bf16.msra.mxu0 0
      %679 = vmatprep.subr.bf16.mxu0 0
      %680 = vmatpush2.bf16.msra.mxu0 0
      %681 = vmatprep.subr.bf16.mxu0 0
      %682 = vmatpush2.bf16.msra.mxu0 0
      %683 = vmatprep.subr.bf16.mxu0 0
      %684 = vmatpush2.bf16.msra.mxu0 0
      %685 = vmatprep.mubr.bf16.mxu0 0
      %686 = vmatmul.mubr.bf16.gmra.mxu0 %v648
      %v687 = vpop.f32.mrf.mxu0
      %v688 = vadd.f32 0.0, %v687
      %v689 = vpop.f32.mrf.mxu0
      %v690 = vpop.f32.mrf.mxu0
      %v691 = vpop.f32.mrf.mxu0
      %692 = vdwg.mxu0
      %694 = vrot.lane.b32.xlu0 %v688, 8
      %v695 = vpop.permute.xlu0 %694
      %vm697 = vcmask 130112
      %698 = vst.msk [vmem:[#allocation4] sm:$0xff] %vm697, %v695
      %v699 = vld [vmem:[#allocation2] sm:$0xf]
      %v700 = vld [vmem:[#allocation3] sm:$0xf]
      %v702 = vunpack.c.l.b16 %v699
      %v703 = vpack.c.b16 %v702, %v702
      %704 = vrot.lane.b32.xlu0 %v703, 112
      %v705 = vpop.permute.xlu0 %704
      %v707 = vunpack.c.l.b16 %v700
      %v708 = vpack.c.b16 %v707, %v707
      %709 = vrot.lane.b32.xlu0 %v708, 112
      %v710 = vpop.permute.xlu0 %709
      %v712 = vsel %vm452, %v705, 0
      %v715 = vsel %vm452, %v710, 0
      %717 = vmatprep.subr.bf16.mxu0 0
      %718 = vmatpush1.bf16.xpose.msra.mxu0 0
      %719 = vmatprep.subr.bf16.mxu0 0
      %720 = vmatpush1.bf16.xpose.msra.mxu0 0
      %721 = vmatprep.subr.bf16.mxu0 0
      %722 = vmatpush1.bf16.xpose.msra.mxu0 0
      %723 = vmatprep.subr.bf16.mxu0 0
      %724 = vmatpush1.bf16.xpose.msra.mxu0 0
      %725 = vmatprep.subr.bf16.mxu0 0
      %726 = vmatpush1.bf16.xpose.msra.mxu0 0
      %727 = vmatprep.subr.bf16.mxu0 0
      %728 = vmatpush1.bf16.xpose.msra.mxu0 0
      %729 = vmatprep.subr.bf16.mxu0 0
      %730 = vmatpush1.bf16.xpose.msra.mxu0 0
      %731 = vmatprep.subr.bf16.mxu0 0
      %732 = vmatpush1.bf16.xpose.msra.mxu0 %v715
      %733 = vmatprep.subr.bf16.mxu0 0
      %734 = vmatpush2.bf16.xpose.msra.mxu0 0
      %735 = vmatprep.subr.bf16.mxu0 0
      %736 = vmatpush2.bf16.xpose.msra.mxu0 0
      %737 = vmatprep.subr.bf16.mxu0 0
      %738 = vmatpush2.bf16.xpose.msra.mxu0 0
      %739 = vmatprep.subr.bf16.mxu0 0
      %740 = vmatpush2.bf16.xpose.msra.mxu0 0
      %741 = vmatprep.subr.bf16.mxu0 0
      %742 = vmatpush2.bf16.xpose.msra.mxu0 0
      %743 = vmatprep.subr.bf16.mxu0 0
      %744 = vmatpush2.bf16.xpose.msra.mxu0 0
      %745 = vmatprep.subr.bf16.mxu0 0
      %746 = vmatpush2.bf16.xpose.msra.mxu0 0
      %747 = vmatprep.subr.bf16.mxu0 0
      %748 = vmatpush2.bf16.xpose.msra.mxu0 0
      %749 = vmatprep.mubr.bf16.mxu0 0
      %750 = vmatmul.mubr.bf16.gmra.mxu0 %v712
      %v751 = vpop.f32.mrf.mxu0
      %v752 = vadd.f32 0.0, %v751
      %v753 = vpop.f32.mrf.mxu0
      %v754 = vpop.f32.mrf.mxu0
      %v755 = vpop.f32.mrf.mxu0
      %756 = vdwg.mxu0
      %v757 = vmul.f32 %v752, 0.35355338
      %v758 = vsel %vm506, -10000.0, %v757
      %v759 = vsel %vm452, %v758, -inf
      %760 = vmax.xlane.f32.xlu0 %v759
      %v761 = vpop.xlane.xlu0 %760
      %v762 = vsub.f32 %v758, %v761
      %v763 = vmul.f32 %v762, 1.442695
      %v764 = vpow.pop %v763
      %v765 = vsel %vm452, %v764, 0.0
      %766 = vadd.xlane.f32.xlu0 %v765
      %v767 = vpop.xlane.xlu0 %766
      %v768 = vrcp.pop %v767
      %v769 = vmul.f32 %v764, %v768
      %v770 = vpack.c.bf16 %v769, %v769
      %771 = vrot.lane.b32.xlu0 %v708, 80
      %v772 = vpop.permute.xlu0 %771
      %v774 = vsel %vm452, %v770, 0
      %v777 = vsel %vm528, %v772, 0
      %779 = vmatprep.subr.bf16.mxu0 0
      %780 = vmatpush1.bf16.msra.mxu0 0
      %781 = vmatprep.subr.bf16.mxu0 0
      %782 = vmatpush1.bf16.msra.mxu0 0
      %783 = vmatprep.subr.bf16.mxu0 0
      %784 = vmatpush1.bf16.msra.mxu0 0
      %785 = vmatprep.subr.bf16.mxu0 0
      %786 = vmatpush1.bf16.msra.mxu0 0
      %787 = vmatprep.subr.bf16.mxu0 0
      %788 = vmatpush1.bf16.msra.mxu0 0
      %789 = vmatprep.subr.bf16.mxu0 0
      %790 = vmatpush1.bf16.msra.mxu0 0
      %791 = vmatprep.subr.bf16.mxu0 0
      %792 = vmatpush1.bf16.msra.mxu0 0
      %793 = vmatprep.subr.bf16.mxu0 0
      %794 = vmatpush1.bf16.msra.mxu0 %v777
      %795 = vmatprep.subr.bf16.mxu0 0
      %796 = vmatpush2.bf16.msra.mxu0 0
      %797 = vmatprep.subr.bf16.mxu0 0
      %798 = vmatpush2.bf16.msra.mxu0 0
      %799 = vmatprep.subr.bf16.mxu0 0
      %800 = vmatpush2.bf16.msra.mxu0 0
      %801 = vmatprep.subr.bf16.mxu0 0
      %802 = vmatpush2.bf16.msra.mxu0 0
      %803 = vmatprep.subr.bf16.mxu0 0
      %804 = vmatpush2.bf16.msra.mxu0 0
      %805 = vmatprep.subr.bf16.mxu0 0
      %806 = vmatpush2.bf16.msra.mxu0 0
      %807 = vmatprep.subr.bf16.mxu0 0
      %808 = vmatpush2.bf16.msra.mxu0 0
      %809 = vmatprep.subr.bf16.mxu0 0
      %810 = vmatpush2.bf16.msra.mxu0 0
      %811 = vmatprep.mubr.bf16.mxu0 0
      %812 = vmatmul.mubr.bf16.gmra.mxu0 %v774
      %v813 = vpop.f32.mrf.mxu0
      %v814 = vadd.f32 0.0, %v813
      %v815 = vpop.f32.mrf.mxu0
      %v816 = vpop.f32.mrf.mxu0
      %v817 = vpop.f32.mrf.mxu0
      %818 = vdwg.mxu0
      %820 = vrot.lane.b32.xlu0 %v814, 16
      %v821 = vpop.permute.xlu0 %820
      %vm823 = vcmask 195712
      %824 = vst.msk [vmem:[#allocation4] sm:$0xff] %vm823, %v821
      %v825 = vld [vmem:[#allocation2] sm:$0xf]
      %v826 = vld [vmem:[#allocation3] sm:$0xf]
      %v828 = vunpack.c.l.b16 %v825
      %v829 = vpack.c.b16 %v828, %v828
      %830 = vrot.lane.b32.xlu0 %v829, 104
      %v831 = vpop.permute.xlu0 %830
      %v833 = vunpack.c.l.b16 %v826
      %v834 = vpack.c.b16 %v833, %v833
      %835 = vrot.lane.b32.xlu0 %v834, 104
      %v836 = vpop.permute.xlu0 %835
      %v838 = vsel %vm452, %v831, 0
      %v841 = vsel %vm452, %v836, 0
      %843 = vmatprep.subr.bf16.mxu0 0
      %844 = vmatpush1.bf16.xpose.msra.mxu0 0
      %845 = vmatprep.subr.bf16.mxu0 0
      %846 = vmatpush1.bf16.xpose.msra.mxu0 0
      %847 = vmatprep.subr.bf16.mxu0 0
      %848 = vmatpush1.bf16.xpose.msra.mxu0 0
      %849 = vmatprep.subr.bf16.mxu0 0
      %850 = vmatpush1.bf16.xpose.msra.mxu0 0
      %851 = vmatprep.subr.bf16.mxu0 0
      %852 = vmatpush1.bf16.xpose.msra.mxu0 0
      %853 = vmatprep.subr.bf16.mxu0 0
      %854 = vmatpush1.bf16.xpose.msra.mxu0 0
      %855 = vmatprep.subr.bf16.mxu0 0
      %856 = vmatpush1.bf16.xpose.msra.mxu0 0
      %857 = vmatprep.subr.bf16.mxu0 0
      %858 = vmatpush1.bf16.xpose.msra.mxu0 %v841
      %859 = vmatprep.subr.bf16.mxu0 0
      %860 = vmatpush2.bf16.xpose.msra.mxu0 0
      %861 = vmatprep.subr.bf16.mxu0 0
      %862 = vmatpush2.bf16.xpose.msra.mxu0 0
      %863 = vmatprep.subr.bf16.mxu0 0
      %864 = vmatpush2.bf16.xpose.msra.mxu0 0
      %865 = vmatprep.subr.bf16.mxu0 0
      %866 = vmatpush2.bf16.xpose.msra.mxu0 0
      %867 = vmatprep.subr.bf16.mxu0 0
      %868 = vmatpush2.bf16.xpose.msra.mxu0 0
      %869 = vmatprep.subr.bf16.mxu0 0
      %870 = vmatpush2.bf16.xpose.msra.mxu0 0
      %871 = vmatprep.subr.bf16.mxu0 0
      %872 = vmatpush2.bf16.xpose.msra.mxu0 0
      %873 = vmatprep.subr.bf16.mxu0 0
      %874 = vmatpush2.bf16.xpose.msra.mxu0 0
      %875 = vmatprep.mubr.bf16.mxu0 0
      %876 = vmatmul.mubr.bf16.gmra.mxu0 %v838
      %v877 = vpop.f32.mrf.mxu0
      %v878 = vadd.f32 0.0, %v877
      %v879 = vpop.f32.mrf.mxu0
      %v880 = vpop.f32.mrf.mxu0
      %v881 = vpop.f32.mrf.mxu0
      %882 = vdwg.mxu0
      %v883 = vmul.f32 %v878, 0.35355338
      %v884 = vsel %vm506, -10000.0, %v883
      %v885 = vsel %vm452, %v884, -inf
      %886 = vmax.xlane.f32.xlu0 %v885
      %v887 = vpop.xlane.xlu0 %886
      %v888 = vsub.f32 %v884, %v887
      %v889 = vmul.f32 %v888, 1.442695
      %v890 = vpow.pop %v889
      %v891 = vsel %vm452, %v890, 0.0
      %892 = vadd.xlane.f32.xlu0 %v891
      %v893 = vpop.xlane.xlu0 %892
      %v894 = vrcp.pop %v893
      %v895 = vmul.f32 %v890, %v894
      %v896 = vpack.c.bf16 %v895, %v895
      %897 = vrot.lane.b32.xlu0 %v834, 72
      %v898 = vpop.permute.xlu0 %897
      %v900 = vsel %vm452, %v896, 0
      %v903 = vsel %vm528, %v898, 0
      %905 = vmatprep.subr.bf16.mxu0 0
      %906 = vmatpush1.bf16.msra.mxu0 0
      %907 = vmatprep.subr.bf16.mxu0 0
      %908 = vmatpush1.bf16.msra.mxu0 0
      %909 = vmatprep.subr.bf16.mxu0 0
      %910 = vmatpush1.bf16.msra.mxu0 0
      %911 = vmatprep.subr.bf16.mxu0 0
      %912 = vmatpush1.bf16.msra.mxu0 0
      %913 = vmatprep.subr.bf16.mxu0 0
      %914 = vmatpush1.bf16.msra.mxu0 0
      %915 = vmatprep.subr.bf16.mxu0 0
      %916 = vmatpush1.bf16.msra.mxu0 0
      %917 = vmatprep.subr.bf16.mxu0 0
      %918 = vmatpush1.bf16.msra.mxu0 0
      %919 = vmatprep.subr.bf16.mxu0 0
      %920 = vmatpush1.bf16.msra.mxu0 %v903
      %921 = vmatprep.subr.bf16.mxu0 0
      %922 = vmatpush2.bf16.msra.mxu0 0
      %923 = vmatprep.subr.bf16.mxu0 0
      %924 = vmatpush2.bf16.msra.mxu0 0
      %925 = vmatprep.subr.bf16.mxu0 0
      %926 = vmatpush2.bf16.msra.mxu0 0
      %927 = vmatprep.subr.bf16.mxu0 0
      %928 = vmatpush2.bf16.msra.mxu0 0
      %929 = vmatprep.subr.bf16.mxu0 0
      %930 = vmatpush2.bf16.msra.mxu0 0
      %931 = vmatprep.subr.bf16.mxu0 0
      %932 = vmatpush2.bf16.msra.mxu0 0
      %933 = vmatprep.subr.bf16.mxu0 0
      %934 = vmatpush2.bf16.msra.mxu0 0
      %935 = vmatprep.subr.bf16.mxu0 0
      %936 = vmatpush2.bf16.msra.mxu0 0
      %937 = vmatprep.mubr.bf16.mxu0 0
      %938 = vmatmul.mubr.bf16.gmra.mxu0 %v900
      %v939 = vpop.f32.mrf.mxu0
      %v940 = vadd.f32 0.0, %v939
      %v941 = vpop.f32.mrf.mxu0
      %v942 = vpop.f32.mrf.mxu0
      %v943 = vpop.f32.mrf.mxu0
      %944 = vdwg.mxu0
      %946 = vrot.lane.b32.xlu0 %v940, 24
      %v947 = vpop.permute.xlu0 %946
      %vm949 = vcmask 261312
      %950 = vst.msk [vmem:[#allocation4] sm:$0xff] %vm949, %v947
      %v951 = vld [vmem:[#allocation4] sm:$0xff]
      %v952 = vpack.c.bf16 %v951, %v951
      %953 = vst.msk [vmem:[%s304] sm:$0xf] %vm378, %v952
      %p954 = scmp.lt.s32.totalorder %s18, 1
      %s955 = scalar_select %p954, %s18, 1
      %s956 = smul.addr %s955, 4
      %s957 = scalar_lea.vmem %s7, %s956
      // Predicated region
      $region49: #{decoder_forward.13} parent=47 // pred_check
        %p958 = pneg %p198
      $region50: #{decoder_forward.13} parent=47 // pred_check_branch
        %960 = sbr.rel (%p958) target = $region52
      $region51: #{decoder_forward.13} parent=47 // pred_region
        _
      $region52: #{decoder_forward.13} parent=47 // pred_fallthru
        _
    $region48: #{decoder_forward.13} parent=5 // pred_fallthru
      _
    %p961 = scmp.le.s32.totalorder 2, %s13
    // Predicated region
    $region53: #{decoder_forward.13} parent=5 // pred_check
      %p962 = pneg %p961
    $region54: #{decoder_forward.13} parent=5 // pred_check_branch
      %964 = sbr.rel (%p962) target = $region56
    $region55: #{decoder_forward.13} parent=5 // pred_region
      %s965 = ssub.s32 %s13, 2
      // Predicated region
      $region57: #{decoder_forward.13} parent=55 // pred_check
        %p966 = pneg %p204
      $region58: #{decoder_forward.13} parent=55 // pred_check_branch
        %968 = sbr.rel (%p966) target = $region60
      $region59: #{decoder_forward.13} parent=55 // pred_region
        %p969 = scmp.lt.s32.totalorder %s19, 1
        %s970 = scalar_select %p969, %s19, 1
        %s971 = smul.addr %s970, 4
        %s972 = scalar_lea.vmem %s7, %s971
      $region60: #{decoder_forward.13} parent=55 // pred_fallthru
        _
    $region56: #{decoder_forward.13} parent=5 // pred_fallthru
      _
  $region6: #{decoder_forward.13} parent=0 // loop_footer
    %s17 = sadd.s32 1, %s13
  $region7: #{decoder_forward.13} parent=0 // loop_footer_branch
    %12 = sbr.rel target = $region3
  $region8: #{decoder_forward.13} parent=0 // loop_exit
    _

// kernel: decoder_forward.11
$region0: #{decoder_forward.11}
  #allocation0 [shape = 'u32[]', space=smem, size = 0x4, offset = 0x4, fixed_abs, tag = 'smem constant byte address 0x4 - core index']
  #allocation1 [shape = 'u32[144,128]{1,0:T(1,128)}', space=vmem, size = 0x12000, scoped, tag = 'internal scratch']
  #allocation2 [shape = 'bf16[8,96]{1,0:T(8,128)(2,1)}', space=vmem, size = 0x800, scoped, tag = 'scratch operand']
  #allocation3 [shape = 'f32[8,32]{1,0:T(8,128)}', space=vmem, size = 0x1000, scoped, tag = 'scratch operand']
  %s0 = inlined_call_operand.vmem [shape: f32[2,8,32], index: 0, kind: input, shape index: {}]
  %s1 = inlined_call_operand.vmem [shape: bf16[32,96], index: 1, kind: input, shape index: {}]
  %s2 = inlined_call_operand.vmem [shape: f32[1,96], index: 2, kind: input, shape index: {}]
  %s3 = inlined_call_operand.vmem [shape: f32[2,1,8,8], index: 3, kind: input, shape index: {}]
  %s4 = inlined_call_operand.vmem [shape: bf16[2,8,32], index: 4, kind: output, shape index: {}]
  %s5 = sld [smem:[#allocation0]]
  $region49: #{decoder_forward.11} parent=0
    _
  %s7 = ssub.s32 1, %s5
  %s8 = scalar_select 0, %s7, %s5
  loop: start=0, step=1, limit=4
  $region2: #{decoder_forward.11} parent=0 // loop_pre_header
    _
  $region3: #{decoder_forward.11} parent=0 // loop_header
    %s10 = sphi 0, %s14
    %p11 = scmp.ge.s32.totalorder %s10, 4
    %s20 = sphi 0, %s22
    %s23 = sphi 0, %s20
    %s24 = sphi 0, %s23
    %s40 = sphi 0, %s24
    %s44 = sphi 0, %s44
    %s46 = sphi 0, %s44
    %s47 = sphi 0, %s46
    %s61 = sphi 0, %s47
    %s65 = sphi 0, %s65
    %s67 = sphi 0, %s65
    %s68 = sphi 0, %s67
    %s82 = sphi 0, %s68
    %s88 = sphi 0, %s90
    %s91 = sphi 0, %s88
    %s92 = sphi 0, %s91
    %s108 = sphi 0, %s92
    %s114 = sphi 0, %s116
    %s117 = sphi 0, %s114
    %s118 = sphi 0, %s117
    %s134 = sphi 0, %s118
  $region4: #{decoder_forward.11} parent=0 // loop_header_branch
    %13 = sbr.rel (%p11) target = $region8
  $region5: #{decoder_forward.11} parent=0 // loop_body
    %s15 = ssub.s32 %s10, 1
    %s16 = ssub.s32 %s10, 2
    %s17 = sadd.s32 %s10, 1
    %s18 = ssub.s32 %s10, %s17
    %p19 = scmp.eq.s32.totalorder %s18, 0
    %s21 = sadd.s32 %s20, 1
    %s22 = scalar_select %p19, %s20, %s21
    %p25 = pneg %p19
    %p26 = scmp.eq.s32.totalorder %s10, 1
    %p27 = por %p25, %p26
    %p28 = scmp.ne.s32.totalorder %s20, %s23
    %p29 = scmp.eq.s32.totalorder %s10, 0
    %p30 = por %p28, %p29
    %p31 = scmp.ne.s32.totalorder %s20, %s23
    %p32 = scmp.eq.s32.totalorder %s15, 1
    %p33 = por %p31, %p32
    %p34 = scmp.ne.s32.totalorder %s23, %s24
    %p35 = scmp.eq.s32.totalorder %s15, 0
    %p36 = por %p34, %p35
    %p37 = scmp.ne.s32.totalorder %s23, %s24
    %p38 = scmp.eq.s32.totalorder %s16, 1
    %p39 = por %p37, %p38
    %p41 = scmp.ne.s32.totalorder %s24, %s40
    %p42 = scmp.eq.s32.totalorder %s16, 0
    %p43 = por %p41, %p42
    %s45 = sadd.s32 %s44, 1
    %p48 = scmp.eq.s32.totalorder %s10, 1
    %p49 = scmp.ne.s32.totalorder %s44, %s46
    %p50 = scmp.eq.s32.totalorder %s10, 0
    %p51 = por %p49, %p50
    %p52 = scmp.ne.s32.totalorder %s44, %s46
    %p53 = scmp.eq.s32.totalorder %s15, 1
    %p54 = por %p52, %p53
    %p55 = scmp.ne.s32.totalorder %s46, %s47
    %p56 = scmp.eq.s32.totalorder %s15, 0
    %p57 = por %p55, %p56
    %p58 = scmp.ne.s32.totalorder %s46, %s47
    %p59 = scmp.eq.s32.totalorder %s16, 1
    %p60 = por %p58, %p59
    %p62 = scmp.ne.s32.totalorder %s47, %s61
    %p63 = scmp.eq.s32.totalorder %s16, 0
    %p64 = por %p62, %p63
    %s66 = sadd.s32 %s65, 1
    %p69 = scmp.eq.s32.totalorder %s10, 1
    %p70 = scmp.ne.s32.totalorder %s65, %s67
    %p71 = scmp.eq.s32.totalorder %s10, 0
    %p72 = por %p70, %p71
    %p73 = scmp.ne.s32.totalorder %s65, %s67
    %p74 = scmp.eq.s32.totalorder %s15, 1
    %p75 = por %p73, %p74
    %p76 = scmp.ne.s32.totalorder %s67, %s68
    %p77 = scmp.eq.s32.totalorder %s15, 0
    %p78 = por %p76, %p77
    %p79 = scmp.ne.s32.totalorder %s67, %s68
    %p80 = scmp.eq.s32.totalorder %s16, 1
    %p81 = por %p79, %p80
    %p83 = scmp.ne.s32.totalorder %s68, %s82
    %p84 = scmp.eq.s32.totalorder %s16, 0
    %p85 = por %p83, %p84
    %s86 = ssub.s32 %s10, %s17
    %p87 = scmp.eq.s32.totalorder %s86, 0
    %s89 = sadd.s32 %s88, 1
    %s90 = scalar_select %p87, %s88, %s89
    %p93 = pneg %p87
    %p94 = scmp.eq.s32.totalorder %s10, 1
    %p95 = por %p93, %p94
    %p96 = scmp.ne.s32.totalorder %s88, %s91
    %p97 = scmp.eq.s32.totalorder %s10, 0
    %p98 = por %p96, %p97
    %p99 = scmp.ne.s32.totalorder %s88, %s91
    %p100 = scmp.eq.s32.totalorder %s15, 1
    %p101 = por %p99, %p100
    %p102 = scmp.ne.s32.totalorder %s91, %s92
    %p103 = scmp.eq.s32.totalorder %s15, 0
    %p104 = por %p102, %p103
    %p105 = scmp.ne.s32.totalorder %s91, %s92
    %p106 = scmp.eq.s32.totalorder %s16, 1
    %p107 = por %p105, %p106
    %p109 = scmp.ne.s32.totalorder %s92, %s108
    %p110 = scmp.eq.s32.totalorder %s16, 0
    %p111 = por %p109, %p110
    %s112 = ssub.s32 %s10, %s17
    %p113 = scmp.eq.s32.totalorder %s112, 0
    %s115 = sadd.s32 %s114, 1
    %s116 = scalar_select %p113, %s114, %s115
    %p119 = pneg %p113
    %p120 = scmp.eq.s32.totalorder %s10, 1
    %p121 = por %p119, %p120
    %p122 = scmp.ne.s32.totalorder %s114, %s117
    %p123 = scmp.eq.s32.totalorder %s10, 0
    %p124 = por %p122, %p123
    %p125 = scmp.ne.s32.totalorder %s114, %s117
    %p126 = scmp.eq.s32.totalorder %s15, 1
    %p127 = por %p125, %p126
    %p128 = scmp.ne.s32.totalorder %s117, %s118
    %p129 = scmp.eq.s32.totalorder %s15, 0
    %p130 = por %p128, %p129
    %p131 = scmp.ne.s32.totalorder %s117, %s118
    %p132 = scmp.eq.s32.totalorder %s16, 1
    %p133 = por %p131, %p132
    %p135 = scmp.ne.s32.totalorder %s118, %s134
    %p136 = scmp.eq.s32.totalorder %s16, 0
    %p137 = por %p135, %p136
    %p138 = scmp.le.s32.totalorder 1, %s10
    %p139 = scmp.lt.s32.totalorder %s10, 3
    %p140 = pnand %p138, %p139
    %p141 = pneg %p140
    // Predicated region
    $region9: #{decoder_forward.11} parent=5 // pred_check
      _
    $region10: #{decoder_forward.11} parent=5 // pred_check_branch
      %143 = sbr.rel (%p140) target = $region12
    $region11: #{decoder_forward.11} parent=5 // pred_region
      %s144 = ssub.s32 %s10, 1
      // Predicated region
      $region13: #{decoder_forward.11} parent=11 // pred_check
        %p145 = pneg %p57
      $region14: #{decoder_forward.11} parent=11 // pred_check_branch
        %147 = sbr.rel (%p145) target = $region16
      $region15: #{decoder_forward.11} parent=11 // pred_region
        _
      $region16: #{decoder_forward.11} parent=11 // pred_fallthru
        _
      // Predicated region
      $region17: #{decoder_forward.11} parent=11 // pred_check
        %p148 = pneg %p78
      $region18: #{decoder_forward.11} parent=11 // pred_check_branch
        %150 = sbr.rel (%p148) target = $region20
      $region19: #{decoder_forward.11} parent=11 // pred_region
        _
      $region20: #{decoder_forward.11} parent=11 // pred_fallthru
        _
    $region12: #{decoder_forward.11} parent=5 // pred_fallthru
      _
    %p151 = scmp.lt.s32.totalorder %s10, 2
    // Predicated region
    $region21: #{decoder_forward.11} parent=5 // pred_check
      %p152 = pneg %p151
    $region22: #{decoder_forward.11} parent=5 // pred_check_branch
      %154 = sbr.rel (%p152) target = $region24
    $region23: #{decoder_forward.11} parent=5 // pred_region
      // Predicated region
      $region25: #{decoder_forward.11} parent=23 // pred_check
        %p155 = pneg %p30
      $region26: #{decoder_forward.11} parent=23 // pred_check_branch
        %157 = sbr.rel (%p155) target = $region28
      $region27: #{decoder_forward.11} parent=23 // pred_region
        %p158 = scmp.lt.s32.totalorder %s10, 1
        %s159 = scalar_select %p158, %s10, 1
        %s160 = smul.addr %s159, 8
        %s161 = scalar_lea.vmem %s0, %s160
      $region28: #{decoder_forward.11} parent=23 // pred_fallthru
        _
      // Predicated region
      $region29: #{decoder_forward.11} parent=23 // pred_check
        %p162 = pneg %p98
      $region30: #{decoder_forward.11} parent=23 // pred_check_branch
        %164 = sbr.rel (%p162) target = $region32
      $region31: #{decoder_forward.11} parent=23 // pred_region
        %p165 = scmp.lt.s32.totalorder %s10, 1
        %s166 = scalar_select %p165, %s10, 1
        %s167 = smul.addr %s166, 8
        %s168 = scalar_lea.vmem %s3, %s167
      $region32: #{decoder_forward.11} parent=23 // pred_fallthru
        _
    $region24: #{decoder_forward.11} parent=5 // pred_fallthru
      _
    %p169 = scmp.le.s32.totalorder 1, %s10
    %p170 = scmp.lt.s32.totalorder %s10, 3
    %p171 = pnand %p169, %p170
    %p172 = pneg %p171
    // Predicated region
    $region33: #{decoder_forward.11} parent=5 // pred_check
      _
    $region34: #{decoder_forward.11} parent=5 // pred_check_branch
      %174 = sbr.rel (%p171) target = $region36
    $region35: #{decoder_forward.11} parent=5 // pred_region
      %s175 = ssub.s32 %s10, 1
      %p176 = scmp.lt.s32.totalorder %s15, 1
      %s177 = scalar_select %p176, %s15, 1
      %s178 = smul.addr %s177, 8
      %s179 = scalar_lea.vmem %s0, %s178
      %p180 = pneg %p36
      %p181 = pneg %p33
      %p182 = pneg %p57
      %p183 = pneg %p54
      %p184 = pneg %p78
      %p185 = pneg %p75
      %p186 = scmp.lt.s32.totalorder %s15, 1
      %s187 = scalar_select %p186, %s15, 1
      %s188 = smul.addr %s187, 8
      %s189 = scalar_lea.vmem %s3, %s188
      %p190 = pneg %p104
      %p191 = pneg %p101
      %p192 = pneg %p130
      %p193 = pneg %p127
      %p194 = scmp.lt.s32.totalorder %s15, 1
      %s195 = scalar_select %p194, %s15, 1
      %s196 = smul.addr %s195, 4
      %s197 = scalar_lea.vmem %s4, %s196
      %p198 = scmp.lt.s32.totalorder %s15, 1
      %s199 = scalar_select %p198, %s15, 1
      %s200 = smul.addr %s199, 8
      %s201 = scalar_lea.vmem %s0, %s200
      %p202 = scmp.lt.s32.totalorder %s15, 1
      %s203 = scalar_select %p202, %s15, 1
      %s204 = smul.addr %s203, 8
      %s205 = scalar_lea.vmem %s3, %s204
      %p206 = scmp.lt.s32.totalorder %s15, 1
      %s207 = scalar_select %p206, %s15, 1
      %s208 = smul.addr %s207, 4
      %s209 = scalar_lea.vmem %s4, %s208
      %v211 = vld [vmem:[%s201] sm:$0xff]
      %v212 = vpack.c.bf16 %v211, %v211
      %v213 = vld [vmem:[%s1] sm:$0xf]
      %v214 = vld [vmem:[%s1 + $0x4] sm:$0xf]
      %v215 = vld [vmem:[%s1 + $0x8] sm:$0xf]
      %v216 = vld [vmem:[%s1 + $0xc] sm:$0xf]
      %v217 = vld [vmem:[%s2] sm:$0x1]
      %v219 = vlaneseq
      %v220 = vshrl.u32 %v219, 7
      %v221 = vsub.s32 0, %v220
      %v222 = vrot.slane %v217, %v221
      %v228 = vunpack.c.l.b16 %v213
      %v229 = vunpack.c.l.b16 %v214
      %v230 = vunpack.c.l.b16 %v215
      %v231 = vunpack.c.l.b16 %v216
      %v232 = vpack.c.b16 %v229, %v228
      %v233 = vpack.c.b16 %v231, %v230
      %vm236 = vcmask 261120
      %v238 = vsel %vm236, %v212, 0
      %240 = vmatprep.subr.bf16.mxu0 0
      %241 = vmatpush1.bf16.msra.mxu0 0
      %242 = vmatprep.subr.bf16.mxu0 0
      %243 = vmatpush1.bf16.msra.mxu0 0
      %244 = vmatprep.subr.bf16.mxu0 0
      %245 = vmatpush1.bf16.msra.mxu0 0
      %246 = vmatprep.subr.bf16.mxu0 0
      %247 = vmatpush1.bf16.msra.mxu0 0
      %248 = vmatprep.subr.bf16.mxu0 0
      %249 = vmatpush1.bf16.msra.mxu0 0
      %250 = vmatprep.subr.bf16.mxu0 0
      %251 = vmatpush1.bf16.msra.mxu0 0
      %252 = vmatprep.subr.bf16.mxu0 0
      %253 = vmatpush1.bf16.msra.mxu0 %v233
      %254 = vmatprep.subr.bf16.mxu0 0
      %255 = vmatpush1.bf16.msra.mxu0 %v232
      %256 = vmatprep.subr.bf16.mxu0 0
      %257 = vmatpush2.bf16.msra.mxu0 0
      %258 = vmatprep.subr.bf16.mxu0 0
      %259 = vmatpush2.bf16.msra.mxu0 0
      %260 = vmatprep.subr.bf16.mxu0 0
      %261 = vmatpush2.bf16.msra.mxu0 0
      %262 = vmatprep.subr.bf16.mxu0 0
      %263 = vmatpush2.bf16.msra.mxu0 0
      %264 = vmatprep.subr.bf16.mxu0 0
      %265 = vmatpush2.bf16.msra.mxu0 0
      %266 = vmatprep.subr.bf16.mxu0 0
      %267 = vmatpush2.bf16.msra.mxu0 0
      %268 = vmatprep.subr.bf16.mxu0 0
      %269 = vmatpush2.bf16.msra.mxu0 0
      %270 = vmatprep.subr.bf16.mxu0 0
      %271 = vmatpush2.bf16.msra.mxu0 0
      %272 = vmatprep.mubr.bf16.mxu0 0
      %273 = vmatmul.mubr.bf16.gmra.mxu0 %v238
      %v274 = vpop.f32.mrf.mxu0
      %v275 = vadd.f32 %v222, %v274
      %v276 = vpop.f32.mrf.mxu0
      %v277 = vpop.f32.mrf.mxu0
      %v278 = vpop.f32.mrf.mxu0
      %279 = vdwg.mxu0
      %v280 = vpack.c.bf16 %v275, %v275
      %vm281 = vcmask 781312
      %282 = vst.msk [vmem:[#allocation2] sm:$0xf] %vm281, %v280
      %v283 = vld [vmem:[%s205] sm:$0xff]
      %v284 = vld [vmem:[#allocation2] sm:$0xf]
      %v286 = vunpack.c.l.b16 %v284
      %v287 = vpack.c.b16 %v286, %v286
      %288 = vrot.lane.b32.xlu0 %v287, 96
      %v289 = vpop.permute.xlu0 %288
      %vm290 = vcmask 64512
      %v292 = vsel %vm290, %v284, 0
      %v295 = vsel %vm290, %v289, 0
      %297 = vmatprep.subr.bf16.mxu0 0
      %298 = vmatpush1.bf16.xpose.msra.mxu0 0
      %299 = vmatprep.subr.bf16.mxu0 0
      %300 = vmatpush1.bf16.xpose.msra.mxu0 0
      %301 = vmatprep.subr.bf16.mxu0 0
      %302 = vmatpush1.bf16.xpose.msra.mxu0 0
      %303 = vmatprep.subr.bf16.mxu0 0
      %304 = vmatpush1.bf16.xpose.msra.mxu0 0
      %305 = vmatprep.subr.bf16.mxu0 0
      %306 = vmatpush1.bf16.xpose.msra.mxu0 0
      %307 = vmatprep.subr.bf16.mxu0 0
      %308 = vmatpush1.bf16.xpose.msra.mxu0 0
      %309 = vmatprep.subr.bf16.mxu0 0
      %310 = vmatpush1.bf16.xpose.msra.mxu0 0
      %311 = vmatprep.subr.bf16.mxu0 0
      %312 = vmatpush1.bf16.xpose.msra.mxu0 %v295
      %313 = vmatprep.subr.bf16.mxu0 0
      %314 = vmatpush2.bf16.xpose.msra.mxu0 0
      %315 = vmatprep.subr.bf16.mxu0 0
      %316 = vmatpush2.bf16.xpose.msra.mxu0 0
      %317 = vmatprep.subr.bf16.mxu0 0
      %318 = vmatpush2.bf16.xpose.msra.mxu0 0
      %319 = vmatprep.subr.bf16.mxu0 0
      %320 = vmatpush2.bf16.xpose.msra.mxu0 0
      %321 = vmatprep.subr.bf16.mxu0 0
      %322 = vmatpush2.bf16.xpose.msra.mxu0 0
      %323 = vmatprep.subr.bf16.mxu0 0
      %324 = vmatpush2.bf16.xpose.msra.mxu0 0
      %325 = vmatprep.subr.bf16.mxu0 0
      %326 = vmatpush2.bf16.xpose.msra.mxu0 0
      %327 = vmatprep.subr.bf16.mxu0 0
      %328 = vmatpush2.bf16.xpose.msra.mxu0 0
      %329 = vmatprep.mubr.bf16.mxu0 0
      %330 = vmatmul.mubr.bf16.gmra.mxu0 %v292
      %v331 = vpop.f32.mrf.mxu0
      %v332 = vadd.f32 0.0, %v331
      %v333 = vpop.f32.mrf.mxu0
      %v334 = vpop.f32.mrf.mxu0
      %v335 = vpop.f32.mrf.mxu0
      %336 = vdwg.mxu0
      %v337 = vmul.f32 %v332, 0.35355338
      %vm338 = vcmp.eq.f32.partialorder %v283, 0.0
      %v339 = vsel %vm338, -10000.0, %v337
      %v340 = vsel %vm290, %v339, -inf
      %341 = vmax.xlane.f32.xlu0 %v340
      %v342 = vpop.xlane.xlu0 %341
      %v343 = vsub.f32 %v339, %v342
      %v344 = vmul.f32 %v343, 1.442695
      %v345 = vpow.pop %v344
      %v346 = vsel %vm290, %v345, 0.0
      %347 = vadd.xlane.f32.xlu0 %v346
      %v348 = vpop.xlane.xlu0 %347
      %v349 = vrcp.pop %v348
      %v350 = vmul.f32 %v345, %v349
      %v351 = vpack.c.bf16 %v350, %v350
      %352 = vrot.lane.b32.xlu0 %v287, 64
      %v353 = vpop.permute.xlu0 %352
      %v355 = vsel %vm290, %v351, 0
      %vm357 = vcmask 1043456
      %v359 = vsel %vm357, %v353, 0
      %361 = vmatprep.subr.bf16.mxu0 0
      %362 = vmatpush1.bf16.msra.mxu0 0
      %363 = vmatprep.subr.bf16.mxu0 0
      %364 = vmatpush1.bf16.msra.mxu0 0
      %365 = vmatprep.subr.bf16.mxu0 0
      %366 = vmatpush1.bf16.msra.mxu0 0
      %367 = vmatprep.subr.bf16.mxu0 0
      %368 = vmatpush1.bf16.msra.mxu0 0
      %369 = vmatprep.subr.bf16.mxu0 0
      %370 = vmatpush1.bf16.msra.mxu0 0
      %371 = vmatprep.subr.bf16.mxu0 0
      %372 = vmatpush1.bf16.msra.mxu0 0
      %373 = vmatprep.subr.bf16.mxu0 0
      %374 = vmatpush1.bf16.msra.mxu0 0
      %375 = vmatprep.subr.bf16.mxu0 0
      %376 = vmatpush1.bf16.msra.mxu0 %v359
      %377 = vmatprep.subr.bf16.mxu0 0
      %378 = vmatpush2.bf16.msra.mxu0 0
      %379 = vmatprep.subr.bf16.mxu0 0
      %380 = vmatpush2.bf16.msra.mxu0 0
      %381 = vmatprep.subr.bf16.mxu0 0
      %382 = vmatpush2.bf16.msra.mxu0 0
      %383 = vmatprep.subr.bf16.mxu0 0
      %384 = vmatpush2.bf16.msra.mxu0 0
      %385 = vmatprep.subr.bf16.mxu0 0
      %386 = vmatpush2.bf16.msra.mxu0 0
      %387 = vmatprep.subr.bf16.mxu0 0
      %388 = vmatpush2.bf16.msra.mxu0 0
      %389 = vmatprep.subr.bf16.mxu0 0
      %390 = vmatpush2.bf16.msra.mxu0 0
      %391 = vmatprep.subr.bf16.mxu0 0
      %392 = vmatpush2.bf16.msra.mxu0 0
      %393 = vmatprep.mubr.bf16.mxu0 0
      %394 = vmatmul.mubr.bf16.gmra.mxu0 %v355
      %v395 = vpop.f32.mrf.mxu0
      %v396 = vadd.f32 0.0, %v395
      %v397 = vpop.f32.mrf.mxu0
      %v398 = vpop.f32.mrf.mxu0
      %v399 = vpop.f32.mrf.mxu0
      %400 = vdwg.mxu0
      %401 = vst.msk [vmem:[#allocation3] sm:$0xff] %vm290, %v396
      %v402 = vld [vmem:[#allocation2] sm:$0xf]
      %v404 = vunpack.c.l.b16 %v402
      %v405 = vpack.c.b16 %v404, %v404
      %406 = vrot.lane.b32.xlu0 %v405, 120
      %v407 = vpop.permute.xlu0 %406
      %408 = vrot.lane.b32.xlu0 %v405, 88
      %v409 = vpop.permute.xlu0 %408
      %v411 = vsel %vm290, %v407, 0
      %v414 = vsel %vm290, %v409, 0
      %416 = vmatprep.subr.bf16.mxu0 0
      %417 = vmatpush1.bf16.xpose.msra.mxu0 0
      %418 = vmatprep.subr.bf16.mxu0 0
      %419 = vmatpush1.bf16.xpose.msra.mxu0 0
      %420 = vmatprep.subr.bf16.mxu0 0
      %421 = vmatpush1.bf16.xpose.msra.mxu0 0
      %422 = vmatprep.subr.bf16.mxu0 0
      %423 = vmatpush1.bf16.xpose.msra.mxu0 0
      %424 = vmatprep.subr.bf16.mxu0 0
      %425 = vmatpush1.bf16.xpose.msra.mxu0 0
      %426 = vmatprep.subr.bf16.mxu0 0
      %427 = vmatpush1.bf16.xpose.msra.mxu0 0
      %428 = vmatprep.subr.bf16.mxu0 0
      %429 = vmatpush1.bf16.xpose.msra.mxu0 0
      %430 = vmatprep.subr.bf16.mxu0 0
      %431 = vmatpush1.bf16.xpose.msra.mxu0 %v414
      %432 = vmatprep.subr.bf16.mxu0 0
      %433 = vmatpush2.bf16.xpose.msra.mxu0 0
      %434 = vmatprep.subr.bf16.mxu0 0
      %435 = vmatpush2.bf16.xpose.msra.mxu0 0
      %436 = vmatprep.subr.bf16.mxu0 0
      %437 = vmatpush2.bf16.xpose.msra.mxu0 0
      %438 = vmatprep.subr.bf16.mxu0 0
      %439 = vmatpush2.bf16.xpose.msra.mxu0 0
      %440 = vmatprep.subr.bf16.mxu0 0
      %441 = vmatpush2.bf16.xpose.msra.mxu0 0
      %442 = vmatprep.subr.bf16.mxu0 0
      %443 = vmatpush2.bf16.xpose.msra.mxu0 0
      %444 = vmatprep.subr.bf16.mxu0 0
      %445 = vmatpush2.bf16.xpose.msra.mxu0 0
      %446 = vmatprep.subr.bf16.mxu0 0
      %447 = vmatpush2.bf16.xpose.msra.mxu0 0
      %448 = vmatprep.mubr.bf16.mxu0 0
      %449 = vmatmul.mubr.bf16.gmra.mxu0 %v411
      %v450 = vpop.f32.mrf.mxu0
      %v451 = vadd.f32 0.0, %v450
      %v452 = vpop.f32.mrf.mxu0
      %v453 = vpop.f32.mrf.mxu0
      %v454 = vpop.f32.mrf.mxu0
      %455 = vdwg.mxu0
      %v456 = vmul.f32 %v451, 0.35355338
      %v457 = vsel %vm338, -10000.0, %v456
      %v458 = vsel %vm290, %v457, -inf
      %459 = vmax.xlane.f32.xlu0 %v458
      %v460 = vpop.xlane.xlu0 %459
      %v461 = vsub.f32 %v457, %v460
      %v462 = vmul.f32 %v461, 1.442695
      %v463 = vpow.pop %v462
      %v464 = vsel %vm290, %v463, 0.0
      %465 = vadd.xlane.f32.xlu0 %v464
      %v466 = vpop.xlane.xlu0 %465
      %v467 = vrcp.pop %v466
      %v468 = vmul.f32 %v463, %v467
      %v469 = vpack.c.bf16 %v468, %v468
      %470 = vrot.lane.b32.xlu0 %v405, 56
      %v471 = vpop.permute.xlu0 %470
      %v473 = vsel %vm290, %v469, 0
      %v476 = vsel %vm357, %v471, 0
      %478 = vmatprep.subr.bf16.mxu0 0
      %479 = vmatpush1.bf16.msra.mxu0 0
      %480 = vmatprep.subr.bf16.mxu0 0
      %481 = vmatpush1.bf16.msra.mxu0 0
      %482 = vmatprep.subr.bf16.mxu0 0
      %483 = vmatpush1.bf16.msra.mxu0 0
      %484 = vmatprep.subr.bf16.mxu0 0
      %485 = vmatpush1.bf16.msra.mxu0 0
      %486 = vmatprep.subr.bf16.mxu0 0
      %487 = vmatpush1.bf16.msra.mxu0 0
      %488 = vmatprep.subr.bf16.mxu0 0
      %489 = vmatpush1.bf16.msra.mxu0 0
      %490 = vmatprep.subr.bf16.mxu0 0
      %491 = vmatpush1.bf16.msra.mxu0 0
      %492 = vmatprep.subr.bf16.mxu0 0
      %493 = vmatpush1.bf16.msra.mxu0 %v476
      %494 = vmatprep.subr.bf16.mxu0 0
      %495 = vmatpush2.bf16.msra.mxu0 0
      %496 = vmatprep.subr.bf16.mxu0 0
      %497 = vmatpush2.bf16.msra.mxu0 0
      %498 = vmatprep.subr.bf16.mxu0 0
      %499 = vmatpush2.bf16.msra.mxu0 0
      %500 = vmatprep.subr.bf16.mxu0 0
      %501 = vmatpush2.bf16.msra.mxu0 0
      %502 = vmatprep.subr.bf16.mxu0 0
      %503 = vmatpush2.bf16.msra.mxu0 0
      %504 = vmatprep.subr.bf16.mxu0 0
      %505 = vmatpush2.bf16.msra.mxu0 0
      %506 = vmatprep.subr.bf16.mxu0 0
      %507 = vmatpush2.bf16.msra.mxu0 0
      %508 = vmatprep.subr.bf16.mxu0 0
      %509 = vmatpush2.bf16.msra.mxu0 0
      %510 = vmatprep.mubr.bf16.mxu0 0
      %511 = vmatmul.mubr.bf16.gmra.mxu0 %v473
      %v512 = vpop.f32.mrf.mxu0
      %v513 = vadd.f32 0.0, %v512
      %v514 = vpop.f32.mrf.mxu0
      %v515 = vpop.f32.mrf.mxu0
      %v516 = vpop.f32.mrf.mxu0
      %517 = vdwg.mxu0
      %519 = vrot.lane.b32.xlu0 %v513, 8
      %v520 = vpop.permute.xlu0 %519
      %vm522 = vcmask 130112
      %523 = vst.msk [vmem:[#allocation3] sm:$0xff] %vm522, %v520
      %v524 = vld [vmem:[#allocation2] sm:$0xf]
      %v526 = vunpack.c.l.b16 %v524
      %v527 = vpack.c.b16 %v526, %v526
      %528 = vrot.lane.b32.xlu0 %v527, 112
      %v529 = vpop.permute.xlu0 %528
      %530 = vrot.lane.b32.xlu0 %v527, 80
      %v531 = vpop.permute.xlu0 %530
      %v533 = vsel %vm290, %v529, 0
      %v536 = vsel %vm290, %v531, 0
      %538 = vmatprep.subr.bf16.mxu0 0
      %539 = vmatpush1.bf16.xpose.msra.mxu0 0
      %540 = vmatprep.subr.bf16.mxu0 0
      %541 = vmatpush1.bf16.xpose.msra.mxu0 0
      %542 = vmatprep.subr.bf16.mxu0 0
      %543 = vmatpush1.bf16.xpose.msra.mxu0 0
      %544 = vmatprep.subr.bf16.mxu0 0
      %545 = vmatpush1.bf16.xpose.msra.mxu0 0
      %546 = vmatprep.subr.bf16.mxu0 0
      %547 = vmatpush1.bf16.xpose.msra.mxu0 0
      %548 = vmatprep.subr.bf16.mxu0 0
      %549 = vmatpush1.bf16.xpose.msra.mxu0 0
      %550 = vmatprep.subr.bf16.mxu0 0
      %551 = vmatpush1.bf16.xpose.msra.mxu0 0
      %552 = vmatprep.subr.bf16.mxu0 0
      %553 = vmatpush1.bf16.xpose.msra.mxu0 %v536
      %554 = vmatprep.subr.bf16.mxu0 0
      %555 = vmatpush2.bf16.xpose.msra.mxu0 0
      %556 = vmatprep.subr.bf16.mxu0 0
      %557 = vmatpush2.bf16.xpose.msra.mxu0 0
      %558 = vmatprep.subr.bf16.mxu0 0
      %559 = vmatpush2.bf16.xpose.msra.mxu0 0
      %560 = vmatprep.subr.bf16.mxu0 0
      %561 = vmatpush2.bf16.xpose.msra.mxu0 0
      %562 = vmatprep.subr.bf16.mxu0 0
      %563 = vmatpush2.bf16.xpose.msra.mxu0 0
      %564 = vmatprep.subr.bf16.mxu0 0
      %565 = vmatpush2.bf16.xpose.msra.mxu0 0
      %566 = vmatprep.subr.bf16.mxu0 0
      %567 = vmatpush2.bf16.xpose.msra.mxu0 0
      %568 = vmatprep.subr.bf16.mxu0 0
      %569 = vmatpush2.bf16.xpose.msra.mxu0 0
      %570 = vmatprep.mubr.bf16.mxu0 0
      %571 = vmatmul.mubr.bf16.gmra.mxu0 %v533
      %v572 = vpop.f32.mrf.mxu0
      %v573 = vadd.f32 0.0, %v572
      %v574 = vpop.f32.mrf.mxu0
      %v575 = vpop.f32.mrf.mxu0
      %v576 = vpop.f32.mrf.mxu0
      %577 = vdwg.mxu0
      %v578 = vmul.f32 %v573, 0.35355338
      %v579 = vsel %vm338, -10000.0, %v578
      %v580 = vsel %vm290, %v579, -inf
      %581 = vmax.xlane.f32.xlu0 %v580
      %v582 = vpop.xlane.xlu0 %581
      %v583 = vsub.f32 %v579, %v582
      %v584 = vmul.f32 %v583, 1.442695
      %v585 = vpow.pop %v584
      %v586 = vsel %vm290, %v585, 0.0
      %587 = vadd.xlane.f32.xlu0 %v586
      %v588 = vpop.xlane.xlu0 %587
      %v589 = vrcp.pop %v588
      %v590 = vmul.f32 %v585, %v589
      %v591 = vpack.c.bf16 %v590, %v590
      %592 = vrot.lane.b32.xlu0 %v527, 48
      %v593 = vpop.permute.xlu0 %592
      %v595 = vsel %vm290, %v591, 0
      %v598 = vsel %vm357, %v593, 0
      %600 = vmatprep.subr.bf16.mxu0 0
      %601 = vmatpush1.bf16.msra.mxu0 0
      %602 = vmatprep.subr.bf16.mxu0 0
      %603 = vmatpush1.bf16.msra.mxu0 0
      %604 = vmatprep.subr.bf16.mxu0 0
      %605 = vmatpush1.bf16.msra.mxu0 0
      %606 = vmatprep.subr.bf16.mxu0 0
      %607 = vmatpush1.bf16.msra.mxu0 0
      %608 = vmatprep.subr.bf16.mxu0 0
      %609 = vmatpush1.bf16.msra.mxu0 0
      %610 = vmatprep.subr.bf16.mxu0 0
      %611 = vmatpush1.bf16.msra.mxu0 0
      %612 = vmatprep.subr.bf16.mxu0 0
      %613 = vmatpush1.bf16.msra.mxu0 0
      %614 = vmatprep.subr.bf16.mxu0 0
      %615 = vmatpush1.bf16.msra.mxu0 %v598
      %616 = vmatprep.subr.bf16.mxu0 0
      %617 = vmatpush2.bf16.msra.mxu0 0
      %618 = vmatprep.subr.bf16.mxu0 0
      %619 = vmatpush2.bf16.msra.mxu0 0
      %620 = vmatprep.subr.bf16.mxu0 0
      %621 = vmatpush2.bf16.msra.mxu0 0
      %622 = vmatprep.subr.bf16.mxu0 0
      %623 = vmatpush2.bf16.msra.mxu0 0
      %624 = vmatprep.subr.bf16.mxu0 0
      %625 = vmatpush2.bf16.msra.mxu0 0
      %626 = vmatprep.subr.bf16.mxu0 0
      %627 = vmatpush2.bf16.msra.mxu0 0
      %628 = vmatprep.subr.bf16.mxu0 0
      %629 = vmatpush2.bf16.msra.mxu0 0
      %630 = vmatprep.subr.bf16.mxu0 0
      %631 = vmatpush2.bf16.msra.mxu0 0
      %632 = vmatprep.mubr.bf16.mxu0 0
      %633 = vmatmul.mubr.bf16.gmra.mxu0 %v595
      %v634 = vpop.f32.mrf.mxu0
      %v635 = vadd.f32 0.0, %v634
      %v636 = vpop.f32.mrf.mxu0
      %v637 = vpop.f32.mrf.mxu0
      %v638 = vpop.f32.mrf.mxu0
      %639 = vdwg.mxu0
      %641 = vrot.lane.b32.xlu0 %v635, 16
      %v642 = vpop.permute.xlu0 %641
      %vm644 = vcmask 195712
      %645 = vst.msk [vmem:[#allocation3] sm:$0xff] %vm644, %v642
      %v646 = vld [vmem:[#allocation2] sm:$0xf]
      %v648 = vunpack.c.l.b16 %v646
      %v649 = vpack.c.b16 %v648, %v648
      %650 = vrot.lane.b32.xlu0 %v649, 104
      %v651 = vpop.permute.xlu0 %650
      %652 = vrot.lane.b32.xlu0 %v649, 72
      %v653 = vpop.permute.xlu0 %652
      %v655 = vsel %vm290, %v651, 0
      %v658 = vsel %vm290, %v653, 0
      %660 = vmatprep.subr.bf16.mxu0 0
      %661 = vmatpush1.bf16.xpose.msra.mxu0 0
      %662 = vmatprep.subr.bf16.mxu0 0
      %663 = vmatpush1.bf16.xpose.msra.mxu0 0
      %664 = vmatprep.subr.bf16.mxu0 0
      %665 = vmatpush1.bf16.xpose.msra.mxu0 0
      %666 = vmatprep.subr.bf16.mxu0 0
      %667 = vmatpush1.bf16.xpose.msra.mxu0 0
      %668 = vmatprep.subr.bf16.mxu0 0
      %669 = vmatpush1.bf16.xpose.msra.mxu0 0
      %670 = vmatprep.subr.bf16.mxu0 0
      %671 = vmatpush1.bf16.xpose.msra.mxu0 0
      %672 = vmatprep.subr.bf16.mxu0 0
      %673 = vmatpush1.bf16.xpose.msra.mxu0 0
      %674 = vmatprep.subr.bf16.mxu0 0
      %675 = vmatpush1.bf16.xpose.msra.mxu0 %v658
      %676 = vmatprep.subr.bf16.mxu0 0
      %677 = vmatpush2.bf16.xpose.msra.mxu0 0
      %678 = vmatprep.subr.bf16.mxu0 0
      %679 = vmatpush2.bf16.xpose.msra.mxu0 0
      %680 = vmatprep.subr.bf16.mxu0 0
      %681 = vmatpush2.bf16.xpose.msra.mxu0 0
      %682 = vmatprep.subr.bf16.mxu0 0
      %683 = vmatpush2.bf16.xpose.msra.mxu0 0
      %684 = vmatprep.subr.bf16.mxu0 0
      %685 = vmatpush2.bf16.xpose.msra.mxu0 0
      %686 = vmatprep.subr.bf16.mxu0 0
      %687 = vmatpush2.bf16.xpose.msra.mxu0 0
      %688 = vmatprep.subr.bf16.mxu0 0
      %689 = vmatpush2.bf16.xpose.msra.mxu0 0
      %690 = vmatprep.subr.bf16.mxu0 0
      %691 = vmatpush2.bf16.xpose.msra.mxu0 0
      %692 = vmatprep.mubr.bf16.mxu0 0
      %693 = vmatmul.mubr.bf16.gmra.mxu0 %v655
      %v694 = vpop.f32.mrf.mxu0
      %v695 = vadd.f32 0.0, %v694
      %v696 = vpop.f32.mrf.mxu0
      %v697 = vpop.f32.mrf.mxu0
      %v698 = vpop.f32.mrf.mxu0
      %699 = vdwg.mxu0
      %v700 = vmul.f32 %v695, 0.35355338
      %v701 = vsel %vm338, -10000.0, %v700
      %v702 = vsel %vm290, %v701, -inf
      %703 = vmax.xlane.f32.xlu0 %v702
      %v704 = vpop.xlane.xlu0 %703
      %v705 = vsub.f32 %v701, %v704
      %v706 = vmul.f32 %v705, 1.442695
      %v707 = vpow.pop %v706
      %v708 = vsel %vm290, %v707, 0.0
      %709 = vadd.xlane.f32.xlu0 %v708
      %v710 = vpop.xlane.xlu0 %709
      %v711 = vrcp.pop %v710
      %v712 = vmul.f32 %v707, %v711
      %v713 = vpack.c.bf16 %v712, %v712
      %714 = vrot.lane.b32.xlu0 %v649, 40
      %v715 = vpop.permute.xlu0 %714
      %v717 = vsel %vm290, %v713, 0
      %v720 = vsel %vm357, %v715, 0
      %722 = vmatprep.subr.bf16.mxu0 0
      %723 = vmatpush1.bf16.msra.mxu0 0
      %724 = vmatprep.subr.bf16.mxu0 0
      %725 = vmatpush1.bf16.msra.mxu0 0
      %726 = vmatprep.subr.bf16.mxu0 0
      %727 = vmatpush1.bf16.msra.mxu0 0
      %728 = vmatprep.subr.bf16.mxu0 0
      %729 = vmatpush1.bf16.msra.mxu0 0
      %730 = vmatprep.subr.bf16.mxu0 0
      %731 = vmatpush1.bf16.msra.mxu0 0
      %732 = vmatprep.subr.bf16.mxu0 0
      %733 = vmatpush1.bf16.msra.mxu0 0
      %734 = vmatprep.subr.bf16.mxu0 0
      %735 = vmatpush1.bf16.msra.mxu0 0
      %736 = vmatprep.subr.bf16.mxu0 0
      %737 = vmatpush1.bf16.msra.mxu0 %v720
      %738 = vmatprep.subr.bf16.mxu0 0
      %739 = vmatpush2.bf16.msra.mxu0 0
      %740 = vmatprep.subr.bf16.mxu0 0
      %741 = vmatpush2.bf16.msra.mxu0 0
      %742 = vmatprep.subr.bf16.mxu0 0
      %743 = vmatpush2.bf16.msra.mxu0 0
      %744 = vmatprep.subr.bf16.mxu0 0
      %745 = vmatpush2.bf16.msra.mxu0 0
      %746 = vmatprep.subr.bf16.mxu0 0
      %747 = vmatpush2.bf16.msra.mxu0 0
      %748 = vmatprep.subr.bf16.mxu0 0
      %749 = vmatpush2.bf16.msra.mxu0 0
      %750 = vmatprep.subr.bf16.mxu0 0
      %751 = vmatpush2.bf16.msra.mxu0 0
      %752 = vmatprep.subr.bf16.mxu0 0
      %753 = vmatpush2.bf16.msra.mxu0 0
      %754 = vmatprep.mubr.bf16.mxu0 0
      %755 = vmatmul.mubr.bf16.gmra.mxu0 %v717
      %v756 = vpop.f32.mrf.mxu0
      %v757 = vadd.f32 0.0, %v756
      %v758 = vpop.f32.mrf.mxu0
      %v759 = vpop.f32.mrf.mxu0
      %v760 = vpop.f32.mrf.mxu0
      %761 = vdwg.mxu0
      %763 = vrot.lane.b32.xlu0 %v757, 24
      %v764 = vpop.permute.xlu0 %763
      %vm766 = vcmask 261312
      %767 = vst.msk [vmem:[#allocation3] sm:$0xff] %vm766, %v764
      %v768 = vld [vmem:[#allocation3] sm:$0xff]
      %v769 = vpack.c.bf16 %v768, %v768
      %vm770 = vcmask 257024
      %771 = vst.msk [vmem:[%s209] sm:$0xf] %vm770, %v769
      %p772 = scmp.lt.s32.totalorder %s15, 1
      %s773 = scalar_select %p772, %s15, 1
      %s774 = smul.addr %s773, 4
      %s775 = scalar_lea.vmem %s4, %s774
      // Predicated region
      $region37: #{decoder_forward.11} parent=35 // pred_check
        %p776 = pneg %p127
      $region38: #{decoder_forward.11} parent=35 // pred_check_branch
        %778 = sbr.rel (%p776) target = $region40
      $region39: #{decoder_forward.11} parent=35 // pred_region
        _
      $region40: #{decoder_forward.11} parent=35 // pred_fallthru
        _
    $region36: #{decoder_forward.11} parent=5 // pred_fallthru
      _
    %p779 = scmp.le.s32.totalorder 2, %s10
    // Predicated region
    $region41: #{decoder_forward.11} parent=5 // pred_check
      %p780 = pneg %p779
    $region42: #{decoder_forward.11} parent=5 // pred_check_branch
      %782 = sbr.rel (%p780) target = $region44
    $region43: #{decoder_forward.11} parent=5 // pred_region
      %s783 = ssub.s32 %s10, 2
      // Predicated region
      $region45: #{decoder_forward.11} parent=43 // pred_check
        %p784 = pneg %p133
      $region46: #{decoder_forward.11} parent=43 // pred_check_branch
        %786 = sbr.rel (%p784) target = $region48
      $region47: #{decoder_forward.11} parent=43 // pred_region
        %p787 = scmp.lt.s32.totalorder %s16, 1
        %s788 = scalar_select %p787, %s16, 1
        %s789 = smul.addr %s788, 4
        %s790 = scalar_lea.vmem %s4, %s789
      $region48: #{decoder_forward.11} parent=43 // pred_fallthru
        _
    $region44: #{decoder_forward.11} parent=5 // pred_fallthru
      _
  $region6: #{decoder_forward.11} parent=0 // loop_footer
    %s14 = sadd.s32 1, %s10
  $region7: #{decoder_forward.11} parent=0 // loop_footer_branch
    %9 = sbr.rel target = $region3
  $region8: #{decoder_forward.11} parent=0 // loop_exit
    _

// kernel: decoder_forward.21
$region0: #{decoder_forward.21}
  #allocation0 [shape = 'u32[]', space=smem, size = 0x4, offset = 0x4, fixed_abs, tag = 'smem constant byte address 0x4 - core index']
  #allocation1 [shape = 'u32[144,128]{1,0:T(1,128)}', space=vmem, size = 0x12000, scoped, tag = 'internal scratch']
  %s0 = inlined_call_operand.vmem [shape: f32[16,32], index: 0, kind: input, shape index: {}]
  %s1 = inlined_call_operand.vmem [shape: bf16[32,50], index: 1, kind: input, shape index: {}]
  %s2 = inlined_call_operand.vmem [shape: f32[1,50], index: 2, kind: input, shape index: {}]
  %s3 = inlined_call_operand.hbm [shape: f32[16,50], index: 3, kind: output, shape index: {}]
  %s4 = sld [smem:[#allocation0]]
  $region22: #{decoder_forward.21} parent=0
    _
  %s6 = ssub.s32 1, %s4
  %s7 = scalar_select 0, %s6, %s4
  $region1: #{decoder_forward.21} parent=0
    #allocation2 [shape = 'u8[8192]{0}', space=vmem, size = 0x2000, scoped, tag = 'output window, operand 0, single buffered']
    #allocation3 [shape = 's32[1]{0}', space=sflag, size = 0x4, scoped, tag = 'scoped memory for decoder_forward.21']
    %8 = vsyncpa [#allocation3], 0
    // Predicated region
    $region2: #{decoder_forward.21} parent=1 // pred_check
      _
    $region3: #{decoder_forward.21} parent=1 // pred_check_branch
      %10 = sbr.rel (0) target = $region5
    $region4: #{decoder_forward.21} parent=1 // pred_region
      _
    $region5: #{decoder_forward.21} parent=1 // pred_fallthru
      _
    // Predicated region
    $region6: #{decoder_forward.21} parent=1 // pred_check
      _
    $region7: #{decoder_forward.21} parent=1 // pred_check_branch
      %12 = sbr.rel (0) target = $region9
    $region8: #{decoder_forward.21} parent=1 // pred_region
      _
    $region9: #{decoder_forward.21} parent=1 // pred_fallthru
      _
    // Predicated region
    $region10: #{decoder_forward.21} parent=1 // pred_check
      _
    $region11: #{decoder_forward.21} parent=1 // pred_check_branch
      %14 = sbr.rel (0) target = $region13
    $region12: #{decoder_forward.21} parent=1 // pred_region
      _
    $region13: #{decoder_forward.21} parent=1 // pred_fallthru
      _
    %v16 = vld [vmem:[%s0] sm:$0xff]
    %v17 = vld [vmem:[%s0 + $0x8] sm:$0xff]
    %v18 = vpack.c.bf16 %v17, %v16
    %v19 = vld [vmem:[%s1] sm:$0xf]
    %v20 = vld [vmem:[%s1 + $0x4] sm:$0xf]
    %v21 = vld [vmem:[%s1 + $0x8] sm:$0xf]
    %v22 = vld [vmem:[%s1 + $0xc] sm:$0xf]
    %v23 = vld [vmem:[%s2] sm:$0x1]
    %v25 = vlaneseq
    %v26 = vshrl.u32 %v25, 7
    %v27 = vsub.s32 0, %v26
    %v28 = vrot.slane %v23, %v27
    %v34 = vunpack.c.l.b16 %v19
    %v35 = vunpack.c.l.b16 %v20
    %v36 = vunpack.c.l.b16 %v21
    %v37 = vunpack.c.l.b16 %v22
    %v38 = vpack.c.b16 %v35, %v34
    %v39 = vpack.c.b16 %v37, %v36
    %vm42 = vcmask 261120
    %v44 = vsel %vm42, %v18, 0
    %46 = vmatprep.subr.bf16.mxu0 0
    %47 = vmatpush1.bf16.msra.mxu0 0
    %48 = vmatprep.subr.bf16.mxu0 0
    %49 = vmatpush1.bf16.msra.mxu0 0
    %50 = vmatprep.subr.bf16.mxu0 0
    %51 = vmatpush1.bf16.msra.mxu0 0
    %52 = vmatprep.subr.bf16.mxu0 0
    %53 = vmatpush1.bf16.msra.mxu0 0
    %54 = vmatprep.subr.bf16.mxu0 0
    %55 = vmatpush1.bf16.msra.mxu0 0
    %56 = vmatprep.subr.bf16.mxu0 0
    %57 = vmatpush1.bf16.msra.mxu0 0
    %58 = vmatprep.subr.bf16.mxu0 0
    %59 = vmatpush1.bf16.msra.mxu0 %v39
    %60 = vmatprep.subr.bf16.mxu0 0
    %61 = vmatpush1.bf16.msra.mxu0 %v38
    %62 = vmatprep.subr.bf16.mxu0 0
    %63 = vmatpush2.bf16.msra.mxu0 0
    %64 = vmatprep.subr.bf16.mxu0 0
    %65 = vmatpush2.bf16.msra.mxu0 0
    %66 = vmatprep.subr.bf16.mxu0 0
    %67 = vmatpush2.bf16.msra.mxu0 0
    %68 = vmatprep.subr.bf16.mxu0 0
    %69 = vmatpush2.bf16.msra.mxu0 0
    %70 = vmatprep.subr.bf16.mxu0 0
    %71 = vmatpush2.bf16.msra.mxu0 0
    %72 = vmatprep.subr.bf16.mxu0 0
    %73 = vmatpush2.bf16.msra.mxu0 0
    %74 = vmatprep.subr.bf16.mxu0 0
    %75 = vmatpush2.bf16.msra.mxu0 0
    %76 = vmatprep.subr.bf16.mxu0 0
    %77 = vmatpush2.bf16.msra.mxu0 0
    %78 = vmatprep.mubr.bf16.mxu0 0
    %79 = vmatmul.mubr.bf16.gmra.mxu0 %v44
    %v80 = vpop.f32.mrf.mxu0
    %v81 = vadd.f32 %v28, %v80
    %v82 = vpop.f32.mrf.mxu0
    %v83 = vpop.f32.mrf.mxu0
    %v84 = vadd.f32 %v28, %v83
    %v85 = vpop.f32.mrf.mxu0
    %86 = vdwg.mxu0
    %vm87 = vcmask 408576
    %88 = vst.msk [vmem:[#allocation2] sm:$0xff] %vm87, %v81
    %89 = vst.msk [vmem:[#allocation2 + $0x8] sm:$0xff] %vm87, %v84
    // Predicated region
    $region14: #{decoder_forward.21} parent=1 // pred_check
      _
    $region15: #{decoder_forward.21} parent=1 // pred_check_branch
      %91 = sbr.rel (0) target = $region17
    $region16: #{decoder_forward.21} parent=1 // pred_region
      %s93 = ssub.s32 256, 256
      %94 = vsyncadd [#allocation3], %s93
      %s95 = sshll.u32 [#allocation2], 4
      %s96 = int_to_ptr.vmem [resolvable:$true] %s95
      %101 = dma.vmem_to_hbm [thread:$0]  %s96, 256, %s3, [#allocation3], 128, 128, 8
    $region17: #{decoder_forward.21} parent=1 // pred_fallthru
      _
    // Predicated region
    $region18: #{decoder_forward.21} parent=1 // pred_check
      _
    $region19: #{decoder_forward.21} parent=1 // pred_check_branch
      %103 = sbr.rel (0) target = $region21
    $region20: #{decoder_forward.21} parent=1 // pred_region
      %104 = dma.done [#allocation3], 256
    $region21: #{decoder_forward.21} parent=1 // pred_fallthru
      _
    %105 = vsyncpa [#allocation3], 1

</llo_original>
